<compile_context>
chip_gen: v7x
topology: tpu7x:2x2x1
jax: 0.10.0
libtpu: 0.0.40
codegen_flags: <defaults>
</compile_context>

<pallas_src>
import functools

import jax
import jax.numpy as jnp
from jax import lax
from jax.experimental import pallas as pl
from jax.experimental.pallas import tpu as pltpu


def _round_up(x, m):
    return ((x + m - 1) // m) * m


def _left_pad(pad, sublane=16):
    # Sublane-aligned (bf16 packing = 16 rows / vreg) start column for the
    # tile interior inside the scratch buffers.
    return _round_up(max(pad, 1), sublane)


def _padded_bytes(shape, dtype):
    """VMEM footprint of a buffer including (sublane, lane) layout padding."""
    itemsize = jnp.dtype(dtype).itemsize
    s = list(shape)
    if not s:
        return itemsize
    s[-1] = _round_up(s[-1], 128)                       # lane dim
    if len(s) >= 2:
        sub = {4: 8, 2: 16, 1: 32}.get(itemsize, 8)     # sublane dim
        s[-2] = _round_up(s[-2], sub)
    n = 1
    for d in s:
        n *= d
    return n * itemsize


def _vmem_capacity_bytes(default=64 * 1024 * 1024):
    """Physical VMEM per core; conservative 64 MiB (v7x) fallback."""
    try:
        info = pltpu.get_tpu_info()
        cap = int(getattr(info, "vmem_capacity_bytes", 0) or 0)
        if cap > 0:
            return cap
    except Exception:
        pass
    return default


def _resblock_kernel(x_ref, top_ref, bot_ref, w1_ref, b1_ref, w2_ref, b2_ref,
                     o_ref, xpad_ref, mid_ref, *, ksize, res_scale, lp,
                     fuse_taps):
    # x_ref   : (1, tH, W, C)  f32   row tile of the activation (also residual)
    # top_ref : (1, 2p, W, C)  f32   rows just above the tile (zeros off-image)
    # bot_ref : (1, 2p, W, C)  f32   rows just below the tile (zeros off-image)
    # w*_ref  : (k*k*C, C) or (k*k, C, C)  bf16 weights
    # b*_ref  : (1, C)         f32
    # o_ref   : (1, tH, W, C)
    # xpad_ref: (tH+4p, lp+W+p, C) bf16 scratch — haloed, padded input tile
    # mid_ref : (tH+2p, lp+W+p, C) bf16 scratch — padded relu(conv1) tile
    pad = ksize // 2
    _, tH, W, C = x_ref.shape
    Hx = tH + 4 * pad              # input rows incl. fused-two-conv halo
    Hm = tH + 2 * pad              # intermediate rows needed by conv2
    Wp = lp + W + pad
    bf16 = jnp.bfloat16

    # --- zero only the halo border columns (tiny; done every step so there is
    # no cross-step scratch state -> safe when the grid is core-sharded) ------
    xpad_ref[:, lp - pad:lp, :] = jnp.zeros((Hx, pad, C), bf16)
    xpad_ref[:, lp + W:Wp, :] = jnp.zeros((Hx, pad, C), bf16)
    mid_ref[:, lp - pad:lp, :] = jnp.zeros((Hm, pad, C), bf16)
    mid_ref[:, lp + W:Wp, :] = jnp.zeros((Hm, pad, C), bf16)

    # --- assemble the haloed input tile in VMEM as bf16 (one f32->bf16 pack
    # per element, never repeated per tap) ------------------------------------
    xpad_ref[0:2 * pad, lp:lp + W, :] = top_ref[0].astype(bf16)
    xpad_ref[2 * pad:2 * pad + tH, lp:lp + W, :] = x_ref[0].astype(bf16)
    xpad_ref[2 * pad + tH:Hx, lp:lp + W, :] = bot_ref[0].astype(bf16)

    def conv(src_ref, rows, w_ref):
        """k x k 'SAME' conv over src_ref's padded window; bf16 MXU inputs,
        f32 accumulation.  Returns (rows*W, C) f32."""
        if fuse_taps:
            taps = []
            for dy in range(ksize):
                for dx in range(ksize):
                    c0 = lp - pad + dx
                    taps.append(src_ref[dy:dy + rows, c0:c0 + W, :])
            patches = jnp.concatenate(taps, axis=-1)     # (rows, W, k*k*C) bf16
            patches = patches.reshape(rows * W, ksize * ksize * C)
            return jnp.dot(patches, w_ref[...],
                           preferred_element_type=jnp.float32)
        # Per-tap fallback (w_ref is (k*k, C, C)): 9 small MXU pushes; use when
        # the lane-misaligned tap concat is measured to be the binding cost.
        acc = jnp.zeros((rows * W, C), jnp.float32)
        t = 0
        for dy in range(ksize):
            for dx in range(ksize):
                c0 = lp - pad + dx
                patch = src_ref[dy:dy + rows, c0:c0 + W, :].reshape(rows * W, C)
                acc += jnp.dot(patch, w_ref[t],
                               preferred_element_type=jnp.float32)
                t += 1
        return acc

    # --- conv1 over tH + 2*pad rows; bias + ReLU in f32 ---------------------
    act = jnp.maximum(conv(xpad_ref, Hm, w1_ref) + b1_ref[...], 0.0)
    mid_ref[:, lp:lp + W, :] = act.reshape(Hm, W, C).astype(bf16)

    # --- conv2's zero padding at the image top/bottom boundary --------------
    i = pl.program_id(1)

    @pl.when(i == 0)
    def _():
        mid_ref[0:pad, lp:lp + W, :] = jnp.zeros((pad, W, C), bf16)

    @pl.when(i == pl.num_programs(1) - 1)
    def _():
        mid_ref[pad + tH:Hm, lp:lp + W, :] = jnp.zeros((pad, W, C), bf16)

    # --- conv2 + bias, then the residual (all elementwise math in f32).
    # Only the matmul result is reshaped; the residual reads x_ref directly
    # (no extra relayout of the input tile). ----------------------------------
    res = conv(mid_ref, tH, w2_ref) + b2_ref[...]
    out = res.reshape(tH, W, C) * jnp.float32(res_scale) + x_ref[0]
    o_ref[0] = out.astype(o_ref.dtype)
    # TODO(synk): for C < 128 a lane-dense output packing (out block
    # (1, tile_h, W*C)) removes the masked vst writeback; it needs a
    # lane-merging (tH, W, C)->(tH, W*C) relayout in-kernel — enable once the
    # Mosaic shape-cast path for C % 128 != 0 is verified per chip.


def _choose_tile_h(H, W, C, ksize, budget_bytes):
    """Largest divisor of H whose layout-padded working set fits the budget."""
    pad = ksize // 2
    lp = _left_pad(pad)
    wp = lp + W + pad
    kk = ksize * ksize

    def working_set(th):
        hx, hm = th + 4 * pad, th + 2 * pad
        b = 0
        # single-buffered bf16 VMEM scratch
        b += _padded_bytes((hx, wp, C), jnp.bfloat16)
        b += _padded_bytes((hm, wp, C), jnp.bfloat16)
        # auto-pipelined blocks (double-buffered)
        b += 2 * _padded_bytes((1, th, W, C), jnp.float32)           # x
        b += 4 * _padded_bytes((1, 2 * pad, W, C), jnp.float32)      # halos
        b += 2 * _padded_bytes((1, th, W, C), jnp.float32)           # out
        # weights + biases (constant-indexed, still double-buffered)
        b += 4 * _padded_bytes((kk * C, C), jnp.bfloat16)
        b += 4 * _padded_bytes((1, C), jnp.float32)
        # transient values: bf16 im2col slab, f32 matmul / relu intermediates
        b += _padded_bytes((hm * W, kk * C), jnp.bfloat16)
        b += 2 * _padded_bytes((hm * W, C), jnp.float32)
        b += 2 * _padded_bytes((th * W, C), jnp.float32)
        return b

    cands = [t for t in range(2 * pad, H + 1) if H % t == 0]
    if not cands:
        return H
    fits = [t for t in cands if working_set(t) <= budget_bytes]
    return max(fits) if fits else min(cands)


def _build_row_halos(x, tile_h, halo):
    """(N*nH, halo, W, C) arrays of the rows just above / below each row tile
    (zeros where those rows fall outside the image)."""
    # TODO(synk): replace with an in-kernel clamped DMA from a pl.ANY HBM
    # activation to drop these per-block XLA slice/stack passes and the extra
    # HBM traffic (pairs with keeping inter-block activations bf16 in HBM).
    N, H, W, C = x.shape
    nH = H // tile_h
    zero = jnp.zeros((N, halo, W, C), x.dtype)
    tops = [zero] + [x[:, i * tile_h - halo:i * tile_h] for i in range(1, nH)]
    bots = ([x[:, (i + 1) * tile_h:(i + 1) * tile_h + halo]
             for i in range(nH - 1)] + [zero])
    x_top = jnp.stack(tops, axis=1).reshape(N * nH, halo, W, C)
    x_bot = jnp.stack(bots, axis=1).reshape(N * nH, halo, W, C)
    return x_top, x_bot


def resblock_pallas(x_nhwc, w1, b1, w2, b2, *, ksize=3, res_scale=1.0,
                    tile_h=None, fuse_taps=True):
    """x_nhwc: (N, H, W, C) f32; w: (k, k, Cin, Cout) HWIO; b: (C,).

    `fuse_taps` is a *static* choice (jit-safe): True -> one K-dense im2col
    matmul per conv (default; the misaligned tap concat sits on the XLU, which
    has slack at these channel counts); False -> k*k per-tap matmuls.
    """
    N, H, W, C = x_nhwc.shape
    assert ksize % 2 == 1 and ksize >= 3
    pad = ksize // 2

    cap = _vmem_capacity_bytes()
    if tile_h is None:
        # ~3/8 of physical VMEM as the tile budget (24 MiB on v7x, 48 MiB on
        # v5e/v6e); headroom left for compiler internal scratch.
        tile_h = _choose_tile_h(H, W, C, ksize, budget_bytes=(cap * 3) // 8)
    assert H % tile_h == 0 and tile_h >= 2 * pad, (H, tile_h)
    nH = H // tile_h
    lp = _left_pad(pad)
    Wp = lp + W + pad
    Hx = tile_h + 4 * pad
    Hm = tile_h + 2 * pad
    kk = ksize * ksize

    x_top, x_bot = _build_row_halos(x_nhwc, tile_h, 2 * pad)
    b1r = b1.reshape(1, C).astype(jnp.float32)
    b2r = b2.reshape(1, C).astype(jnp.float32)

    wshape = (kk * C, C) if fuse_taps else (kk, C, C)
    w1m = w1.reshape(wshape).astype(jnp.bfloat16)
    w2m = w2.reshape(wshape).astype(jnp.bfloat16)
    w_index_map = (lambda n, i: (0, 0)) if fuse_taps else (lambda n, i: (0, 0, 0))
    # TODO(synk): for large n_feats, single-buffer these constant-indexed
    # weight blocks (pipeline_mode=pl.Buffered(1)) or load them once via a
    # manual DMA — frees VMEM for a taller tile_h on v7x.
    w_spec = pl.BlockSpec(wshape, w_index_map)

    kernel = functools.partial(_resblock_kernel, ksize=ksize,
                               res_scale=float(res_scale), lp=lp,
                               fuse_taps=fuse_taps)

    # Per-chip VMEM limit: ~3/4 of physical (96 MiB on v5e/v6e, 48 MiB on v7x).
    vmem_limit = int(max(min((cap * 3) // 4, 112 * 1024 * 1024),
                         32 * 1024 * 1024))

    return pl.pallas_call(
        kernel,
        out_shape=jax.ShapeDtypeStruct((N, H, W, C), x_nhwc.dtype),
        grid_spec=pltpu.PrefetchScalarGridSpec(
            num_scalar_prefetch=0,
            grid=(N, nH),
            in_specs=[
                pl.BlockSpec((1, tile_h, W, C), lambda n, i: (n, i, 0, 0)),
                pl.BlockSpec((1, 2 * pad, W, C),
                             lambda n, i: (n * nH + i, 0, 0, 0)),
                pl.BlockSpec((1, 2 * pad, W, C),
                             lambda n, i: (n * nH + i, 0, 0, 0)),
                w_spec,
                pl.BlockSpec((1, C), lambda n, i: (0, 0)),
                w_spec,
                pl.BlockSpec((1, C), lambda n, i: (0, 0)),
            ],
            out_specs=pl.BlockSpec((1, tile_h, W, C),
                                   lambda n, i: (n, i, 0, 0)),
            scratch_shapes=[
                pltpu.VMEM((Hx, Wp, C), jnp.bfloat16),
                pltpu.VMEM((Hm, Wp, C), jnp.bfloat16),
            ],
        ),
        compiler_params=pltpu.CompilerParams(
            dimension_semantics=("parallel", "parallel"),
            vmem_limit_bytes=vmem_limit,
        ),
    )(x_nhwc, x_top, x_bot, w1m, b1r, w2m, b2r)


def edsr_pallas(x_nhwc, params, *, ksize=3, res_scale=1.0, tile_h=None,
                fuse_taps=True):
    # TODO(synk): fuse B ResBlocks per pallas_call (halo grows to 2*pad*B) to
    # cut activation HBM round-trips ~Bx; largest win on v5e, keep B small on
    # v7x (64 MiB VMEM).
    y = x_nhwc
    for (w1, b1, w2, b2) in params:
        y = resblock_pallas(y, w1, b1, w2, b2, ksize=ksize,
                            res_scale=res_scale, tile_h=tile_h,
                            fuse_taps=fuse_taps)
    return y


def edsr_reference(x_nhwc, params, *, res_scale=1.0):
    """Pure-JAX f32 reference with the PyTorch module's semantics (NHWC)."""
    dn = ('NHWC', 'HWIO', 'NHWC')
    y = x_nhwc
    for (w1, b1, w2, b2) in params:
        r = lax.conv_general_dilated(y, w1, (1, 1), 'SAME',
                                     dimension_numbers=dn) + b1
        r = jnp.maximum(r, 0.0)
        r = lax.conv_general_dilated(r, w2, (1, 1), 'SAME',
                                     dimension_numbers=dn) + b2
        y = y + r * res_scale
    return y


if __name__ == "__main__":
    # EDSR(n_feats=4, n_blocks=2, res_scale=0.5) at a small NCHW input.
    N, C, H, W = 2, 4, 16, 16
    KSIZE, N_BLOCKS, RES_SCALE = 3, 2, 0.5

    key = jax.random.PRNGKey(0)
    key, kx = jax.random.split(key)
    x_nchw = jax.random.normal(kx, (N, C, H, W), jnp.float32)

    # Deterministic synthetic Conv2d params, built directly in HWIO.
    fan_in = C * KSIZE * KSIZE
    scale = 1.0 / float(fan_in) ** 0.5
    params = []
    for _ in range(N_BLOCKS):
        key, kw1, kb1, kw2, kb2 = jax.random.split(key, 5)
        w1 = jax.random.uniform(kw1, (KSIZE, KSIZE, C, C), jnp.float32,
                                -scale, scale)
        b1 = jax.random.uniform(kb1, (C,), jnp.float32, -scale, scale)
        w2 = jax.random.uniform(kw2, (KSIZE, KSIZE, C, C), jnp.float32,
                                -scale, scale)
        b2 = jax.random.uniform(kb2, (C,), jnp.float32, -scale, scale)
        params.append((w1, b1, w2, b2))

    # NCHW -> NHWC for the kernel.
    x_nhwc = jnp.transpose(x_nchw, (0, 2, 3, 1))
    ref_nhwc = edsr_reference(x_nhwc, params, res_scale=RES_SCALE)

    # tile_h=8 -> two row tiles per image: exercises the halo / boundary path.
    out_nhwc = jax.block_until_ready(
        edsr_pallas(x_nhwc, params, ksize=KSIZE, res_scale=RES_SCALE,
                    tile_h=8))
    err = float(jnp.max(jnp.abs(out_nhwc - ref_nhwc)))
    assert err < 5e-2, f"max abs err {err}"   # bf16-MXU vs f32 reference

    # Auto tile_h (padding-aware, per-chip VMEM budget): one tile per image.
    out_auto = jax.block_until_ready(
        edsr_pallas(x_nhwc, params, ksize=KSIZE, res_scale=RES_SCALE))
    err_auto = float(jnp.max(jnp.abs(out_auto - ref_nhwc)))
    assert err_auto < 5e-2, f"max abs err {err_auto}"

    # Final result back in the module's native NCHW layout.
    out_nchw = jnp.transpose(out_nhwc, (0, 3, 1, 2))
    assert out_nchw.shape == (N, C, H, W)

    print("KERNEL_OK")
</pallas_src>

<mosaic_0001>
module attributes {stable_mosaic.version = 11 : i64} {
  func.func @_resblock_kernel(%arg0: i32, %arg1: i32, %arg2: memref<1x8x16x4xf32, #tpu.memory_space<vmem>>, %arg3: memref<1x2x16x4xf32, #tpu.memory_space<vmem>>, %arg4: memref<1x2x16x4xf32, #tpu.memory_space<vmem>>, %arg5: memref<36x4xbf16, #tpu.memory_space<vmem>>, %arg6: memref<1x4xf32, #tpu.memory_space<vmem>>, %arg7: memref<36x4xbf16, #tpu.memory_space<vmem>>, %arg8: memref<1x4xf32, #tpu.memory_space<vmem>>, %arg9: memref<1x8x16x4xf32, #tpu.memory_space<vmem>>, %arg10: memref<12x33x4xbf16, #tpu.memory_space<vmem>>, %arg11: memref<10x33x4xbf16, #tpu.memory_space<vmem>>) attributes {dimension_semantics = [#tpu.dimension_semantics<parallel>, #tpu.dimension_semantics<parallel>], iteration_bounds = array<i64: 2, 2>, scalar_prefetch = 0 : i64, scratch_operands = 2 : i64, tpu.core_type = #tpu.core_type<tc>, window_params = [{transform_indices = @transform_0, window_bounds = array<i64: 1, 8, 16, 4>}, {transform_indices = @transform_1, window_bounds = array<i64: 1, 2, 16, 4>}, {transform_indices = @transform_2, window_bounds = array<i64: 1, 2, 16, 4>}, {pipeline_mode = #tpu.pipeline_mode<synchronous>, transform_indices = @transform_3, window_bounds = array<i64: 36, 4>}, {pipeline_mode = #tpu.pipeline_mode<synchronous>, transform_indices = @transform_4, window_bounds = array<i64: 1, 4>}, {pipeline_mode = #tpu.pipeline_mode<synchronous>, transform_indices = @transform_5, window_bounds = array<i64: 36, 4>}, {pipeline_mode = #tpu.pipeline_mode<synchronous>, transform_indices = @transform_6, window_bounds = array<i64: 1, 4>}, {transform_indices = @transform_7, window_bounds = array<i64: 1, 8, 16, 4>}]} {
    %cst = arith.constant 0.000000e+00 : bf16
    %0 = vector.broadcast %cst : bf16 to vector<12x1x4xbf16>
    %c0 = arith.constant 0 : index
    %c15 = arith.constant 15 : index
    %c0_0 = arith.constant 0 : index
    %1 = vector.load %arg10[%c0, %c15, %c0_0] : memref<12x33x4xbf16, #tpu.memory_space<vmem>>, vector<12x1x4xbf16>
    tpu.vector_store %arg10[%c0, %c15, %c0_0], %0 {strides = array<i32>} : memref<12x33x4xbf16, #tpu.memory_space<vmem>>, vector<12x1x4xbf16>,
    %cst_1 = arith.constant 0.000000e+00 : bf16
    %2 = vector.broadcast %cst_1 : bf16 to vector<12x1x4xbf16>
    %c0_2 = arith.constant 0 : index
    %c32 = arith.constant 32 : index
    %c0_3 = arith.constant 0 : index
    %3 = vector.load %arg10[%c0_2, %c32, %c0_3] : memref<12x33x4xbf16, #tpu.memory_space<vmem>>, vector<12x1x4xbf16>
    tpu.vector_store %arg10[%c0_2, %c32, %c0_3], %2 {strides = array<i32>} : memref<12x33x4xbf16, #tpu.memory_space<vmem>>, vector<12x1x4xbf16>,
    %cst_4 = arith.constant 0.000000e+00 : bf16
    %4 = vector.broadcast %cst_4 : bf16 to vector<10x1x4xbf16>
    %c0_5 = arith.constant 0 : index
    %c15_6 = arith.constant 15 : index
    %c0_7 = arith.constant 0 : index
    %5 = vector.load %arg11[%c0_5, %c15_6, %c0_7] : memref<10x33x4xbf16, #tpu.memory_space<vmem>>, vector<10x1x4xbf16>
    tpu.vector_store %arg11[%c0_5, %c15_6, %c0_7], %4 {strides = array<i32>} : memref<10x33x4xbf16, #tpu.memory_space<vmem>>, vector<10x1x4xbf16>,
    %cst_8 = arith.constant 0.000000e+00 : bf16
    %6 = vector.broadcast %cst_8 : bf16 to vector<10x1x4xbf16>
    %c0_9 = arith.constant 0 : index
    %c32_10 = arith.constant 32 : index
    %c0_11 = arith.constant 0 : index
    %7 = vector.load %arg11[%c0_9, %c32_10, %c0_11] : memref<10x33x4xbf16, #tpu.memory_space<vmem>>, vector<10x1x4xbf16>
    tpu.vector_store %arg11[%c0_9, %c32_10, %c0_11], %6 {strides = array<i32>} : memref<10x33x4xbf16, #tpu.memory_space<vmem>>, vector<10x1x4xbf16>,
    %c0_12 = arith.constant 0 : index
    %c0_13 = arith.constant 0 : index
    %c0_14 = arith.constant 0 : index
    %c0_15 = arith.constant 0 : index
    %8 = vector.load %arg3[%c0_12, %c0_13, %c0_14, %c0_15] : memref<1x2x16x4xf32, #tpu.memory_space<vmem>>, vector<1x2x16x4xf32>
    %9 = vector.shape_cast %8 : vector<1x2x16x4xf32> to vector<2x16x4xf32>
    %10 = arith.truncf %9 : vector<2x16x4xf32> to vector<2x16x4xbf16>
    %c0_16 = arith.constant 0 : index
    %c16 = arith.constant 16 : index
    %c0_17 = arith.constant 0 : index
    %11 = vector.load %arg10[%c0_16, %c16, %c0_17] : memref<12x33x4xbf16, #tpu.memory_space<vmem>>, vector<2x16x4xbf16>
    tpu.vector_store %arg10[%c0_16, %c16, %c0_17], %10 {strides = array<i32>} : memref<12x33x4xbf16, #tpu.memory_space<vmem>>, vector<2x16x4xbf16>,
    %c0_18 = arith.constant 0 : index
    %c0_19 = arith.constant 0 : index
    %c0_20 = arith.constant 0 : index
    %c0_21 = arith.constant 0 : index
    %12 = vector.load %arg2[%c0_18, %c0_19, %c0_20, %c0_21] : memref<1x8x16x4xf32, #tpu.memory_space<vmem>>, vector<1x8x16x4xf32>
    %13 = vector.shape_cast %12 : vector<1x8x16x4xf32> to vector<8x16x4xf32>
    %14 = arith.truncf %13 : vector<8x16x4xf32> to vector<8x16x4xbf16>
    %c2 = arith.constant 2 : index
    %c16_22 = arith.constant 16 : index
    %c0_23 = arith.constant 0 : index
    %15 = vector.load %arg10[%c2, %c16_22, %c0_23] : memref<12x33x4xbf16, #tpu.memory_space<vmem>>, vector<8x16x4xbf16>
    tpu.vector_store %arg10[%c2, %c16_22, %c0_23], %14 {strides = array<i32>} : memref<12x33x4xbf16, #tpu.memory_space<vmem>>, vector<8x16x4xbf16>,
    %c0_24 = arith.constant 0 : index
    %c0_25 = arith.constant 0 : index
    %c0_26 = arith.constant 0 : index
    %c0_27 = arith.constant 0 : index
    %16 = vector.load %arg4[%c0_24, %c0_25, %c0_26, %c0_27] : memref<1x2x16x4xf32, #tpu.memory_space<vmem>>, vector<1x2x16x4xf32>
    %17 = vector.shape_cast %16 : vector<1x2x16x4xf32> to vector<2x16x4xf32>
    %18 = arith.truncf %17 : vector<2x16x4xf32> to vector<2x16x4xbf16>
    %c10 = arith.constant 10 : index
    %c16_28 = arith.constant 16 : index
    %c0_29 = arith.constant 0 : index
    %19 = vector.load %arg10[%c10, %c16_28, %c0_29] : memref<12x33x4xbf16, #tpu.memory_space<vmem>>, vector<2x16x4xbf16>
    tpu.vector_store %arg10[%c10, %c16_28, %c0_29], %18 {strides = array<i32>} : memref<12x33x4xbf16, #tpu.memory_space<vmem>>, vector<2x16x4xbf16>,
    %c0_30 = arith.constant 0 : index
    %c15_31 = arith.constant 15 : index
    %c0_32 = arith.constant 0 : index
    %20 = vector.load %arg10[%c0_30, %c15_31, %c0_32] : memref<12x33x4xbf16, #tpu.memory_space<vmem>>, vector<10x16x4xbf16>
    %c0_33 = arith.constant 0 : index
    %c16_34 = arith.constant 16 : index
    %c0_35 = arith.constant 0 : index
    %21 = vector.load %arg10[%c0_33, %c16_34, %c0_35] : memref<12x33x4xbf16, #tpu.memory_space<vmem>>, vector<10x16x4xbf16>
    %c0_36 = arith.constant 0 : index
    %c17 = arith.constant 17 : index
    %c0_37 = arith.constant 0 : index
    %22 = vector.load %arg10[%c0_36, %c17, %c0_37] : memref<12x33x4xbf16, #tpu.memory_space<vmem>>, vector<10x16x4xbf16>
    %c1 = arith.constant 1 : index
    %c15_38 = arith.constant 15 : index
    %c0_39 = arith.constant 0 : index
    %23 = vector.load %arg10[%c1, %c15_38, %c0_39] : memref<12x33x4xbf16, #tpu.memory_space<vmem>>, vector<10x16x4xbf16>
    %c1_40 = arith.constant 1 : index
    %c16_41 = arith.constant 16 : index
    %c0_42 = arith.constant 0 : index
    %24 = vector.load %arg10[%c1_40, %c16_41, %c0_42] : memref<12x33x4xbf16, #tpu.memory_space<vmem>>, vector<10x16x4xbf16>
    %c1_43 = arith.constant 1 : index
    %c17_44 = arith.constant 17 : index
    %c0_45 = arith.constant 0 : index
    %25 = vector.load %arg10[%c1_43, %c17_44, %c0_45] : memref<12x33x4xbf16, #tpu.memory_space<vmem>>, vector<10x16x4xbf16>
    %c2_46 = arith.constant 2 : index
    %c15_47 = arith.constant 15 : index
    %c0_48 = arith.constant 0 : index
    %26 = vector.load %arg10[%c2_46, %c15_47, %c0_48] : memref<12x33x4xbf16, #tpu.memory_space<vmem>>, vector<10x16x4xbf16>
    %c2_49 = arith.constant 2 : index
    %c16_50 = arith.constant 16 : index
    %c0_51 = arith.constant 0 : index
    %27 = vector.load %arg10[%c2_49, %c16_50, %c0_51] : memref<12x33x4xbf16, #tpu.memory_space<vmem>>, vector<10x16x4xbf16>
    %c2_52 = arith.constant 2 : index
    %c17_53 = arith.constant 17 : index
    %c0_54 = arith.constant 0 : index
    %28 = vector.load %arg10[%c2_52, %c17_53, %c0_54] : memref<12x33x4xbf16, #tpu.memory_space<vmem>>, vector<10x16x4xbf16>
    %29 = tpu.concatenate %20, %21, %22, %23, %24, %25, %26, %27, %28 in 2 : vector<10x16x4xbf16>, vector<10x16x4xbf16>, vector<10x16x4xbf16>, vector<10x16x4xbf16>, vector<10x16x4xbf16>, vector<10x16x4xbf16>, vector<10x16x4xbf16>, vector<10x16x4xbf16>, vector<10x16x4xbf16> -> vector<10x16x36xbf16>
    %30 = vector.shape_cast %29 : vector<10x16x36xbf16> to vector<160x36xbf16>
    %c0_55 = arith.constant 0 : index
    %c0_56 = arith.constant 0 : index
    %31 = vector.load %arg5[%c0_55, %c0_56] : memref<36x4xbf16, #tpu.memory_space<vmem>>, vector<36x4xbf16>
    %cst_57 = arith.constant dense<0.000000e+00> : vector<160x4xf32>
    %32 = tpu.matmul %30, %31, %cst_57 {dimension_numbers = #tpu.dot_dimension_numbers<[1], [0], [0], [1], [0, 0, 1, 1], [], []>} : vector<160x36xbf16>, vector<36x4xbf16>, vector<160x4xf32> -> vector<160x4xf32>
    %c0_58 = arith.constant 0 : index
    %c0_59 = arith.constant 0 : index
    %33 = vector.load %arg6[%c0_58, %c0_59] : memref<1x4xf32, #tpu.memory_space<vmem>>, vector<1x4xf32>
    %34 = vector.broadcast %33 : vector<1x4xf32> to vector<160x4xf32>
    %35 = arith.addf %32, %34 : vector<160x4xf32>
    %cst_60 = arith.constant 0.000000e+00 : f32
    %36 = vector.broadcast %cst_60 : f32 to vector<160x4xf32>
    %37 = arith.maximumf %35, %36 : vector<160x4xf32>
    %38 = vector.shape_cast %37 : vector<160x4xf32> to vector<10x16x4xf32>
    %39 = arith.truncf %38 : vector<10x16x4xf32> to vector<10x16x4xbf16>
    %c0_61 = arith.constant 0 : index
    %c16_62 = arith.constant 16 : index
    %c0_63 = arith.constant 0 : index
    %40 = vector.load %arg11[%c0_61, %c16_62, %c0_63] : memref<10x33x4xbf16, #tpu.memory_space<vmem>>, vector<10x16x4xbf16>
    tpu.vector_store %arg11[%c0_61, %c16_62, %c0_63], %39 {strides = array<i32>} : memref<10x33x4xbf16, #tpu.memory_space<vmem>>, vector<10x16x4xbf16>,
    %c0_i32 = arith.constant 0 : i32
    %41 = arith.cmpi eq, %arg1, %c0_i32 : i32
    %42 = arith.extui %41 : i1 to i32
    %c0_i32_64 = arith.constant 0 : i32
    %43 = arith.cmpi ne, %42, %c0_i32_64 : i32
    scf.if %43 {
      %cst_107 = arith.constant 0.000000e+00 : bf16
      %72 = vector.broadcast %cst_107 : bf16 to vector<1x16x4xbf16>
      %c0_108 = arith.constant 0 : index
      %c16_109 = arith.constant 16 : index
      %c0_110 = arith.constant 0 : index
      %73 = vector.load %arg11[%c0_108, %c16_109, %c0_110] : memref<10x33x4xbf16, #tpu.memory_space<vmem>>, vector<1x16x4xbf16>
      tpu.vector_store %arg11[%c0_108, %c16_109, %c0_110], %72 {strides = array<i32>} : memref<10x33x4xbf16, #tpu.memory_space<vmem>>, vector<1x16x4xbf16>,
    } else {
    }
    %c1_i32 = arith.constant 1 : i32
    %44 = arith.cmpi eq, %arg1, %c1_i32 : i32
    %45 = arith.extui %44 : i1 to i32
    %c0_i32_65 = arith.constant 0 : i32
    %46 = arith.cmpi ne, %45, %c0_i32_65 : i32
    scf.if %46 {
      %cst_107 = arith.constant 0.000000e+00 : bf16
      %72 = vector.broadcast %cst_107 : bf16 to vector<1x16x4xbf16>
      %c9 = arith.constant 9 : index
      %c16_108 = arith.constant 16 : index
      %c0_109 = arith.constant 0 : index
      %73 = vector.load %arg11[%c9, %c16_108, %c0_109] : memref<10x33x4xbf16, #tpu.memory_space<vmem>>, vector<1x16x4xbf16>
      tpu.vector_store %arg11[%c9, %c16_108, %c0_109], %72 {strides = array<i32>} : memref<10x33x4xbf16, #tpu.memory_space<vmem>>, vector<1x16x4xbf16>,
    } else {
    }
    %c0_66 = arith.constant 0 : index
    %c15_67 = arith.constant 15 : index
    %c0_68 = arith.constant 0 : index
    %47 = vector.load %arg11[%c0_66, %c15_67, %c0_68] : memref<10x33x4xbf16, #tpu.memory_space<vmem>>, vector<8x16x4xbf16>
    %c0_69 = arith.constant 0 : index
    %c16_70 = arith.constant 16 : index
    %c0_71 = arith.constant 0 : index
    %48 = vector.load %arg11[%c0_69, %c16_70, %c0_71] : memref<10x33x4xbf16, #tpu.memory_space<vmem>>, vector<8x16x4xbf16>
    %c0_72 = arith.constant 0 : index
    %c17_73 = arith.constant 17 : index
    %c0_74 = arith.constant 0 : index
    %49 = vector.load %arg11[%c0_72, %c17_73, %c0_74] : memref<10x33x4xbf16, #tpu.memory_space<vmem>>, vector<8x16x4xbf16>
    %c1_75 = arith.constant 1 : index
    %c15_76 = arith.constant 15 : index
    %c0_77 = arith.constant 0 : index
    %50 = vector.load %arg11[%c1_75, %c15_76, %c0_77] : memref<10x33x4xbf16, #tpu.memory_space<vmem>>, vector<8x16x4xbf16>
    %c1_78 = arith.constant 1 : index
    %c16_79 = arith.constant 16 : index
    %c0_80 = arith.constant 0 : index
    %51 = vector.load %arg11[%c1_78, %c16_79, %c0_80] : memref<10x33x4xbf16, #tpu.memory_space<vmem>>, vector<8x16x4xbf16>
    %c1_81 = arith.constant 1 : index
    %c17_82 = arith.constant 17 : index
    %c0_83 = arith.constant 0 : index
    %52 = vector.load %arg11[%c1_81, %c17_82, %c0_83] : memref<10x33x4xbf16, #tpu.memory_space<vmem>>, vector<8x16x4xbf16>
    %c2_84 = arith.constant 2 : index
    %c15_85 = arith.constant 15 : index
    %c0_86 = arith.constant 0 : index
    %53 = vector.load %arg11[%c2_84, %c15_85, %c0_86] : memref<10x33x4xbf16, #tpu.memory_space<vmem>>, vector<8x16x4xbf16>
    %c2_87 = arith.constant 2 : index
    %c16_88 = arith.constant 16 : index
    %c0_89 = arith.constant 0 : index
    %54 = vector.load %arg11[%c2_87, %c16_88, %c0_89] : memref<10x33x4xbf16, #tpu.memory_space<vmem>>, vector<8x16x4xbf16>
    %c2_90 = arith.constant 2 : index
    %c17_91 = arith.constant 17 : index
    %c0_92 = arith.constant 0 : index
    %55 = vector.load %arg11[%c2_90, %c17_91, %c0_92] : memref<10x33x4xbf16, #tpu.memory_space<vmem>>, vector<8x16x4xbf16>
    %56 = tpu.concatenate %47, %48, %49, %50, %51, %52, %53, %54, %55 in 2 : vector<8x16x4xbf16>, vector<8x16x4xbf16>, vector<8x16x4xbf16>, vector<8x16x4xbf16>, vector<8x16x4xbf16>, vector<8x16x4xbf16>, vector<8x16x4xbf16>, vector<8x16x4xbf16>, vector<8x16x4xbf16> -> vector<8x16x36xbf16>
    %57 = vector.shape_cast %56 : vector<8x16x36xbf16> to vector<128x36xbf16>
    %c0_93 = arith.constant 0 : index
    %c0_94 = arith.constant 0 : index
    %58 = vector.load %arg7[%c0_93, %c0_94] : memref<36x4xbf16, #tpu.memory_space<vmem>>, vector<36x4xbf16>
    %cst_95 = arith.constant dense<0.000000e+00> : vector<128x4xf32>
    %59 = tpu.matmul %57, %58, %cst_95 {dimension_numbers = #tpu.dot_dimension_numbers<[1], [0], [0], [1], [0, 0, 1, 1], [], []>} : vector<128x36xbf16>, vector<36x4xbf16>, vector<128x4xf32> -> vector<128x4xf32>
    %c0_96 = arith.constant 0 : index
    %c0_97 = arith.constant 0 : index
    %60 = vector.load %arg8[%c0_96, %c0_97] : memref<1x4xf32, #tpu.memory_space<vmem>>, vector<1x4xf32>
    %61 = vector.broadcast %60 : vector<1x4xf32> to vector<128x4xf32>
    %62 = arith.addf %59, %61 : vector<128x4xf32>
    %63 = vector.shape_cast %62 : vector<128x4xf32> to vector<8x16x4xf32>
    %cst_98 = arith.constant 5.000000e-01 : f32
    %64 = vector.broadcast %cst_98 : f32 to vector<8x16x4xf32>
    %65 = arith.mulf %63, %64 : vector<8x16x4xf32>
    %c0_99 = arith.constant 0 : index
    %c0_100 = arith.constant 0 : index
    %c0_101 = arith.constant 0 : index
    %c0_102 = arith.constant 0 : index
    %66 = vector.load %arg2[%c0_99, %c0_100, %c0_101, %c0_102] : memref<1x8x16x4xf32, #tpu.memory_space<vmem>>, vector<1x8x16x4xf32>
    %67 = vector.shape_cast %66 : vector<1x8x16x4xf32> to vector<8x16x4xf32>
    %68 = arith.addf %65, %67 : vector<8x16x4xf32>
    %c0_103 = arith.constant 0 : index
    %c0_104 = arith.constant 0 : index
    %c0_105 = arith.constant 0 : index
    %c0_106 = arith.constant 0 : index
    %69 = vector.load %arg9[%c0_103, %c0_104, %c0_105, %c0_106] : memref<1x8x16x4xf32, #tpu.memory_space<vmem>>, vector<1x8x16x4xf32>
    %70 = vector.shape_cast %69 : vector<1x8x16x4xf32> to vector<8x16x4xf32>
    %71 = vector.shape_cast %68 : vector<8x16x4xf32> to vector<1x8x16x4xf32>
    tpu.vector_store %arg9[%c0_103, %c0_104, %c0_105, %c0_106], %71 {strides = array<i32>} : memref<1x8x16x4xf32, #tpu.memory_space<vmem>>, vector<1x8x16x4xf32>,
    return
  }
  func.func @transform_0(%arg0: i32, %arg1: i32) -> (i32, i32, i32, i32) {
    %c0_i32 = arith.constant 0 : i32
    %c0_i32_0 = arith.constant 0 : i32
    %c0_i32_1 = arith.constant 0 : i32
    return %arg0, %arg1, %c0_i32, %c0_i32_0 : i32, i32, i32, i32
  }
  func.func @transform_1(%arg0: i32, %arg1: i32) -> (i32, i32, i32, i32) {
    %c2_i32 = arith.constant 2 : i32
    %0 = arith.muli %arg0, %c2_i32 : i32
    %1 = arith.addi %0, %arg1 : i32
    %c0_i32 = arith.constant 0 : i32
    %c0_i32_0 = arith.constant 0 : i32
    %c0_i32_1 = arith.constant 0 : i32
    %c0_i32_2 = arith.constant 0 : i32
    return %1, %c0_i32, %c0_i32_0, %c0_i32_1 : i32, i32, i32, i32
  }
  func.func @transform_2(%arg0: i32, %arg1: i32) -> (i32, i32, i32, i32) {
    %c2_i32 = arith.constant 2 : i32
    %0 = arith.muli %arg0, %c2_i32 : i32
    %1 = arith.addi %0, %arg1 : i32
    %c0_i32 = arith.constant 0 : i32
    %c0_i32_0 = arith.constant 0 : i32
    %c0_i32_1 = arith.constant 0 : i32
    %c0_i32_2 = arith.constant 0 : i32
    return %1, %c0_i32, %c0_i32_0, %c0_i32_1 : i32, i32, i32, i32
  }
  func.func @transform_3(%arg0: i32, %arg1: i32) -> (i32, i32) {
    %c0_i32 = arith.constant 0 : i32
    %c0_i32_0 = arith.constant 0 : i32
    %c0_i32_1 = arith.constant 0 : i32
    return %c0_i32, %c0_i32_0 : i32, i32
  }
  func.func @transform_4(%arg0: i32, %arg1: i32) -> (i32, i32) {
    %c0_i32 = arith.constant 0 : i32
    %c0_i32_0 = arith.constant 0 : i32
    %c0_i32_1 = arith.constant 0 : i32
    return %c0_i32, %c0_i32_0 : i32, i32
  }
  func.func @transform_5(%arg0: i32, %arg1: i32) -> (i32, i32) {
    %c0_i32 = arith.constant 0 : i32
    %c0_i32_0 = arith.constant 0 : i32
    %c0_i32_1 = arith.constant 0 : i32
    return %c0_i32, %c0_i32_0 : i32, i32
  }
  func.func @transform_6(%arg0: i32, %arg1: i32) -> (i32, i32) {
    %c0_i32 = arith.constant 0 : i32
    %c0_i32_0 = arith.constant 0 : i32
    %c0_i32_1 = arith.constant 0 : i32
    return %c0_i32, %c0_i32_0 : i32, i32
  }
  func.func @transform_7(%arg0: i32, %arg1: i32) -> (i32, i32, i32, i32) {
    %c0_i32 = arith.constant 0 : i32
    %c0_i32_0 = arith.constant 0 : i32
    %c0_i32_1 = arith.constant 0 : i32
    return %arg0, %arg1, %c0_i32, %c0_i32_0 : i32, i32, i32, i32
  }
}

</mosaic_0001>

<llo_original>
// kernel: tpu_custom_call.1
$region0: #{tpu_custom_call.1}
  #allocation0 [shape = 'u32[]', space=smem, size = 0x4, offset = 0x4, fixed_abs, tag = 'smem constant byte address 0x4 - core index']
  #allocation1 [shape = 'u32[144,128]{1,0:T(1,128)}', space=vmem, size = 0x12000, scoped, tag = 'internal scratch']
  #allocation2 [shape = 'bf16[12,33,4]{2,1,0:T(8,128)(2,1)}', space=vmem, size = 0x1e000, scoped, tag = 'scratch operand']
  #allocation3 [shape = 'bf16[10,33,4]{2,1,0:T(8,128)(2,1)}', space=vmem, size = 0x19000, scoped, tag = 'scratch operand']
  %s0 = inlined_call_operand.vmem [shape: f32[2,16,16,4], index: 0, kind: input, shape index: {}]
  %s1 = inlined_call_operand.vmem [shape: f32[4,2,16,4], index: 1, kind: input, shape index: {}]
  %s2 = inlined_call_operand.vmem [shape: f32[4,2,16,4], index: 2, kind: input, shape index: {}]
  %s3 = inlined_call_operand.vmem [shape: bf16[36,4], index: 3, kind: input, shape index: {}]
  %s4 = inlined_call_operand.vmem [shape: f32[1,4], index: 4, kind: input, shape index: {}]
  %s5 = inlined_call_operand.vmem [shape: bf16[36,4], index: 5, kind: input, shape index: {}]
  %s6 = inlined_call_operand.vmem [shape: f32[1,4], index: 6, kind: input, shape index: {}]
  %s7 = inlined_call_operand.vmem [shape: f32[2,16,16,4], index: 7, kind: output, shape index: {}]
  %s8 = sld [smem:[#allocation0]]
  $region69: #{tpu_custom_call.1} parent=0
    _
  %s10 = ssub.s32 1, %s8
  %s11 = scalar_select 0, %s10, %s8
  loop: start=0, step=1, limit=6
  $region2: #{tpu_custom_call.1} parent=0 // loop_pre_header
    _
  $region3: #{tpu_custom_call.1} parent=0 // loop_header
    %s13 = sphi 0, %s17
    %p14 = scmp.ge.s32.totalorder %s13, 6
    %s20 = sphi 0, %s32
    %s21 = sphi 0, %s28
    %s22 = sphi 0, %s20
    %s23 = sphi 0, %s21
    %s24 = sphi 0, %s22
    %s25 = sphi 0, %s23
    %s37 = sphi 0, %s39
    %s40 = sphi 0, %s37
    %s41 = sphi 0, %s40
    %s57 = sphi 0, %s41
    %s67 = sphi 0, %s69
    %s70 = sphi 0, %s67
    %s71 = sphi 0, %s70
    %s87 = sphi 0, %s71
    %s97 = sphi 0, %s99
    %s100 = sphi 0, %s97
    %s101 = sphi 0, %s100
    %s117 = sphi 0, %s101
    %s121 = sphi 0, %s121
    %s123 = sphi 0, %s121
    %s124 = sphi 0, %s123
    %s138 = sphi 0, %s124
    %s142 = sphi 0, %s142
    %s144 = sphi 0, %s142
    %s145 = sphi 0, %s144
    %s159 = sphi 0, %s145
    %s163 = sphi 0, %s163
    %s165 = sphi 0, %s163
    %s166 = sphi 0, %s165
    %s180 = sphi 0, %s166
    %s184 = sphi 0, %s184
    %s186 = sphi 0, %s184
    %s187 = sphi 0, %s186
    %s201 = sphi 0, %s187
    %s209 = sphi 0, %s211
    %s212 = sphi 0, %s209
    %s213 = sphi 0, %s212
    %s229 = sphi 0, %s213
  $region4: #{tpu_custom_call.1} parent=0 // loop_header_branch
    %16 = sbr.rel (%p14) target = $region8
  $region5: #{tpu_custom_call.1} parent=0 // loop_body
    %s18 = ssub.s32 %s13, 1
    %s19 = ssub.s32 %s13, 2
    %s26 = sadd.s32 1, %s21
    %p27 = scmp.ge.s32.totalorder %s26, 2
    %s28 = scalar_select %p27, 0, %s26
    %s29 = sadd.s32 1, %s20
    %s30 = scalar_select %p27, %s29, %s20
    %p31 = scmp.ge.s32.totalorder %s30, 2
    %s32 = scalar_select %p31, 0, %s30
    %s33 = ssub.s32 %s20, %s32
    %s34 = ssub.s32 %s21, %s28
    %s35 = sor.u32 %s33, %s34
    %p36 = scmp.eq.s32.totalorder %s35, 0
    %s38 = sadd.s32 %s37, 1
    %s39 = scalar_select %p36, %s37, %s38
    %p42 = pneg %p36
    %p43 = scmp.eq.s32.totalorder %s13, 3
    %p44 = por %p42, %p43
    %p45 = scmp.ne.s32.totalorder %s37, %s40
    %p46 = scmp.eq.s32.totalorder %s13, 0
    %p47 = por %p45, %p46
    %p48 = scmp.ne.s32.totalorder %s37, %s40
    %p49 = scmp.eq.s32.totalorder %s18, 3
    %p50 = por %p48, %p49
    %p51 = scmp.ne.s32.totalorder %s40, %s41
    %p52 = scmp.eq.s32.totalorder %s18, 0
    %p53 = por %p51, %p52
    %p54 = scmp.ne.s32.totalorder %s40, %s41
    %p55 = scmp.eq.s32.totalorder %s19, 3
    %p56 = por %p54, %p55
    %p58 = scmp.ne.s32.totalorder %s41, %s57
    %p59 = scmp.eq.s32.totalorder %s19, 0
    %p60 = por %p58, %p59
    %s61 = smul.u32 %s20, 2
    %s62 = sadd.s32 %s61, %s21
    %s63 = smul.u32 %s32, 2
    %s64 = sadd.s32 %s63, %s28
    %s65 = ssub.s32 %s62, %s64
    %p66 = scmp.eq.s32.totalorder %s65, 0
    %s68 = sadd.s32 %s67, 1
    %s69 = scalar_select %p66, %s67, %s68
    %p72 = pneg %p66
    %p73 = scmp.eq.s32.totalorder %s13, 3
    %p74 = por %p72, %p73
    %p75 = scmp.ne.s32.totalorder %s67, %s70
    %p76 = scmp.eq.s32.totalorder %s13, 0
    %p77 = por %p75, %p76
    %p78 = scmp.ne.s32.totalorder %s67, %s70
    %p79 = scmp.eq.s32.totalorder %s18, 3
    %p80 = por %p78, %p79
    %p81 = scmp.ne.s32.totalorder %s70, %s71
    %p82 = scmp.eq.s32.totalorder %s18, 0
    %p83 = por %p81, %p82
    %p84 = scmp.ne.s32.totalorder %s70, %s71
    %p85 = scmp.eq.s32.totalorder %s19, 3
    %p86 = por %p84, %p85
    %p88 = scmp.ne.s32.totalorder %s71, %s87
    %p89 = scmp.eq.s32.totalorder %s19, 0
    %p90 = por %p88, %p89
    %s91 = smul.u32 %s20, 2
    %s92 = sadd.s32 %s91, %s21
    %s93 = smul.u32 %s32, 2
    %s94 = sadd.s32 %s93, %s28
    %s95 = ssub.s32 %s92, %s94
    %p96 = scmp.eq.s32.totalorder %s95, 0
    %s98 = sadd.s32 %s97, 1
    %s99 = scalar_select %p96, %s97, %s98
    %p102 = pneg %p96
    %p103 = scmp.eq.s32.totalorder %s13, 3
    %p104 = por %p102, %p103
    %p105 = scmp.ne.s32.totalorder %s97, %s100
    %p106 = scmp.eq.s32.totalorder %s13, 0
    %p107 = por %p105, %p106
    %p108 = scmp.ne.s32.totalorder %s97, %s100
    %p109 = scmp.eq.s32.totalorder %s18, 3
    %p110 = por %p108, %p109
    %p111 = scmp.ne.s32.totalorder %s100, %s101
    %p112 = scmp.eq.s32.totalorder %s18, 0
    %p113 = por %p111, %p112
    %p114 = scmp.ne.s32.totalorder %s100, %s101
    %p115 = scmp.eq.s32.totalorder %s19, 3
    %p116 = por %p114, %p115
    %p118 = scmp.ne.s32.totalorder %s101, %s117
    %p119 = scmp.eq.s32.totalorder %s19, 0
    %p120 = por %p118, %p119
    %s122 = sadd.s32 %s121, 1
    %p125 = scmp.eq.s32.totalorder %s13, 3
    %p126 = scmp.ne.s32.totalorder %s121, %s123
    %p127 = scmp.eq.s32.totalorder %s13, 0
    %p128 = por %p126, %p127
    %p129 = scmp.ne.s32.totalorder %s121, %s123
    %p130 = scmp.eq.s32.totalorder %s18, 3
    %p131 = por %p129, %p130
    %p132 = scmp.ne.s32.totalorder %s123, %s124
    %p133 = scmp.eq.s32.totalorder %s18, 0
    %p134 = por %p132, %p133
    %p135 = scmp.ne.s32.totalorder %s123, %s124
    %p136 = scmp.eq.s32.totalorder %s19, 3
    %p137 = por %p135, %p136
    %p139 = scmp.ne.s32.totalorder %s124, %s138
    %p140 = scmp.eq.s32.totalorder %s19, 0
    %p141 = por %p139, %p140
    %s143 = sadd.s32 %s142, 1
    %p146 = scmp.eq.s32.totalorder %s13, 3
    %p147 = scmp.ne.s32.totalorder %s142, %s144
    %p148 = scmp.eq.s32.totalorder %s13, 0
    %p149 = por %p147, %p148
    %p150 = scmp.ne.s32.totalorder %s142, %s144
    %p151 = scmp.eq.s32.totalorder %s18, 3
    %p152 = por %p150, %p151
    %p153 = scmp.ne.s32.totalorder %s144, %s145
    %p154 = scmp.eq.s32.totalorder %s18, 0
    %p155 = por %p153, %p154
    %p156 = scmp.ne.s32.totalorder %s144, %s145
    %p157 = scmp.eq.s32.totalorder %s19, 3
    %p158 = por %p156, %p157
    %p160 = scmp.ne.s32.totalorder %s145, %s159
    %p161 = scmp.eq.s32.totalorder %s19, 0
    %p162 = por %p160, %p161
    %s164 = sadd.s32 %s163, 1
    %p167 = scmp.eq.s32.totalorder %s13, 3
    %p168 = scmp.ne.s32.totalorder %s163, %s165
    %p169 = scmp.eq.s32.totalorder %s13, 0
    %p170 = por %p168, %p169
    %p171 = scmp.ne.s32.totalorder %s163, %s165
    %p172 = scmp.eq.s32.totalorder %s18, 3
    %p173 = por %p171, %p172
    %p174 = scmp.ne.s32.totalorder %s165, %s166
    %p175 = scmp.eq.s32.totalorder %s18, 0
    %p176 = por %p174, %p175
    %p177 = scmp.ne.s32.totalorder %s165, %s166
    %p178 = scmp.eq.s32.totalorder %s19, 3
    %p179 = por %p177, %p178
    %p181 = scmp.ne.s32.totalorder %s166, %s180
    %p182 = scmp.eq.s32.totalorder %s19, 0
    %p183 = por %p181, %p182
    %s185 = sadd.s32 %s184, 1
    %p188 = scmp.eq.s32.totalorder %s13, 3
    %p189 = scmp.ne.s32.totalorder %s184, %s186
    %p190 = scmp.eq.s32.totalorder %s13, 0
    %p191 = por %p189, %p190
    %p192 = scmp.ne.s32.totalorder %s184, %s186
    %p193 = scmp.eq.s32.totalorder %s18, 3
    %p194 = por %p192, %p193
    %p195 = scmp.ne.s32.totalorder %s186, %s187
    %p196 = scmp.eq.s32.totalorder %s18, 0
    %p197 = por %p195, %p196
    %p198 = scmp.ne.s32.totalorder %s186, %s187
    %p199 = scmp.eq.s32.totalorder %s19, 3
    %p200 = por %p198, %p199
    %p202 = scmp.ne.s32.totalorder %s187, %s201
    %p203 = scmp.eq.s32.totalorder %s19, 0
    %p204 = por %p202, %p203
    %s205 = ssub.s32 %s20, %s32
    %s206 = ssub.s32 %s21, %s28
    %s207 = sor.u32 %s205, %s206
    %p208 = scmp.eq.s32.totalorder %s207, 0
    %s210 = sadd.s32 %s209, 1
    %s211 = scalar_select %p208, %s209, %s210
    %p214 = pneg %p208
    %p215 = scmp.eq.s32.totalorder %s13, 3
    %p216 = por %p214, %p215
    %p217 = scmp.ne.s32.totalorder %s209, %s212
    %p218 = scmp.eq.s32.totalorder %s13, 0
    %p219 = por %p217, %p218
    %p220 = scmp.ne.s32.totalorder %s209, %s212
    %p221 = scmp.eq.s32.totalorder %s18, 3
    %p222 = por %p220, %p221
    %p223 = scmp.ne.s32.totalorder %s212, %s213
    %p224 = scmp.eq.s32.totalorder %s18, 0
    %p225 = por %p223, %p224
    %p226 = scmp.ne.s32.totalorder %s212, %s213
    %p227 = scmp.eq.s32.totalorder %s19, 3
    %p228 = por %p226, %p227
    %p230 = scmp.ne.s32.totalorder %s213, %s229
    %p231 = scmp.eq.s32.totalorder %s19, 0
    %p232 = por %p230, %p231
    %p233 = scmp.le.s32.totalorder 1, %s13
    %p234 = scmp.lt.s32.totalorder %s13, 5
    %p235 = pnand %p233, %p234
    %p236 = pneg %p235
    // Predicated region
    $region9: #{tpu_custom_call.1} parent=5 // pred_check
      _
    $region10: #{tpu_custom_call.1} parent=5 // pred_check_branch
      %238 = sbr.rel (%p235) target = $region12
    $region11: #{tpu_custom_call.1} parent=5 // pred_region
      %s239 = ssub.s32 %s13, 1
      // Predicated region
      $region13: #{tpu_custom_call.1} parent=11 // pred_check
        %p240 = pneg %p134
      $region14: #{tpu_custom_call.1} parent=11 // pred_check_branch
        %242 = sbr.rel (%p240) target = $region16
      $region15: #{tpu_custom_call.1} parent=11 // pred_region
        _
      $region16: #{tpu_custom_call.1} parent=11 // pred_fallthru
        _
      // Predicated region
      $region17: #{tpu_custom_call.1} parent=11 // pred_check
        %p243 = pneg %p155
      $region18: #{tpu_custom_call.1} parent=11 // pred_check_branch
        %245 = sbr.rel (%p243) target = $region20
      $region19: #{tpu_custom_call.1} parent=11 // pred_region
        _
      $region20: #{tpu_custom_call.1} parent=11 // pred_fallthru
        _
      // Predicated region
      $region21: #{tpu_custom_call.1} parent=11 // pred_check
        %p246 = pneg %p176
      $region22: #{tpu_custom_call.1} parent=11 // pred_check_branch
        %248 = sbr.rel (%p246) target = $region24
      $region23: #{tpu_custom_call.1} parent=11 // pred_region
        _
      $region24: #{tpu_custom_call.1} parent=11 // pred_fallthru
        _
      // Predicated region
      $region25: #{tpu_custom_call.1} parent=11 // pred_check
        %p249 = pneg %p197
      $region26: #{tpu_custom_call.1} parent=11 // pred_check_branch
        %251 = sbr.rel (%p249) target = $region28
      $region27: #{tpu_custom_call.1} parent=11 // pred_region
        _
      $region28: #{tpu_custom_call.1} parent=11 // pred_fallthru
        _
    $region12: #{tpu_custom_call.1} parent=5 // pred_fallthru
      _
    %p252 = scmp.lt.s32.totalorder %s13, 4
    // Predicated region
    $region29: #{tpu_custom_call.1} parent=5 // pred_check
      %p253 = pneg %p252
    $region30: #{tpu_custom_call.1} parent=5 // pred_check_branch
      %255 = sbr.rel (%p253) target = $region32
    $region31: #{tpu_custom_call.1} parent=5 // pred_region
      // Predicated region
      $region33: #{tpu_custom_call.1} parent=31 // pred_check
        %p256 = pneg %p47
      $region34: #{tpu_custom_call.1} parent=31 // pred_check_branch
        %258 = sbr.rel (%p256) target = $region36
      $region35: #{tpu_custom_call.1} parent=31 // pred_region
        %s259 = smul.u32 8, %s21
        %p260 = scmp.lt.s32.totalorder %s20, 1
        %s261 = scalar_select %p260, %s20, 1
        %p262 = scmp.lt.s32.totalorder %s259, 15
        %s263 = scalar_select %p262, %s259, 15
        %s264 = smul.addr %s263, 2
        %s265 = smul.addr %s261, 32
        %s266 = sadd.s32 %s264, %s265
        %s267 = smul.addr %s266, 8
        %s268 = scalar_lea.vmem %s0, %s267
        %s269 = smul.u32 8, %s21
      $region36: #{tpu_custom_call.1} parent=31 // pred_fallthru
        _
      // Predicated region
      $region37: #{tpu_custom_call.1} parent=31 // pred_check
        %p270 = pneg %p77
      $region38: #{tpu_custom_call.1} parent=31 // pred_check_branch
        %272 = sbr.rel (%p270) target = $region40
      $region39: #{tpu_custom_call.1} parent=31 // pred_region
        %s273 = smul.u32 %s20, 2
        %s274 = sadd.s32 %s273, %s21
        %p275 = scmp.lt.s32.totalorder %s274, 3
        %s276 = scalar_select %p275, %s274, 3
        %s277 = smul.addr %s276, 4
        %s278 = smul.addr %s277, 8
        %s279 = scalar_lea.vmem %s1, %s278
        %s280 = smul.u32 %s20, 2
        %s281 = sadd.s32 %s280, %s21
      $region40: #{tpu_custom_call.1} parent=31 // pred_fallthru
        _
      // Predicated region
      $region41: #{tpu_custom_call.1} parent=31 // pred_check
        %p282 = pneg %p107
      $region42: #{tpu_custom_call.1} parent=31 // pred_check_branch
        %284 = sbr.rel (%p282) target = $region44
      $region43: #{tpu_custom_call.1} parent=31 // pred_region
        %s285 = smul.u32 %s20, 2
        %s286 = sadd.s32 %s285, %s21
        %p287 = scmp.lt.s32.totalorder %s286, 3
        %s288 = scalar_select %p287, %s286, 3
        %s289 = smul.addr %s288, 4
        %s290 = smul.addr %s289, 8
        %s291 = scalar_lea.vmem %s2, %s290
        %s292 = smul.u32 %s20, 2
        %s293 = sadd.s32 %s292, %s21
      $region44: #{tpu_custom_call.1} parent=31 // pred_fallthru
        _
    $region32: #{tpu_custom_call.1} parent=5 // pred_fallthru
      _
    %p294 = scmp.le.s32.totalorder 1, %s13
    %p295 = scmp.lt.s32.totalorder %s13, 5
    %p296 = pnand %p294, %p295
    %p297 = pneg %p296
    // Predicated region
    $region45: #{tpu_custom_call.1} parent=5 // pred_check
      _
    $region46: #{tpu_custom_call.1} parent=5 // pred_check_branch
      %299 = sbr.rel (%p296) target = $region48
    $region47: #{tpu_custom_call.1} parent=5 // pred_region
      %s300 = ssub.s32 %s13, 1
      %s301 = smul.u32 8, %s23
      %p302 = scmp.lt.s32.totalorder %s22, 1
      %s303 = scalar_select %p302, %s22, 1
      %p304 = scmp.lt.s32.totalorder %s301, 15
      %s305 = scalar_select %p304, %s301, 15
      %s306 = smul.addr %s305, 2
      %s307 = smul.addr %s303, 32
      %s308 = sadd.s32 %s306, %s307
      %s309 = smul.addr %s308, 8
      %s310 = scalar_lea.vmem %s0, %s309
      %p311 = pneg %p53
      %p312 = pneg %p50
      %s313 = smul.u32 %s22, 2
      %s314 = sadd.s32 %s313, %s23
      %p315 = scmp.lt.s32.totalorder %s314, 3
      %s316 = scalar_select %p315, %s314, 3
      %s317 = smul.addr %s316, 4
      %s318 = smul.addr %s317, 8
      %s319 = scalar_lea.vmem %s1, %s318
      %p320 = pneg %p83
      %p321 = pneg %p80
      %s322 = smul.u32 %s22, 2
      %s323 = sadd.s32 %s322, %s23
      %p324 = scmp.lt.s32.totalorder %s323, 3
      %s325 = scalar_select %p324, %s323, 3
      %s326 = smul.addr %s325, 4
      %s327 = smul.addr %s326, 8
      %s328 = scalar_lea.vmem %s2, %s327
      %p329 = pneg %p113
      %p330 = pneg %p110
      %p331 = pneg %p134
      %p332 = pneg %p131
      %p333 = pneg %p155
      %p334 = pneg %p152
      %p335 = pneg %p176
      %p336 = pneg %p173
      %p337 = pneg %p197
      %p338 = pneg %p194
      %p339 = pneg %p225
      %p340 = pneg %p222
      %s341 = smul.u32 8, %s23
      %p342 = scmp.lt.s32.totalorder %s22, 1
      %s343 = scalar_select %p342, %s22, 1
      %p344 = scmp.lt.s32.totalorder %s341, 15
      %s345 = scalar_select %p344, %s341, 15
      %s346 = smul.addr %s345, 2
      %s347 = smul.addr %s343, 32
      %s348 = sadd.s32 %s346, %s347
      %s349 = smul.addr %s348, 8
      %s350 = scalar_lea.vmem %s7, %s349
      %s351 = smul.u32 8, %s23
      %p352 = scmp.lt.s32.totalorder %s22, 1
      %s353 = scalar_select %p352, %s22, 1
      %p354 = scmp.lt.s32.totalorder %s351, 15
      %s355 = scalar_select %p354, %s351, 15
      %s356 = smul.addr %s355, 2
      %s357 = smul.addr %s353, 32
      %s358 = sadd.s32 %s356, %s357
      %s359 = smul.addr %s358, 8
      %s360 = scalar_lea.vmem %s0, %s359
      %s361 = smul.u32 8, %s23
      %s362 = smul.u32 %s22, 2
      %s363 = sadd.s32 %s362, %s23
      %p364 = scmp.lt.s32.totalorder %s363, 3
      %s365 = scalar_select %p364, %s363, 3
      %s366 = smul.addr %s365, 4
      %s367 = smul.addr %s366, 8
      %s368 = scalar_lea.vmem %s1, %s367
      %s369 = smul.u32 %s22, 2
      %s370 = sadd.s32 %s369, %s23
      %s371 = smul.u32 %s22, 2
      %s372 = sadd.s32 %s371, %s23
      %p373 = scmp.lt.s32.totalorder %s372, 3
      %s374 = scalar_select %p373, %s372, 3
      %s375 = smul.addr %s374, 4
      %s376 = smul.addr %s375, 8
      %s377 = scalar_lea.vmem %s2, %s376
      %s378 = smul.u32 %s22, 2
      %s379 = sadd.s32 %s378, %s23
      %s380 = smul.u32 8, %s23
      %p381 = scmp.lt.s32.totalorder %s22, 1
      %s382 = scalar_select %p381, %s22, 1
      %p383 = scmp.lt.s32.totalorder %s380, 15
      %s384 = scalar_select %p383, %s380, 15
      %s385 = smul.addr %s384, 2
      %s386 = smul.addr %s382, 32
      %s387 = sadd.s32 %s385, %s386
      %s388 = smul.addr %s387, 8
      %s389 = scalar_lea.vmem %s7, %s388
      %s390 = smul.u32 8, %s23
      %vm392 = vcmask 27651
      %vm393 = vsmask.f32 7950
      %vm394 = vmand %vm392, %vm393
      %v395 = vld [vmem:[#allocation2 + $0x4] sm:$0x8]
      %v396 = vsel %vm394, 0, %v395
      %397 = vst [vmem:[#allocation2 + $0x4] sm:$0x8] %v396
      %v398 = vld [vmem:[#allocation2 + $0x18] sm:$0x8]
      %v399 = vsel %vm394, 0, %v398
      %400 = vst [vmem:[#allocation2 + $0x18] sm:$0x8] %v399
      %v401 = vld [vmem:[#allocation2 + $0x2c] sm:$0x8]
      %v402 = vsel %vm394, 0, %v401
      %403 = vst [vmem:[#allocation2 + $0x2c] sm:$0x8] %v402
      %v404 = vld [vmem:[#allocation2 + $0x40] sm:$0x8]
      %v405 = vsel %vm394, 0, %v404
      %406 = vst [vmem:[#allocation2 + $0x40] sm:$0x8] %v405
      %v407 = vld [vmem:[#allocation2 + $0x54] sm:$0x8]
      %v408 = vsel %vm394, 0, %v407
      %409 = vst [vmem:[#allocation2 + $0x54] sm:$0x8] %v408
      %v410 = vld [vmem:[#allocation2 + $0x68] sm:$0x8]
      %v411 = vsel %vm394, 0, %v410
      %412 = vst [vmem:[#allocation2 + $0x68] sm:$0x8] %v411
      %v413 = vld [vmem:[#allocation2 + $0x7c] sm:$0x8]
      %v414 = vsel %vm394, 0, %v413
      %415 = vst [vmem:[#allocation2 + $0x7c] sm:$0x8] %v414
      %v416 = vld [vmem:[#allocation2 + $0x90] sm:$0x8]
      %v417 = vsel %vm394, 0, %v416
      %418 = vst [vmem:[#allocation2 + $0x90] sm:$0x8] %v417
      %v419 = vld [vmem:[#allocation2 + $0xa4] sm:$0x8]
      %v420 = vsel %vm394, 0, %v419
      %421 = vst [vmem:[#allocation2 + $0xa4] sm:$0x8] %v420
      %v422 = vld [vmem:[#allocation2 + $0xb8] sm:$0x8]
      %v423 = vsel %vm394, 0, %v422
      %424 = vst [vmem:[#allocation2 + $0xb8] sm:$0x8] %v423
      %v425 = vld [vmem:[#allocation2 + $0xcc] sm:$0x8]
      %v426 = vsel %vm394, 0, %v425
      %427 = vst [vmem:[#allocation2 + $0xcc] sm:$0x8] %v426
      %v428 = vld [vmem:[#allocation2 + $0xe0] sm:$0x8]
      %v429 = vsel %vm394, 0, %v428
      %430 = vst [vmem:[#allocation2 + $0xe0] sm:$0x8] %v429
      %vm431 = vcmask 24576
      %vm432 = vsmask.f32 256
      %vm433 = vmand %vm431, %vm432
      %v434 = vld [vmem:[#allocation2 + $0x10] sm:$0x1]
      %v435 = vsel %vm433, 0, %v434
      %436 = vst [vmem:[#allocation2 + $0x10] sm:$0x1] %v435
      %v437 = vld [vmem:[#allocation2 + $0x24] sm:$0x1]
      %v438 = vsel %vm433, 0, %v437
      %439 = vst [vmem:[#allocation2 + $0x24] sm:$0x1] %v438
      %v440 = vld [vmem:[#allocation2 + $0x38] sm:$0x1]
      %v441 = vsel %vm433, 0, %v440
      %442 = vst [vmem:[#allocation2 + $0x38] sm:$0x1] %v441
      %v443 = vld [vmem:[#allocation2 + $0x4c] sm:$0x1]
      %v444 = vsel %vm433, 0, %v443
      %445 = vst [vmem:[#allocation2 + $0x4c] sm:$0x1] %v444
      %v446 = vld [vmem:[#allocation2 + $0x60] sm:$0x1]
      %v447 = vsel %vm433, 0, %v446
      %448 = vst [vmem:[#allocation2 + $0x60] sm:$0x1] %v447
      %v449 = vld [vmem:[#allocation2 + $0x74] sm:$0x1]
      %v450 = vsel %vm433, 0, %v449
      %451 = vst [vmem:[#allocation2 + $0x74] sm:$0x1] %v450
      %v452 = vld [vmem:[#allocation2 + $0x88] sm:$0x1]
      %v453 = vsel %vm433, 0, %v452
      %454 = vst [vmem:[#allocation2 + $0x88] sm:$0x1] %v453
      %v455 = vld [vmem:[#allocation2 + $0x9c] sm:$0x1]
      %v456 = vsel %vm433, 0, %v455
      %457 = vst [vmem:[#allocation2 + $0x9c] sm:$0x1] %v456
      %v458 = vld [vmem:[#allocation2 + $0xb0] sm:$0x1]
      %v459 = vsel %vm433, 0, %v458
      %460 = vst [vmem:[#allocation2 + $0xb0] sm:$0x1] %v459
      %v461 = vld [vmem:[#allocation2 + $0xc4] sm:$0x1]
      %v462 = vsel %vm433, 0, %v461
      %463 = vst [vmem:[#allocation2 + $0xc4] sm:$0x1] %v462
      %v464 = vld [vmem:[#allocation2 + $0xd8] sm:$0x1]
      %v465 = vsel %vm433, 0, %v464
      %466 = vst [vmem:[#allocation2 + $0xd8] sm:$0x1] %v465
      %v467 = vld [vmem:[#allocation2 + $0xec] sm:$0x1]
      %v468 = vsel %vm433, 0, %v467
      %469 = vst [vmem:[#allocation2 + $0xec] sm:$0x1] %v468
      %v470 = vld [vmem:[#allocation3 + $0x4] sm:$0x8]
      %v471 = vsel %vm394, 0, %v470
      %472 = vst [vmem:[#allocation3 + $0x4] sm:$0x8] %v471
      %v473 = vld [vmem:[#allocation3 + $0x18] sm:$0x8]
      %v474 = vsel %vm394, 0, %v473
      %475 = vst [vmem:[#allocation3 + $0x18] sm:$0x8] %v474
      %v476 = vld [vmem:[#allocation3 + $0x2c] sm:$0x8]
      %v477 = vsel %vm394, 0, %v476
      %478 = vst [vmem:[#allocation3 + $0x2c] sm:$0x8] %v477
      %v479 = vld [vmem:[#allocation3 + $0x40] sm:$0x8]
      %v480 = vsel %vm394, 0, %v479
      %481 = vst [vmem:[#allocation3 + $0x40] sm:$0x8] %v480
      %v482 = vld [vmem:[#allocation3 + $0x54] sm:$0x8]
      %v483 = vsel %vm394, 0, %v482
      %484 = vst [vmem:[#allocation3 + $0x54] sm:$0x8] %v483
      %v485 = vld [vmem:[#allocation3 + $0x68] sm:$0x8]
      %v486 = vsel %vm394, 0, %v485
      %487 = vst [vmem:[#allocation3 + $0x68] sm:$0x8] %v486
      %v488 = vld [vmem:[#allocation3 + $0x7c] sm:$0x8]
      %v489 = vsel %vm394, 0, %v488
      %490 = vst [vmem:[#allocation3 + $0x7c] sm:$0x8] %v489
      %v491 = vld [vmem:[#allocation3 + $0x90] sm:$0x8]
      %v492 = vsel %vm394, 0, %v491
      %493 = vst [vmem:[#allocation3 + $0x90] sm:$0x8] %v492
      %v494 = vld [vmem:[#allocation3 + $0xa4] sm:$0x8]
      %v495 = vsel %vm394, 0, %v494
      %496 = vst [vmem:[#allocation3 + $0xa4] sm:$0x8] %v495
      %v497 = vld [vmem:[#allocation3 + $0xb8] sm:$0x8]
      %v498 = vsel %vm394, 0, %v497
      %499 = vst [vmem:[#allocation3 + $0xb8] sm:$0x8] %v498
      %v500 = vld [vmem:[#allocation3 + $0x10] sm:$0x1]
      %v501 = vsel %vm433, 0, %v500
      %502 = vst [vmem:[#allocation3 + $0x10] sm:$0x1] %v501
      %v503 = vld [vmem:[#allocation3 + $0x24] sm:$0x1]
      %v504 = vsel %vm433, 0, %v503
      %505 = vst [vmem:[#allocation3 + $0x24] sm:$0x1] %v504
      %v506 = vld [vmem:[#allocation3 + $0x38] sm:$0x1]
      %v507 = vsel %vm433, 0, %v506
      %508 = vst [vmem:[#allocation3 + $0x38] sm:$0x1] %v507
      %v509 = vld [vmem:[#allocation3 + $0x4c] sm:$0x1]
      %v510 = vsel %vm433, 0, %v509
      %511 = vst [vmem:[#allocation3 + $0x4c] sm:$0x1] %v510
      %v512 = vld [vmem:[#allocation3 + $0x60] sm:$0x1]
      %v513 = vsel %vm433, 0, %v512
      %514 = vst [vmem:[#allocation3 + $0x60] sm:$0x1] %v513
      %v515 = vld [vmem:[#allocation3 + $0x74] sm:$0x1]
      %v516 = vsel %vm433, 0, %v515
      %517 = vst [vmem:[#allocation3 + $0x74] sm:$0x1] %v516
      %v518 = vld [vmem:[#allocation3 + $0x88] sm:$0x1]
      %v519 = vsel %vm433, 0, %v518
      %520 = vst [vmem:[#allocation3 + $0x88] sm:$0x1] %v519
      %v521 = vld [vmem:[#allocation3 + $0x9c] sm:$0x1]
      %v522 = vsel %vm433, 0, %v521
      %523 = vst [vmem:[#allocation3 + $0x9c] sm:$0x1] %v522
      %v524 = vld [vmem:[#allocation3 + $0xb0] sm:$0x1]
      %v525 = vsel %vm433, 0, %v524
      %526 = vst [vmem:[#allocation3 + $0xb0] sm:$0x1] %v525
      %v527 = vld [vmem:[#allocation3 + $0xc4] sm:$0x1]
      %v528 = vsel %vm433, 0, %v527
      %529 = vst [vmem:[#allocation3 + $0xc4] sm:$0x1] %v528
      %v530 = vld [vmem:[%s368] sm:$0xff]
      %v531 = vld [vmem:[%s368 + $0x8] sm:$0xff]
      %v532 = vld [vmem:[%s368 + $0x10] sm:$0xff]
      %v533 = vld [vmem:[%s368 + $0x18] sm:$0xff]
      %v534 = vpack.c.bf16 %v531, %v530
      %v535 = vpack.c.bf16 %v533, %v532
      %v538 = vunpack.c.l.b16 %v534
      %v539 = vunpack.c.h.b16 %v534
      %v540 = vunpack.c.l.b16 %v535
      %v541 = vunpack.c.h.b16 %v535
      %v542 = vpack.c.b16 %v538, %v538
      %v543 = vpack.c.b16 %v539, %v539
      %v544 = vpack.c.b16 %v540, %v540
      %v545 = vpack.c.b16 %v541, %v541
      %vm550 = vcmask 27648
      %551 = vst.msk [vmem:[#allocation2 + $0x8] sm:$0xf] %vm550, %v542
      %552 = vst.msk [vmem:[#allocation2 + $0xc] sm:$0xf] %vm550, %v543
      %553 = vst.msk [vmem:[#allocation2 + $0x1c] sm:$0xf] %vm550, %v544
      %554 = vst.msk [vmem:[#allocation2 + $0x20] sm:$0xf] %vm550, %v545
      %v555 = vld [vmem:[%s360] sm:$0xff]
      %v556 = vld [vmem:[%s360 + $0x8] sm:$0xff]
      %v557 = vld [vmem:[%s360 + $0x10] sm:$0xff]
      %v558 = vld [vmem:[%s360 + $0x18] sm:$0xff]
      %v559 = vld [vmem:[%s360 + $0x20] sm:$0xff]
      %v560 = vld [vmem:[%s360 + $0x28] sm:$0xff]
      %v561 = vld [vmem:[%s360 + $0x30] sm:$0xff]
      %v562 = vld [vmem:[%s360 + $0x38] sm:$0xff]
      %v563 = vld [vmem:[%s360 + $0x40] sm:$0xff]
      %v564 = vld [vmem:[%s360 + $0x48] sm:$0xff]
      %v565 = vld [vmem:[%s360 + $0x50] sm:$0xff]
      %v566 = vld [vmem:[%s360 + $0x58] sm:$0xff]
      %v567 = vld [vmem:[%s360 + $0x60] sm:$0xff]
      %v568 = vld [vmem:[%s360 + $0x68] sm:$0xff]
      %v569 = vld [vmem:[%s360 + $0x70] sm:$0xff]
      %v570 = vld [vmem:[%s360 + $0x78] sm:$0xff]
      %v571 = vpack.c.bf16 %v556, %v555
      %v572 = vpack.c.bf16 %v558, %v557
      %v573 = vpack.c.bf16 %v560, %v559
      %v574 = vpack.c.bf16 %v562, %v561
      %v575 = vpack.c.bf16 %v564, %v563
      %v576 = vpack.c.bf16 %v566, %v565
      %v577 = vpack.c.bf16 %v568, %v567
      %v578 = vpack.c.bf16 %v570, %v569
      %v587 = vunpack.c.l.b16 %v571
      %v588 = vunpack.c.h.b16 %v571
      %v589 = vunpack.c.l.b16 %v572
      %v590 = vunpack.c.h.b16 %v572
      %v591 = vunpack.c.l.b16 %v573
      %v592 = vunpack.c.h.b16 %v573
      %v593 = vunpack.c.l.b16 %v574
      %v594 = vunpack.c.h.b16 %v574
      %v595 = vunpack.c.l.b16 %v575
      %v596 = vunpack.c.h.b16 %v575
      %v597 = vunpack.c.l.b16 %v576
      %v598 = vunpack.c.h.b16 %v576
      %v599 = vunpack.c.l.b16 %v577
      %v600 = vunpack.c.h.b16 %v577
      %v601 = vunpack.c.l.b16 %v578
      %v602 = vunpack.c.h.b16 %v578
      %v603 = vpack.c.b16 %v587, %v587
      %v604 = vpack.c.b16 %v588, %v588
      %v605 = vpack.c.b16 %v589, %v589
      %v606 = vpack.c.b16 %v590, %v590
      %v607 = vpack.c.b16 %v591, %v591
      %v608 = vpack.c.b16 %v592, %v592
      %v609 = vpack.c.b16 %v593, %v593
      %v610 = vpack.c.b16 %v594, %v594
      %v611 = vpack.c.b16 %v595, %v595
      %v612 = vpack.c.b16 %v596, %v596
      %v613 = vpack.c.b16 %v597, %v597
      %v614 = vpack.c.b16 %v598, %v598
      %v615 = vpack.c.b16 %v599, %v599
      %v616 = vpack.c.b16 %v600, %v600
      %v617 = vpack.c.b16 %v601, %v601
      %v618 = vpack.c.b16 %v602, %v602
      %s635 = scalar_lea.vmem [#allocation2], 40
      %636 = vst.msk [vmem:[%s635 + $0x8] sm:$0xf] %vm550, %v603
      %637 = vst.msk [vmem:[%s635 + $0xc] sm:$0xf] %vm550, %v604
      %638 = vst.msk [vmem:[%s635 + $0x1c] sm:$0xf] %vm550, %v605
      %639 = vst.msk [vmem:[%s635 + $0x20] sm:$0xf] %vm550, %v606
      %640 = vst.msk [vmem:[%s635 + $0x30] sm:$0xf] %vm550, %v607
      %641 = vst.msk [vmem:[%s635 + $0x34] sm:$0xf] %vm550, %v608
      %642 = vst.msk [vmem:[%s635 + $0x44] sm:$0xf] %vm550, %v609
      %643 = vst.msk [vmem:[%s635 + $0x48] sm:$0xf] %vm550, %v610
      %644 = vst.msk [vmem:[%s635 + $0x58] sm:$0xf] %vm550, %v611
      %645 = vst.msk [vmem:[%s635 + $0x5c] sm:$0xf] %vm550, %v612
      %646 = vst.msk [vmem:[%s635 + $0x6c] sm:$0xf] %vm550, %v613
      %647 = vst.msk [vmem:[%s635 + $0x70] sm:$0xf] %vm550, %v614
      %648 = vst.msk [vmem:[%s635 + $0x80] sm:$0xf] %vm550, %v615
      %649 = vst.msk [vmem:[%s635 + $0x84] sm:$0xf] %vm550, %v616
      %650 = vst.msk [vmem:[%s635 + $0x94] sm:$0xf] %vm550, %v617
      %651 = vst.msk [vmem:[%s635 + $0x98] sm:$0xf] %vm550, %v618
      %v652 = vld [vmem:[%s377] sm:$0xff]
      %v653 = vld [vmem:[%s377 + $0x8] sm:$0xff]
      %v654 = vld [vmem:[%s377 + $0x10] sm:$0xff]
      %v655 = vld [vmem:[%s377 + $0x18] sm:$0xff]
      %v656 = vpack.c.bf16 %v653, %v652
      %v657 = vpack.c.bf16 %v655, %v654
      %v660 = vunpack.c.l.b16 %v656
      %v661 = vunpack.c.h.b16 %v656
      %v662 = vunpack.c.l.b16 %v657
      %v663 = vunpack.c.h.b16 %v657
      %v664 = vpack.c.b16 %v660, %v660
      %v665 = vpack.c.b16 %v661, %v661
      %v666 = vpack.c.b16 %v662, %v662
      %v667 = vpack.c.b16 %v663, %v663
      %s672 = scalar_lea.vmem [#allocation2], 200
      %673 = vst.msk [vmem:[%s672 + $0x8] sm:$0xf] %vm550, %v664
      %674 = vst.msk [vmem:[%s672 + $0xc] sm:$0xf] %vm550, %v665
      %675 = vst.msk [vmem:[%s672 + $0x1c] sm:$0xf] %vm550, %v666
      %676 = vst.msk [vmem:[%s672 + $0x20] sm:$0xf] %vm550, %v667
      %v677 = vld [vmem:[#allocation2 + $0x4] sm:$0x8]
      %v678 = vld [vmem:[#allocation2 + $0x8] sm:$0xf]
      %v679 = vld [vmem:[#allocation2 + $0xc] sm:$0xf]
      %v680 = vld [vmem:[#allocation2 + $0x18] sm:$0x8]
      %v681 = vld [vmem:[#allocation2 + $0x1c] sm:$0xf]
      %v682 = vld [vmem:[#allocation2 + $0x20] sm:$0xf]
      %v683 = vld [vmem:[#allocation2 + $0x2c] sm:$0x8]
      %v684 = vld [vmem:[#allocation2 + $0x30] sm:$0xf]
      %v685 = vld [vmem:[#allocation2 + $0x34] sm:$0xf]
      %v686 = vld [vmem:[#allocation2 + $0x40] sm:$0x8]
      %v687 = vld [vmem:[#allocation2 + $0x44] sm:$0xf]
      %v688 = vld [vmem:[#allocation2 + $0x48] sm:$0xf]
      %v689 = vld [vmem:[#allocation2 + $0x54] sm:$0x8]
      %v690 = vld [vmem:[#allocation2 + $0x58] sm:$0xf]
      %v691 = vld [vmem:[#allocation2 + $0x5c] sm:$0xf]
      %v692 = vld [vmem:[#allocation2 + $0x68] sm:$0x8]
      %v693 = vld [vmem:[#allocation2 + $0x6c] sm:$0xf]
      %v694 = vld [vmem:[#allocation2 + $0x70] sm:$0xf]
      %v695 = vld [vmem:[#allocation2 + $0x7c] sm:$0x8]
      %v696 = vld [vmem:[#allocation2 + $0x80] sm:$0xf]
      %v697 = vld [vmem:[#allocation2 + $0x84] sm:$0xf]
      %v698 = vld [vmem:[#allocation2 + $0x90] sm:$0x8]
      %v699 = vld [vmem:[#allocation2 + $0x94] sm:$0xf]
      %v700 = vld [vmem:[#allocation2 + $0x98] sm:$0xf]
      %v701 = vld [vmem:[#allocation2 + $0xa4] sm:$0x8]
      %v702 = vld [vmem:[#allocation2 + $0xa8] sm:$0xf]
      %v703 = vld [vmem:[#allocation2 + $0xac] sm:$0xf]
      %v704 = vld [vmem:[#allocation2 + $0xb8] sm:$0x8]
      %v705 = vld [vmem:[#allocation2 + $0xbc] sm:$0xf]
      %v706 = vld [vmem:[#allocation2 + $0xc0] sm:$0xf]
      %v707 = vld [vmem:[#allocation2 + $0x10] sm:$0x1]
      %v708 = vld [vmem:[#allocation2 + $0x24] sm:$0x1]
      %v709 = vld [vmem:[#allocation2 + $0x38] sm:$0x1]
      %v710 = vld [vmem:[#allocation2 + $0x4c] sm:$0x1]
      %v711 = vld [vmem:[#allocation2 + $0x60] sm:$0x1]
      %v712 = vld [vmem:[#allocation2 + $0x74] sm:$0x1]
      %v713 = vld [vmem:[#allocation2 + $0x88] sm:$0x1]
      %v714 = vld [vmem:[#allocation2 + $0x9c] sm:$0x1]
      %v715 = vld [vmem:[#allocation2 + $0xb0] sm:$0x1]
      %v716 = vld [vmem:[#allocation2 + $0xc4] sm:$0x1]
      %s717 = scalar_lea.vmem [#allocation2], 20
      %v718 = vld [vmem:[%s717 + $0x4] sm:$0x8]
      %v719 = vld [vmem:[%s717 + $0x8] sm:$0xf]
      %v720 = vld [vmem:[%s717 + $0xc] sm:$0xf]
      %v721 = vld [vmem:[%s717 + $0x18] sm:$0x8]
      %v722 = vld [vmem:[%s717 + $0x1c] sm:$0xf]
      %v723 = vld [vmem:[%s717 + $0x20] sm:$0xf]
      %v724 = vld [vmem:[%s717 + $0x2c] sm:$0x8]
      %v725 = vld [vmem:[%s717 + $0x30] sm:$0xf]
      %v726 = vld [vmem:[%s717 + $0x34] sm:$0xf]
      %v727 = vld [vmem:[%s717 + $0x40] sm:$0x8]
      %v728 = vld [vmem:[%s717 + $0x44] sm:$0xf]
      %v729 = vld [vmem:[%s717 + $0x48] sm:$0xf]
      %v730 = vld [vmem:[%s717 + $0x54] sm:$0x8]
      %v731 = vld [vmem:[%s717 + $0x58] sm:$0xf]
      %v732 = vld [vmem:[%s717 + $0x5c] sm:$0xf]
      %v733 = vld [vmem:[%s717 + $0x68] sm:$0x8]
      %v734 = vld [vmem:[%s717 + $0x6c] sm:$0xf]
      %v735 = vld [vmem:[%s717 + $0x70] sm:$0xf]
      %v736 = vld [vmem:[%s717 + $0x7c] sm:$0x8]
      %v737 = vld [vmem:[%s717 + $0x80] sm:$0xf]
      %v738 = vld [vmem:[%s717 + $0x84] sm:$0xf]
      %v739 = vld [vmem:[%s717 + $0x90] sm:$0x8]
      %v740 = vld [vmem:[%s717 + $0x94] sm:$0xf]
      %v741 = vld [vmem:[%s717 + $0x98] sm:$0xf]
      %v742 = vld [vmem:[%s717 + $0xa4] sm:$0x8]
      %v743 = vld [vmem:[%s717 + $0xa8] sm:$0xf]
      %v744 = vld [vmem:[%s717 + $0xac] sm:$0xf]
      %v745 = vld [vmem:[%s717 + $0xb8] sm:$0x8]
      %v746 = vld [vmem:[%s717 + $0xbc] sm:$0xf]
      %v747 = vld [vmem:[%s717 + $0xc0] sm:$0xf]
      %v748 = vld [vmem:[%s717 + $0x10] sm:$0x1]
      %v749 = vld [vmem:[%s717 + $0x24] sm:$0x1]
      %v750 = vld [vmem:[%s717 + $0x38] sm:$0x1]
      %v751 = vld [vmem:[%s717 + $0x4c] sm:$0x1]
      %v752 = vld [vmem:[%s717 + $0x60] sm:$0x1]
      %v753 = vld [vmem:[%s717 + $0x74] sm:$0x1]
      %v754 = vld [vmem:[%s717 + $0x88] sm:$0x1]
      %v755 = vld [vmem:[%s717 + $0x9c] sm:$0x1]
      %v756 = vld [vmem:[%s717 + $0xb0] sm:$0x1]
      %v757 = vld [vmem:[%s717 + $0xc4] sm:$0x1]
      %v758 = vld [vmem:[%s635 + $0x4] sm:$0x8]
      %v759 = vld [vmem:[%s635 + $0x8] sm:$0xf]
      %v760 = vld [vmem:[%s635 + $0xc] sm:$0xf]
      %v761 = vld [vmem:[%s635 + $0x18] sm:$0x8]
      %v762 = vld [vmem:[%s635 + $0x1c] sm:$0xf]
      %v763 = vld [vmem:[%s635 + $0x20] sm:$0xf]
      %v764 = vld [vmem:[%s635 + $0x2c] sm:$0x8]
      %v765 = vld [vmem:[%s635 + $0x30] sm:$0xf]
      %v766 = vld [vmem:[%s635 + $0x34] sm:$0xf]
      %v767 = vld [vmem:[%s635 + $0x40] sm:$0x8]
      %v768 = vld [vmem:[%s635 + $0x44] sm:$0xf]
      %v769 = vld [vmem:[%s635 + $0x48] sm:$0xf]
      %v770 = vld [vmem:[%s635 + $0x54] sm:$0x8]
      %v771 = vld [vmem:[%s635 + $0x58] sm:$0xf]
      %v772 = vld [vmem:[%s635 + $0x5c] sm:$0xf]
      %v773 = vld [vmem:[%s635 + $0x68] sm:$0x8]
      %v774 = vld [vmem:[%s635 + $0x6c] sm:$0xf]
      %v775 = vld [vmem:[%s635 + $0x70] sm:$0xf]
      %v776 = vld [vmem:[%s635 + $0x7c] sm:$0x8]
      %v777 = vld [vmem:[%s635 + $0x80] sm:$0xf]
      %v778 = vld [vmem:[%s635 + $0x84] sm:$0xf]
      %v779 = vld [vmem:[%s635 + $0x90] sm:$0x8]
      %v780 = vld [vmem:[%s635 + $0x94] sm:$0xf]
      %v781 = vld [vmem:[%s635 + $0x98] sm:$0xf]
      %v782 = vld [vmem:[%s635 + $0xa4] sm:$0x8]
      %v783 = vld [vmem:[%s635 + $0xa8] sm:$0xf]
      %v784 = vld [vmem:[%s635 + $0xac] sm:$0xf]
      %v785 = vld [vmem:[%s635 + $0xb8] sm:$0x8]
      %v786 = vld [vmem:[%s635 + $0xbc] sm:$0xf]
      %v787 = vld [vmem:[%s635 + $0xc0] sm:$0xf]
      %v788 = vld [vmem:[%s635 + $0x10] sm:$0x1]
      %v789 = vld [vmem:[%s635 + $0x24] sm:$0x1]
      %v790 = vld [vmem:[%s635 + $0x38] sm:$0x1]
      %v791 = vld [vmem:[%s635 + $0x4c] sm:$0x1]
      %v792 = vld [vmem:[%s635 + $0x60] sm:$0x1]
      %v793 = vld [vmem:[%s635 + $0x74] sm:$0x1]
      %v794 = vld [vmem:[%s635 + $0x88] sm:$0x1]
      %v795 = vld [vmem:[%s635 + $0x9c] sm:$0x1]
      %v796 = vld [vmem:[%s635 + $0xb0] sm:$0x1]
      %v797 = vld [vmem:[%s635 + $0xc4] sm:$0x1]
      %v828 = vunpack.c.l.b16 %v677
      %v829 = vunpack.c.l.b16 %v678
      %v830 = vunpack.c.l.b16 %v679
      %v831 = vunpack.c.l.b16 %v680
      %v832 = vunpack.c.l.b16 %v681
      %v833 = vunpack.c.l.b16 %v682
      %v834 = vunpack.c.l.b16 %v683
      %v835 = vunpack.c.l.b16 %v684
      %v836 = vunpack.c.l.b16 %v685
      %v837 = vunpack.c.l.b16 %v686
      %v838 = vunpack.c.l.b16 %v687
      %v839 = vunpack.c.l.b16 %v688
      %v840 = vunpack.c.l.b16 %v689
      %v841 = vunpack.c.l.b16 %v690
      %v842 = vunpack.c.l.b16 %v691
      %v843 = vunpack.c.l.b16 %v692
      %v844 = vunpack.c.l.b16 %v693
      %v845 = vunpack.c.l.b16 %v694
      %v846 = vunpack.c.l.b16 %v695
      %v847 = vunpack.c.l.b16 %v696
      %v848 = vunpack.c.l.b16 %v697
      %v849 = vunpack.c.l.b16 %v698
      %v850 = vunpack.c.l.b16 %v699
      %v851 = vunpack.c.l.b16 %v700
      %v852 = vunpack.c.l.b16 %v701
      %v853 = vunpack.c.l.b16 %v702
      %v854 = vunpack.c.l.b16 %v703
      %v855 = vunpack.c.l.b16 %v704
      %v856 = vunpack.c.l.b16 %v705
      %v857 = vunpack.c.l.b16 %v706
      %v858 = vpack.c.b16 %v829, %v828
      %v859 = vpack.c.b16 %v830, %v830
      %v860 = vpack.c.b16 %v832, %v831
      %v861 = vpack.c.b16 %v833, %v833
      %v862 = vpack.c.b16 %v835, %v834
      %v863 = vpack.c.b16 %v836, %v836
      %v864 = vpack.c.b16 %v838, %v837
      %v865 = vpack.c.b16 %v839, %v839
      %v866 = vpack.c.b16 %v841, %v840
      %v867 = vpack.c.b16 %v842, %v842
      %v868 = vpack.c.b16 %v844, %v843
      %v869 = vpack.c.b16 %v845, %v845
      %v870 = vpack.c.b16 %v847, %v846
      %v871 = vpack.c.b16 %v848, %v848
      %v872 = vpack.c.b16 %v850, %v849
      %v873 = vpack.c.b16 %v851, %v851
      %v874 = vpack.c.b16 %v853, %v852
      %v875 = vpack.c.b16 %v854, %v854
      %v876 = vpack.c.b16 %v856, %v855
      %v877 = vpack.c.b16 %v857, %v857
      %v878 = vpack.c.b16 %v830, %v829
      %v879 = vpack.c.b16 %v833, %v832
      %v880 = vpack.c.b16 %v836, %v835
      %v881 = vpack.c.b16 %v839, %v838
      %v882 = vpack.c.b16 %v842, %v841
      %v883 = vpack.c.b16 %v845, %v844
      %v884 = vpack.c.b16 %v848, %v847
      %v885 = vpack.c.b16 %v851, %v850
      %v886 = vpack.c.b16 %v854, %v853
      %v887 = vpack.c.b16 %v857, %v856
      %v889 = vshrl.u32 %v878, 16
      %v891 = vrot.slane %v889, 4
      %v892 = vshll.u32 %v878, 16
      %v894 = vrot.slane %v892, 5
      %v895 = vor.u32 %v891, %v894
      %v897 = vshrl.u32 %v879, 16
      %v899 = vrot.slane %v897, 4
      %v900 = vshll.u32 %v879, 16
      %v902 = vrot.slane %v900, 5
      %v903 = vor.u32 %v899, %v902
      %v905 = vshrl.u32 %v880, 16
      %v907 = vrot.slane %v905, 4
      %v908 = vshll.u32 %v880, 16
      %v910 = vrot.slane %v908, 5
      %v911 = vor.u32 %v907, %v910
      %v913 = vshrl.u32 %v881, 16
      %v915 = vrot.slane %v913, 4
      %v916 = vshll.u32 %v881, 16
      %v918 = vrot.slane %v916, 5
      %v919 = vor.u32 %v915, %v918
      %v921 = vshrl.u32 %v882, 16
      %v923 = vrot.slane %v921, 4
      %v924 = vshll.u32 %v882, 16
      %v926 = vrot.slane %v924, 5
      %v927 = vor.u32 %v923, %v926
      %v929 = vshrl.u32 %v883, 16
      %v931 = vrot.slane %v929, 4
      %v932 = vshll.u32 %v883, 16
      %v934 = vrot.slane %v932, 5
      %v935 = vor.u32 %v931, %v934
      %v937 = vshrl.u32 %v884, 16
      %v939 = vrot.slane %v937, 4
      %v940 = vshll.u32 %v884, 16
      %v942 = vrot.slane %v940, 5
      %v943 = vor.u32 %v939, %v942
      %v945 = vshrl.u32 %v885, 16
      %v947 = vrot.slane %v945, 4
      %v948 = vshll.u32 %v885, 16
      %v950 = vrot.slane %v948, 5
      %v951 = vor.u32 %v947, %v950
      %v953 = vshrl.u32 %v886, 16
      %v955 = vrot.slane %v953, 4
      %v956 = vshll.u32 %v886, 16
      %v958 = vrot.slane %v956, 5
      %v959 = vor.u32 %v955, %v958
      %v961 = vshrl.u32 %v887, 16
      %v963 = vrot.slane %v961, 4
      %v964 = vshll.u32 %v887, 16
      %v966 = vrot.slane %v964, 5
      %v967 = vor.u32 %v963, %v966
      %968 = vrot.lane.b32.xlu0 %v895, 4
      %v969 = vpop.permute.xlu0 %968
      %970 = vrot.lane.b32.xlu0 %v903, 4
      %v971 = vpop.permute.xlu0 %970
      %972 = vrot.lane.b32.xlu0 %v911, 4
      %v973 = vpop.permute.xlu0 %972
      %974 = vrot.lane.b32.xlu0 %v919, 4
      %v975 = vpop.permute.xlu0 %974
      %976 = vrot.lane.b32.xlu0 %v927, 4
      %v977 = vpop.permute.xlu0 %976
      %978 = vrot.lane.b32.xlu0 %v935, 4
      %v979 = vpop.permute.xlu0 %978
      %980 = vrot.lane.b32.xlu0 %v943, 4
      %v981 = vpop.permute.xlu0 %980
      %982 = vrot.lane.b32.xlu0 %v951, 4
      %v983 = vpop.permute.xlu0 %982
      %984 = vrot.lane.b32.xlu0 %v959, 4
      %v985 = vpop.permute.xlu0 %984
      %986 = vrot.lane.b32.xlu0 %v967, 4
      %v987 = vpop.permute.xlu0 %986
      %v998 = vunpack.c.l.b16 %v707
      %v999 = vunpack.c.l.b16 %v708
      %v1000 = vunpack.c.l.b16 %v709
      %v1001 = vunpack.c.l.b16 %v710
      %v1002 = vunpack.c.l.b16 %v711
      %v1003 = vunpack.c.l.b16 %v712
      %v1004 = vunpack.c.l.b16 %v713
      %v1005 = vunpack.c.l.b16 %v714
      %v1006 = vunpack.c.l.b16 %v715
      %v1007 = vunpack.c.l.b16 %v716
      %v1008 = vpack.c.b16 %v998, %v998
      %v1009 = vpack.c.b16 %v999, %v999
      %v1010 = vpack.c.b16 %v1000, %v1000
      %v1011 = vpack.c.b16 %v1001, %v1001
      %v1012 = vpack.c.b16 %v1002, %v1002
      %v1013 = vpack.c.b16 %v1003, %v1003
      %v1014 = vpack.c.b16 %v1004, %v1004
      %v1015 = vpack.c.b16 %v1005, %v1005
      %v1016 = vpack.c.b16 %v1006, %v1006
      %v1017 = vpack.c.b16 %v1007, %v1007
      %vm1018 = vcmask 1042432
      %v1019 = vrot.slane %v878, 5
      %v1020 = vrot.slane %v1008, 5
      %v1021 = vsel %vm1018, %v1019, %v1020
      %v1022 = vrot.slane %v879, 5
      %v1023 = vrot.slane %v1009, 5
      %v1024 = vsel %vm1018, %v1022, %v1023
      %v1025 = vrot.slane %v880, 5
      %v1026 = vrot.slane %v1010, 5
      %v1027 = vsel %vm1018, %v1025, %v1026
      %v1028 = vrot.slane %v881, 5
      %v1029 = vrot.slane %v1011, 5
      %v1030 = vsel %vm1018, %v1028, %v1029
      %v1031 = vrot.slane %v882, 5
      %v1032 = vrot.slane %v1012, 5
      %v1033 = vsel %vm1018, %v1031, %v1032
      %v1034 = vrot.slane %v883, 5
      %v1035 = vrot.slane %v1013, 5
      %v1036 = vsel %vm1018, %v1034, %v1035
      %v1037 = vrot.slane %v884, 5
      %v1038 = vrot.slane %v1014, 5
      %v1039 = vsel %vm1018, %v1037, %v1038
      %v1040 = vrot.slane %v885, 5
      %v1041 = vrot.slane %v1015, 5
      %v1042 = vsel %vm1018, %v1040, %v1041
      %v1043 = vrot.slane %v886, 5
      %v1044 = vrot.slane %v1016, 5
      %v1045 = vsel %vm1018, %v1043, %v1044
      %v1046 = vrot.slane %v887, 5
      %v1047 = vrot.slane %v1017, 5
      %v1048 = vsel %vm1018, %v1046, %v1047
      %1049 = vrot.lane.b32.xlu0 %v1019, 8
      %v1050 = vpop.permute.xlu0 %1049
      %1051 = vrot.lane.b32.xlu0 %v1021, 8
      %v1052 = vpop.permute.xlu0 %1051
      %1053 = vrot.lane.b32.xlu0 %v1022, 8
      %v1054 = vpop.permute.xlu0 %1053
      %1055 = vrot.lane.b32.xlu0 %v1024, 8
      %v1056 = vpop.permute.xlu0 %1055
      %1057 = vrot.lane.b32.xlu0 %v1025, 8
      %v1058 = vpop.permute.xlu0 %1057
      %1059 = vrot.lane.b32.xlu0 %v1027, 8
      %v1060 = vpop.permute.xlu0 %1059
      %1061 = vrot.lane.b32.xlu0 %v1028, 8
      %v1062 = vpop.permute.xlu0 %1061
      %1063 = vrot.lane.b32.xlu0 %v1030, 8
      %v1064 = vpop.permute.xlu0 %1063
      %1065 = vrot.lane.b32.xlu0 %v1031, 8
      %v1066 = vpop.permute.xlu0 %1065
      %1067 = vrot.lane.b32.xlu0 %v1033, 8
      %v1068 = vpop.permute.xlu0 %1067
      %1069 = vrot.lane.b32.xlu0 %v1034, 8
      %v1070 = vpop.permute.xlu0 %1069
      %1071 = vrot.lane.b32.xlu0 %v1036, 8
      %v1072 = vpop.permute.xlu0 %1071
      %1073 = vrot.lane.b32.xlu0 %v1037, 8
      %v1074 = vpop.permute.xlu0 %1073
      %1075 = vrot.lane.b32.xlu0 %v1039, 8
      %v1076 = vpop.permute.xlu0 %1075
      %1077 = vrot.lane.b32.xlu0 %v1040, 8
      %v1078 = vpop.permute.xlu0 %1077
      %1079 = vrot.lane.b32.xlu0 %v1042, 8
      %v1080 = vpop.permute.xlu0 %1079
      %1081 = vrot.lane.b32.xlu0 %v1043, 8
      %v1082 = vpop.permute.xlu0 %1081
      %1083 = vrot.lane.b32.xlu0 %v1045, 8
      %v1084 = vpop.permute.xlu0 %1083
      %1085 = vrot.lane.b32.xlu0 %v1046, 8
      %v1086 = vpop.permute.xlu0 %1085
      %1087 = vrot.lane.b32.xlu0 %v1048, 8
      %v1088 = vpop.permute.xlu0 %1087
      %v1119 = vunpack.c.l.b16 %v718
      %v1120 = vunpack.c.l.b16 %v719
      %v1121 = vunpack.c.l.b16 %v720
      %v1122 = vunpack.c.l.b16 %v721
      %v1123 = vunpack.c.l.b16 %v722
      %v1124 = vunpack.c.l.b16 %v723
      %v1125 = vunpack.c.l.b16 %v724
      %v1126 = vunpack.c.l.b16 %v725
      %v1127 = vunpack.c.l.b16 %v726
      %v1128 = vunpack.c.l.b16 %v727
      %v1129 = vunpack.c.l.b16 %v728
      %v1130 = vunpack.c.l.b16 %v729
      %v1131 = vunpack.c.l.b16 %v730
      %v1132 = vunpack.c.l.b16 %v731
      %v1133 = vunpack.c.l.b16 %v732
      %v1134 = vunpack.c.l.b16 %v733
      %v1135 = vunpack.c.l.b16 %v734
      %v1136 = vunpack.c.l.b16 %v735
      %v1137 = vunpack.c.l.b16 %v736
      %v1138 = vunpack.c.l.b16 %v737
      %v1139 = vunpack.c.l.b16 %v738
      %v1140 = vunpack.c.l.b16 %v739
      %v1141 = vunpack.c.l.b16 %v740
      %v1142 = vunpack.c.l.b16 %v741
      %v1143 = vunpack.c.l.b16 %v742
      %v1144 = vunpack.c.l.b16 %v743
      %v1145 = vunpack.c.l.b16 %v744
      %v1146 = vunpack.c.l.b16 %v745
      %v1147 = vunpack.c.l.b16 %v746
      %v1148 = vunpack.c.l.b16 %v747
      %v1149 = vpack.c.b16 %v1120, %v1119
      %v1150 = vpack.c.b16 %v1121, %v1121
      %v1151 = vpack.c.b16 %v1123, %v1122
      %v1152 = vpack.c.b16 %v1124, %v1124
      %v1153 = vpack.c.b16 %v1126, %v1125
      %v1154 = vpack.c.b16 %v1127, %v1127
      %v1155 = vpack.c.b16 %v1129, %v1128
      %v1156 = vpack.c.b16 %v1130, %v1130
      %v1157 = vpack.c.b16 %v1132, %v1131
      %v1158 = vpack.c.b16 %v1133, %v1133
      %v1159 = vpack.c.b16 %v1135, %v1134
      %v1160 = vpack.c.b16 %v1136, %v1136
      %v1161 = vpack.c.b16 %v1138, %v1137
      %v1162 = vpack.c.b16 %v1139, %v1139
      %v1163 = vpack.c.b16 %v1141, %v1140
      %v1164 = vpack.c.b16 %v1142, %v1142
      %v1165 = vpack.c.b16 %v1144, %v1143
      %v1166 = vpack.c.b16 %v1145, %v1145
      %v1167 = vpack.c.b16 %v1147, %v1146
      %v1168 = vpack.c.b16 %v1148, %v1148
      %1169 = vrot.lane.b32.xlu0 %v1149, 12
      %v1170 = vpop.permute.xlu0 %1169
      %1171 = vrot.lane.b32.xlu0 %v1150, 12
      %v1172 = vpop.permute.xlu0 %1171
      %1173 = vrot.lane.b32.xlu0 %v1151, 12
      %v1174 = vpop.permute.xlu0 %1173
      %1175 = vrot.lane.b32.xlu0 %v1152, 12
      %v1176 = vpop.permute.xlu0 %1175
      %1177 = vrot.lane.b32.xlu0 %v1153, 12
      %v1178 = vpop.permute.xlu0 %1177
      %1179 = vrot.lane.b32.xlu0 %v1154, 12
      %v1180 = vpop.permute.xlu0 %1179
      %1181 = vrot.lane.b32.xlu0 %v1155, 12
      %v1182 = vpop.permute.xlu0 %1181
      %1183 = vrot.lane.b32.xlu0 %v1156, 12
      %v1184 = vpop.permute.xlu0 %1183
      %1185 = vrot.lane.b32.xlu0 %v1157, 12
      %v1186 = vpop.permute.xlu0 %1185
      %1187 = vrot.lane.b32.xlu0 %v1158, 12
      %v1188 = vpop.permute.xlu0 %1187
      %1189 = vrot.lane.b32.xlu0 %v1159, 12
      %v1190 = vpop.permute.xlu0 %1189
      %1191 = vrot.lane.b32.xlu0 %v1160, 12
      %v1192 = vpop.permute.xlu0 %1191
      %1193 = vrot.lane.b32.xlu0 %v1161, 12
      %v1194 = vpop.permute.xlu0 %1193
      %1195 = vrot.lane.b32.xlu0 %v1162, 12
      %v1196 = vpop.permute.xlu0 %1195
      %1197 = vrot.lane.b32.xlu0 %v1163, 12
      %v1198 = vpop.permute.xlu0 %1197
      %1199 = vrot.lane.b32.xlu0 %v1164, 12
      %v1200 = vpop.permute.xlu0 %1199
      %1201 = vrot.lane.b32.xlu0 %v1165, 12
      %v1202 = vpop.permute.xlu0 %1201
      %1203 = vrot.lane.b32.xlu0 %v1166, 12
      %v1204 = vpop.permute.xlu0 %1203
      %1205 = vrot.lane.b32.xlu0 %v1167, 12
      %v1206 = vpop.permute.xlu0 %1205
      %1207 = vrot.lane.b32.xlu0 %v1168, 12
      %v1208 = vpop.permute.xlu0 %1207
      %v1209 = vpack.c.b16 %v1121, %v1120
      %v1210 = vpack.c.b16 %v1124, %v1123
      %v1211 = vpack.c.b16 %v1127, %v1126
      %v1212 = vpack.c.b16 %v1130, %v1129
      %v1213 = vpack.c.b16 %v1133, %v1132
      %v1214 = vpack.c.b16 %v1136, %v1135
      %v1215 = vpack.c.b16 %v1139, %v1138
      %v1216 = vpack.c.b16 %v1142, %v1141
      %v1217 = vpack.c.b16 %v1145, %v1144
      %v1218 = vpack.c.b16 %v1148, %v1147
      %v1220 = vshrl.u32 %v1209, 16
      %v1222 = vrot.slane %v1220, 4
      %v1223 = vshll.u32 %v1209, 16
      %v1225 = vrot.slane %v1223, 5
      %v1226 = vor.u32 %v1222, %v1225
      %v1228 = vshrl.u32 %v1210, 16
      %v1230 = vrot.slane %v1228, 4
      %v1231 = vshll.u32 %v1210, 16
      %v1233 = vrot.slane %v1231, 5
      %v1234 = vor.u32 %v1230, %v1233
      %v1236 = vshrl.u32 %v1211, 16
      %v1238 = vrot.slane %v1236, 4
      %v1239 = vshll.u32 %v1211, 16
      %v1241 = vrot.slane %v1239, 5
      %v1242 = vor.u32 %v1238, %v1241
      %v1244 = vshrl.u32 %v1212, 16
      %v1246 = vrot.slane %v1244, 4
      %v1247 = vshll.u32 %v1212, 16
      %v1249 = vrot.slane %v1247, 5
      %v1250 = vor.u32 %v1246, %v1249
      %v1252 = vshrl.u32 %v1213, 16
      %v1254 = vrot.slane %v1252, 4
      %v1255 = vshll.u32 %v1213, 16
      %v1257 = vrot.slane %v1255, 5
      %v1258 = vor.u32 %v1254, %v1257
      %v1260 = vshrl.u32 %v1214, 16
      %v1262 = vrot.slane %v1260, 4
      %v1263 = vshll.u32 %v1214, 16
      %v1265 = vrot.slane %v1263, 5
      %v1266 = vor.u32 %v1262, %v1265
      %v1268 = vshrl.u32 %v1215, 16
      %v1270 = vrot.slane %v1268, 4
      %v1271 = vshll.u32 %v1215, 16
      %v1273 = vrot.slane %v1271, 5
      %v1274 = vor.u32 %v1270, %v1273
      %v1276 = vshrl.u32 %v1216, 16
      %v1278 = vrot.slane %v1276, 4
      %v1279 = vshll.u32 %v1216, 16
      %v1281 = vrot.slane %v1279, 5
      %v1282 = vor.u32 %v1278, %v1281
      %v1284 = vshrl.u32 %v1217, 16
      %v1286 = vrot.slane %v1284, 4
      %v1287 = vshll.u32 %v1217, 16
      %v1289 = vrot.slane %v1287, 5
      %v1290 = vor.u32 %v1286, %v1289
      %v1292 = vshrl.u32 %v1218, 16
      %v1294 = vrot.slane %v1292, 4
      %v1295 = vshll.u32 %v1218, 16
      %v1297 = vrot.slane %v1295, 5
      %v1298 = vor.u32 %v1294, %v1297
      %1299 = vrot.lane.b32.xlu0 %v1226, 16
      %v1300 = vpop.permute.xlu0 %1299
      %1301 = vrot.lane.b32.xlu0 %v1234, 16
      %v1302 = vpop.permute.xlu0 %1301
      %1303 = vrot.lane.b32.xlu0 %v1242, 16
      %v1304 = vpop.permute.xlu0 %1303
      %1305 = vrot.lane.b32.xlu0 %v1250, 16
      %v1306 = vpop.permute.xlu0 %1305
      %1307 = vrot.lane.b32.xlu0 %v1258, 16
      %v1308 = vpop.permute.xlu0 %1307
      %1309 = vrot.lane.b32.xlu0 %v1266, 16
      %v1310 = vpop.permute.xlu0 %1309
      %1311 = vrot.lane.b32.xlu0 %v1274, 16
      %v1312 = vpop.permute.xlu0 %1311
      %1313 = vrot.lane.b32.xlu0 %v1282, 16
      %v1314 = vpop.permute.xlu0 %1313
      %1315 = vrot.lane.b32.xlu0 %v1290, 16
      %v1316 = vpop.permute.xlu0 %1315
      %1317 = vrot.lane.b32.xlu0 %v1298, 16
      %v1318 = vpop.permute.xlu0 %1317
      %v1329 = vunpack.c.l.b16 %v748
      %v1330 = vunpack.c.l.b16 %v749
      %v1331 = vunpack.c.l.b16 %v750
      %v1332 = vunpack.c.l.b16 %v751
      %v1333 = vunpack.c.l.b16 %v752
      %v1334 = vunpack.c.l.b16 %v753
      %v1335 = vunpack.c.l.b16 %v754
      %v1336 = vunpack.c.l.b16 %v755
      %v1337 = vunpack.c.l.b16 %v756
      %v1338 = vunpack.c.l.b16 %v757
      %v1339 = vpack.c.b16 %v1329, %v1329
      %v1340 = vpack.c.b16 %v1330, %v1330
      %v1341 = vpack.c.b16 %v1331, %v1331
      %v1342 = vpack.c.b16 %v1332, %v1332
      %v1343 = vpack.c.b16 %v1333, %v1333
      %v1344 = vpack.c.b16 %v1334, %v1334
      %v1345 = vpack.c.b16 %v1335, %v1335
      %v1346 = vpack.c.b16 %v1336, %v1336
      %v1347 = vpack.c.b16 %v1337, %v1337
      %v1348 = vpack.c.b16 %v1338, %v1338
      %v1349 = vrot.slane %v1209, 5
      %v1350 = vrot.slane %v1339, 5
      %v1351 = vsel %vm1018, %v1349, %v1350
      %v1352 = vrot.slane %v1210, 5
      %v1353 = vrot.slane %v1340, 5
      %v1354 = vsel %vm1018, %v1352, %v1353
      %v1355 = vrot.slane %v1211, 5
      %v1356 = vrot.slane %v1341, 5
      %v1357 = vsel %vm1018, %v1355, %v1356
      %v1358 = vrot.slane %v1212, 5
      %v1359 = vrot.slane %v1342, 5
      %v1360 = vsel %vm1018, %v1358, %v1359
      %v1361 = vrot.slane %v1213, 5
      %v1362 = vrot.slane %v1343, 5
      %v1363 = vsel %vm1018, %v1361, %v1362
      %v1364 = vrot.slane %v1214, 5
      %v1365 = vrot.slane %v1344, 5
      %v1366 = vsel %vm1018, %v1364, %v1365
      %v1367 = vrot.slane %v1215, 5
      %v1368 = vrot.slane %v1345, 5
      %v1369 = vsel %vm1018, %v1367, %v1368
      %v1370 = vrot.slane %v1216, 5
      %v1371 = vrot.slane %v1346, 5
      %v1372 = vsel %vm1018, %v1370, %v1371
      %v1373 = vrot.slane %v1217, 5
      %v1374 = vrot.slane %v1347, 5
      %v1375 = vsel %vm1018, %v1373, %v1374
      %v1376 = vrot.slane %v1218, 5
      %v1377 = vrot.slane %v1348, 5
      %v1378 = vsel %vm1018, %v1376, %v1377
      %1379 = vrot.lane.b32.xlu0 %v1349, 20
      %v1380 = vpop.permute.xlu0 %1379
      %1381 = vrot.lane.b32.xlu0 %v1351, 20
      %v1382 = vpop.permute.xlu0 %1381
      %1383 = vrot.lane.b32.xlu0 %v1352, 20
      %v1384 = vpop.permute.xlu0 %1383
      %1385 = vrot.lane.b32.xlu0 %v1354, 20
      %v1386 = vpop.permute.xlu0 %1385
      %1387 = vrot.lane.b32.xlu0 %v1355, 20
      %v1388 = vpop.permute.xlu0 %1387
      %1389 = vrot.lane.b32.xlu0 %v1357, 20
      %v1390 = vpop.permute.xlu0 %1389
      %1391 = vrot.lane.b32.xlu0 %v1358, 20
      %v1392 = vpop.permute.xlu0 %1391
      %1393 = vrot.lane.b32.xlu0 %v1360, 20
      %v1394 = vpop.permute.xlu0 %1393
      %1395 = vrot.lane.b32.xlu0 %v1361, 20
      %v1396 = vpop.permute.xlu0 %1395
      %1397 = vrot.lane.b32.xlu0 %v1363, 20
      %v1398 = vpop.permute.xlu0 %1397
      %1399 = vrot.lane.b32.xlu0 %v1364, 20
      %v1400 = vpop.permute.xlu0 %1399
      %1401 = vrot.lane.b32.xlu0 %v1366, 20
      %v1402 = vpop.permute.xlu0 %1401
      %1403 = vrot.lane.b32.xlu0 %v1367, 20
      %v1404 = vpop.permute.xlu0 %1403
      %1405 = vrot.lane.b32.xlu0 %v1369, 20
      %v1406 = vpop.permute.xlu0 %1405
      %1407 = vrot.lane.b32.xlu0 %v1370, 20
      %v1408 = vpop.permute.xlu0 %1407
      %1409 = vrot.lane.b32.xlu0 %v1372, 20
      %v1410 = vpop.permute.xlu0 %1409
      %1411 = vrot.lane.b32.xlu0 %v1373, 20
      %v1412 = vpop.permute.xlu0 %1411
      %1413 = vrot.lane.b32.xlu0 %v1375, 20
      %v1414 = vpop.permute.xlu0 %1413
      %1415 = vrot.lane.b32.xlu0 %v1376, 20
      %v1416 = vpop.permute.xlu0 %1415
      %1417 = vrot.lane.b32.xlu0 %v1378, 20
      %v1418 = vpop.permute.xlu0 %1417
      %v1449 = vunpack.c.l.b16 %v758
      %v1450 = vunpack.c.l.b16 %v759
      %v1451 = vunpack.c.l.b16 %v760
      %v1452 = vunpack.c.l.b16 %v761
      %v1453 = vunpack.c.l.b16 %v762
      %v1454 = vunpack.c.l.b16 %v763
      %v1455 = vunpack.c.l.b16 %v764
      %v1456 = vunpack.c.l.b16 %v765
      %v1457 = vunpack.c.l.b16 %v766
      %v1458 = vunpack.c.l.b16 %v767
      %v1459 = vunpack.c.l.b16 %v768
      %v1460 = vunpack.c.l.b16 %v769
      %v1461 = vunpack.c.l.b16 %v770
      %v1462 = vunpack.c.l.b16 %v771
      %v1463 = vunpack.c.l.b16 %v772
      %v1464 = vunpack.c.l.b16 %v773
      %v1465 = vunpack.c.l.b16 %v774
      %v1466 = vunpack.c.l.b16 %v775
      %v1467 = vunpack.c.l.b16 %v776
      %v1468 = vunpack.c.l.b16 %v777
      %v1469 = vunpack.c.l.b16 %v778
      %v1470 = vunpack.c.l.b16 %v779
      %v1471 = vunpack.c.l.b16 %v780
      %v1472 = vunpack.c.l.b16 %v781
      %v1473 = vunpack.c.l.b16 %v782
      %v1474 = vunpack.c.l.b16 %v783
      %v1475 = vunpack.c.l.b16 %v784
      %v1476 = vunpack.c.l.b16 %v785
      %v1477 = vunpack.c.l.b16 %v786
      %v1478 = vunpack.c.l.b16 %v787
      %v1479 = vpack.c.b16 %v1450, %v1449
      %v1480 = vpack.c.b16 %v1451, %v1451
      %v1481 = vpack.c.b16 %v1453, %v1452
      %v1482 = vpack.c.b16 %v1454, %v1454
      %v1483 = vpack.c.b16 %v1456, %v1455
      %v1484 = vpack.c.b16 %v1457, %v1457
      %v1485 = vpack.c.b16 %v1459, %v1458
      %v1486 = vpack.c.b16 %v1460, %v1460
      %v1487 = vpack.c.b16 %v1462, %v1461
      %v1488 = vpack.c.b16 %v1463, %v1463
      %v1489 = vpack.c.b16 %v1465, %v1464
      %v1490 = vpack.c.b16 %v1466, %v1466
      %v1491 = vpack.c.b16 %v1468, %v1467
      %v1492 = vpack.c.b16 %v1469, %v1469
      %v1493 = vpack.c.b16 %v1471, %v1470
      %v1494 = vpack.c.b16 %v1472, %v1472
      %v1495 = vpack.c.b16 %v1474, %v1473
      %v1496 = vpack.c.b16 %v1475, %v1475
      %v1497 = vpack.c.b16 %v1477, %v1476
      %v1498 = vpack.c.b16 %v1478, %v1478
      %1499 = vrot.lane.b32.xlu0 %v1479, 24
      %v1500 = vpop.permute.xlu0 %1499
      %1501 = vrot.lane.b32.xlu0 %v1480, 24
      %v1502 = vpop.permute.xlu0 %1501
      %1503 = vrot.lane.b32.xlu0 %v1481, 24
      %v1504 = vpop.permute.xlu0 %1503
      %1505 = vrot.lane.b32.xlu0 %v1482, 24
      %v1506 = vpop.permute.xlu0 %1505
      %1507 = vrot.lane.b32.xlu0 %v1483, 24
      %v1508 = vpop.permute.xlu0 %1507
      %1509 = vrot.lane.b32.xlu0 %v1484, 24
      %v1510 = vpop.permute.xlu0 %1509
      %1511 = vrot.lane.b32.xlu0 %v1485, 24
      %v1512 = vpop.permute.xlu0 %1511
      %1513 = vrot.lane.b32.xlu0 %v1486, 24
      %v1514 = vpop.permute.xlu0 %1513
      %1515 = vrot.lane.b32.xlu0 %v1487, 24
      %v1516 = vpop.permute.xlu0 %1515
      %1517 = vrot.lane.b32.xlu0 %v1488, 24
      %v1518 = vpop.permute.xlu0 %1517
      %1519 = vrot.lane.b32.xlu0 %v1489, 24
      %v1520 = vpop.permute.xlu0 %1519
      %1521 = vrot.lane.b32.xlu0 %v1490, 24
      %v1522 = vpop.permute.xlu0 %1521
      %1523 = vrot.lane.b32.xlu0 %v1491, 24
      %v1524 = vpop.permute.xlu0 %1523
      %1525 = vrot.lane.b32.xlu0 %v1492, 24
      %v1526 = vpop.permute.xlu0 %1525
      %1527 = vrot.lane.b32.xlu0 %v1493, 24
      %v1528 = vpop.permute.xlu0 %1527
      %1529 = vrot.lane.b32.xlu0 %v1494, 24
      %v1530 = vpop.permute.xlu0 %1529
      %1531 = vrot.lane.b32.xlu0 %v1495, 24
      %v1532 = vpop.permute.xlu0 %1531
      %1533 = vrot.lane.b32.xlu0 %v1496, 24
      %v1534 = vpop.permute.xlu0 %1533
      %1535 = vrot.lane.b32.xlu0 %v1497, 24
      %v1536 = vpop.permute.xlu0 %1535
      %1537 = vrot.lane.b32.xlu0 %v1498, 24
      %v1538 = vpop.permute.xlu0 %1537
      %v1539 = vpack.c.b16 %v1451, %v1450
      %v1540 = vpack.c.b16 %v1454, %v1453
      %v1541 = vpack.c.b16 %v1457, %v1456
      %v1542 = vpack.c.b16 %v1460, %v1459
      %v1543 = vpack.c.b16 %v1463, %v1462
      %v1544 = vpack.c.b16 %v1466, %v1465
      %v1545 = vpack.c.b16 %v1469, %v1468
      %v1546 = vpack.c.b16 %v1472, %v1471
      %v1547 = vpack.c.b16 %v1475, %v1474
      %v1548 = vpack.c.b16 %v1478, %v1477
      %v1550 = vshrl.u32 %v1539, 16
      %v1552 = vrot.slane %v1550, 4
      %v1553 = vshll.u32 %v1539, 16
      %v1555 = vrot.slane %v1553, 5
      %v1556 = vor.u32 %v1552, %v1555
      %v1558 = vshrl.u32 %v1540, 16
      %v1560 = vrot.slane %v1558, 4
      %v1561 = vshll.u32 %v1540, 16
      %v1563 = vrot.slane %v1561, 5
      %v1564 = vor.u32 %v1560, %v1563
      %v1566 = vshrl.u32 %v1541, 16
      %v1568 = vrot.slane %v1566, 4
      %v1569 = vshll.u32 %v1541, 16
      %v1571 = vrot.slane %v1569, 5
      %v1572 = vor.u32 %v1568, %v1571
      %v1574 = vshrl.u32 %v1542, 16
      %v1576 = vrot.slane %v1574, 4
      %v1577 = vshll.u32 %v1542, 16
      %v1579 = vrot.slane %v1577, 5
      %v1580 = vor.u32 %v1576, %v1579
      %v1582 = vshrl.u32 %v1543, 16
      %v1584 = vrot.slane %v1582, 4
      %v1585 = vshll.u32 %v1543, 16
      %v1587 = vrot.slane %v1585, 5
      %v1588 = vor.u32 %v1584, %v1587
      %v1590 = vshrl.u32 %v1544, 16
      %v1592 = vrot.slane %v1590, 4
      %v1593 = vshll.u32 %v1544, 16
      %v1595 = vrot.slane %v1593, 5
      %v1596 = vor.u32 %v1592, %v1595
      %v1598 = vshrl.u32 %v1545, 16
      %v1600 = vrot.slane %v1598, 4
      %v1601 = vshll.u32 %v1545, 16
      %v1603 = vrot.slane %v1601, 5
      %v1604 = vor.u32 %v1600, %v1603
      %v1606 = vshrl.u32 %v1546, 16
      %v1608 = vrot.slane %v1606, 4
      %v1609 = vshll.u32 %v1546, 16
      %v1611 = vrot.slane %v1609, 5
      %v1612 = vor.u32 %v1608, %v1611
      %v1614 = vshrl.u32 %v1547, 16
      %v1616 = vrot.slane %v1614, 4
      %v1617 = vshll.u32 %v1547, 16
      %v1619 = vrot.slane %v1617, 5
      %v1620 = vor.u32 %v1616, %v1619
      %v1622 = vshrl.u32 %v1548, 16
      %v1624 = vrot.slane %v1622, 4
      %v1625 = vshll.u32 %v1548, 16
      %v1627 = vrot.slane %v1625, 5
      %v1628 = vor.u32 %v1624, %v1627
      %1629 = vrot.lane.b32.xlu0 %v1556, 28
      %v1630 = vpop.permute.xlu0 %1629
      %1631 = vrot.lane.b32.xlu0 %v1564, 28
      %v1632 = vpop.permute.xlu0 %1631
      %1633 = vrot.lane.b32.xlu0 %v1572, 28
      %v1634 = vpop.permute.xlu0 %1633
      %1635 = vrot.lane.b32.xlu0 %v1580, 28
      %v1636 = vpop.permute.xlu0 %1635
      %1637 = vrot.lane.b32.xlu0 %v1588, 28
      %v1638 = vpop.permute.xlu0 %1637
      %1639 = vrot.lane.b32.xlu0 %v1596, 28
      %v1640 = vpop.permute.xlu0 %1639
      %1641 = vrot.lane.b32.xlu0 %v1604, 28
      %v1642 = vpop.permute.xlu0 %1641
      %1643 = vrot.lane.b32.xlu0 %v1612, 28
      %v1644 = vpop.permute.xlu0 %1643
      %1645 = vrot.lane.b32.xlu0 %v1620, 28
      %v1646 = vpop.permute.xlu0 %1645
      %1647 = vrot.lane.b32.xlu0 %v1628, 28
      %v1648 = vpop.permute.xlu0 %1647
      %v1659 = vunpack.c.l.b16 %v788
      %v1660 = vunpack.c.l.b16 %v789
      %v1661 = vunpack.c.l.b16 %v790
      %v1662 = vunpack.c.l.b16 %v791
      %v1663 = vunpack.c.l.b16 %v792
      %v1664 = vunpack.c.l.b16 %v793
      %v1665 = vunpack.c.l.b16 %v794
      %v1666 = vunpack.c.l.b16 %v795
      %v1667 = vunpack.c.l.b16 %v796
      %v1668 = vunpack.c.l.b16 %v797
      %v1669 = vpack.c.b16 %v1659, %v1659
      %v1670 = vpack.c.b16 %v1660, %v1660
      %v1671 = vpack.c.b16 %v1661, %v1661
      %v1672 = vpack.c.b16 %v1662, %v1662
      %v1673 = vpack.c.b16 %v1663, %v1663
      %v1674 = vpack.c.b16 %v1664, %v1664
      %v1675 = vpack.c.b16 %v1665, %v1665
      %v1676 = vpack.c.b16 %v1666, %v1666
      %v1677 = vpack.c.b16 %v1667, %v1667
      %v1678 = vpack.c.b16 %v1668, %v1668
      %v1679 = vrot.slane %v1539, 5
      %v1680 = vrot.slane %v1669, 5
      %v1681 = vsel %vm1018, %v1679, %v1680
      %v1682 = vrot.slane %v1540, 5
      %v1683 = vrot.slane %v1670, 5
      %v1684 = vsel %vm1018, %v1682, %v1683
      %v1685 = vrot.slane %v1541, 5
      %v1686 = vrot.slane %v1671, 5
      %v1687 = vsel %vm1018, %v1685, %v1686
      %v1688 = vrot.slane %v1542, 5
      %v1689 = vrot.slane %v1672, 5
      %v1690 = vsel %vm1018, %v1688, %v1689
      %v1691 = vrot.slane %v1543, 5
      %v1692 = vrot.slane %v1673, 5
      %v1693 = vsel %vm1018, %v1691, %v1692
      %v1694 = vrot.slane %v1544, 5
      %v1695 = vrot.slane %v1674, 5
      %v1696 = vsel %vm1018, %v1694, %v1695
      %v1697 = vrot.slane %v1545, 5
      %v1698 = vrot.slane %v1675, 5
      %v1699 = vsel %vm1018, %v1697, %v1698
      %v1700 = vrot.slane %v1546, 5
      %v1701 = vrot.slane %v1676, 5
      %v1702 = vsel %vm1018, %v1700, %v1701
      %v1703 = vrot.slane %v1547, 5
      %v1704 = vrot.slane %v1677, 5
      %v1705 = vsel %vm1018, %v1703, %v1704
      %v1706 = vrot.slane %v1548, 5
      %v1707 = vrot.slane %v1678, 5
      %v1708 = vsel %vm1018, %v1706, %v1707
      %1709 = vrot.lane.b32.xlu0 %v1679, 32
      %v1710 = vpop.permute.xlu0 %1709
      %1711 = vrot.lane.b32.xlu0 %v1681, 32
      %v1712 = vpop.permute.xlu0 %1711
      %1713 = vrot.lane.b32.xlu0 %v1682, 32
      %v1714 = vpop.permute.xlu0 %1713
      %1715 = vrot.lane.b32.xlu0 %v1684, 32
      %v1716 = vpop.permute.xlu0 %1715
      %1717 = vrot.lane.b32.xlu0 %v1685, 32
      %v1718 = vpop.permute.xlu0 %1717
      %1719 = vrot.lane.b32.xlu0 %v1687, 32
      %v1720 = vpop.permute.xlu0 %1719
      %1721 = vrot.lane.b32.xlu0 %v1688, 32
      %v1722 = vpop.permute.xlu0 %1721
      %1723 = vrot.lane.b32.xlu0 %v1690, 32
      %v1724 = vpop.permute.xlu0 %1723
      %1725 = vrot.lane.b32.xlu0 %v1691, 32
      %v1726 = vpop.permute.xlu0 %1725
      %1727 = vrot.lane.b32.xlu0 %v1693, 32
      %v1728 = vpop.permute.xlu0 %1727
      %1729 = vrot.lane.b32.xlu0 %v1694, 32
      %v1730 = vpop.permute.xlu0 %1729
      %1731 = vrot.lane.b32.xlu0 %v1696, 32
      %v1732 = vpop.permute.xlu0 %1731
      %1733 = vrot.lane.b32.xlu0 %v1697, 32
      %v1734 = vpop.permute.xlu0 %1733
      %1735 = vrot.lane.b32.xlu0 %v1699, 32
      %v1736 = vpop.permute.xlu0 %1735
      %1737 = vrot.lane.b32.xlu0 %v1700, 32
      %v1738 = vpop.permute.xlu0 %1737
      %1739 = vrot.lane.b32.xlu0 %v1702, 32
      %v1740 = vpop.permute.xlu0 %1739
      %1741 = vrot.lane.b32.xlu0 %v1703, 32
      %v1742 = vpop.permute.xlu0 %1741
      %1743 = vrot.lane.b32.xlu0 %v1705, 32
      %v1744 = vpop.permute.xlu0 %1743
      %1745 = vrot.lane.b32.xlu0 %v1706, 32
      %v1746 = vpop.permute.xlu0 %1745
      %1747 = vrot.lane.b32.xlu0 %v1708, 32
      %v1748 = vpop.permute.xlu0 %1747
      %vm1749 = vcmask 31744
      %v1752 = vsel %vm1749, %v858, %v969
      %v1754 = vsel %vm1749, %v859, %v969
      %v1757 = vsel %vm1749, %v860, %v971
      %v1759 = vsel %vm1749, %v861, %v971
      %v1762 = vsel %vm1749, %v862, %v973
      %v1764 = vsel %vm1749, %v863, %v973
      %v1767 = vsel %vm1749, %v864, %v975
      %v1769 = vsel %vm1749, %v865, %v975
      %v1772 = vsel %vm1749, %v866, %v977
      %v1774 = vsel %vm1749, %v867, %v977
      %v1777 = vsel %vm1749, %v868, %v979
      %v1779 = vsel %vm1749, %v869, %v979
      %v1782 = vsel %vm1749, %v870, %v981
      %v1784 = vsel %vm1749, %v871, %v981
      %v1787 = vsel %vm1749, %v872, %v983
      %v1789 = vsel %vm1749, %v873, %v983
      %v1792 = vsel %vm1749, %v874, %v985
      %v1794 = vsel %vm1749, %v875, %v985
      %v1797 = vsel %vm1749, %v876, %v987
      %v1799 = vsel %vm1749, %v877, %v987
      %vm1800 = vcmask 64512
      %v1802 = vsel %vm1800, %v1752, %v1050
      %v1804 = vsel %vm1800, %v1754, %v1052
      %v1806 = vsel %vm1800, %v1757, %v1054
      %v1808 = vsel %vm1800, %v1759, %v1056
      %v1810 = vsel %vm1800, %v1762, %v1058
      %v1812 = vsel %vm1800, %v1764, %v1060
      %v1814 = vsel %vm1800, %v1767, %v1062
      %v1816 = vsel %vm1800, %v1769, %v1064
      %v1818 = vsel %vm1800, %v1772, %v1066
      %v1820 = vsel %vm1800, %v1774, %v1068
      %v1822 = vsel %vm1800, %v1777, %v1070
      %v1824 = vsel %vm1800, %v1779, %v1072
      %v1826 = vsel %vm1800, %v1782, %v1074
      %v1828 = vsel %vm1800, %v1784, %v1076
      %v1830 = vsel %vm1800, %v1787, %v1078
      %v1832 = vsel %vm1800, %v1789, %v1080
      %v1834 = vsel %vm1800, %v1792, %v1082
      %v1836 = vsel %vm1800, %v1794, %v1084
      %v1838 = vsel %vm1800, %v1797, %v1086
      %v1840 = vsel %vm1800, %v1799, %v1088
      %vm1841 = vcmask 97280
      %v1843 = vsel %vm1841, %v1802, %v1170
      %v1845 = vsel %vm1841, %v1804, %v1172
      %v1847 = vsel %vm1841, %v1806, %v1174
      %v1849 = vsel %vm1841, %v1808, %v1176
      %v1851 = vsel %vm1841, %v1810, %v1178
      %v1853 = vsel %vm1841, %v1812, %v1180
      %v1855 = vsel %vm1841, %v1814, %v1182
      %v1857 = vsel %vm1841, %v1816, %v1184
      %v1859 = vsel %vm1841, %v1818, %v1186
      %v1861 = vsel %vm1841, %v1820, %v1188
      %v1863 = vsel %vm1841, %v1822, %v1190
      %v1865 = vsel %vm1841, %v1824, %v1192
      %v1867 = vsel %vm1841, %v1826, %v1194
      %v1869 = vsel %vm1841, %v1828, %v1196
      %v1871 = vsel %vm1841, %v1830, %v1198
      %v1873 = vsel %vm1841, %v1832, %v1200
      %v1875 = vsel %vm1841, %v1834, %v1202
      %v1877 = vsel %vm1841, %v1836, %v1204
      %v1879 = vsel %vm1841, %v1838, %v1206
      %v1881 = vsel %vm1841, %v1840, %v1208
      %vm1882 = vcmask 130048
      %v1884 = vsel %vm1882, %v1843, %v1300
      %v1885 = vsel %vm1882, %v1845, %v1300
      %v1887 = vsel %vm1882, %v1847, %v1302
      %v1888 = vsel %vm1882, %v1849, %v1302
      %v1890 = vsel %vm1882, %v1851, %v1304
      %v1891 = vsel %vm1882, %v1853, %v1304
      %v1893 = vsel %vm1882, %v1855, %v1306
      %v1894 = vsel %vm1882, %v1857, %v1306
      %v1896 = vsel %vm1882, %v1859, %v1308
      %v1897 = vsel %vm1882, %v1861, %v1308
      %v1899 = vsel %vm1882, %v1863, %v1310
      %v1900 = vsel %vm1882, %v1865, %v1310
      %v1902 = vsel %vm1882, %v1867, %v1312
      %v1903 = vsel %vm1882, %v1869, %v1312
      %v1905 = vsel %vm1882, %v1871, %v1314
      %v1906 = vsel %vm1882, %v1873, %v1314
      %v1908 = vsel %vm1882, %v1875, %v1316
      %v1909 = vsel %vm1882, %v1877, %v1316
      %v1911 = vsel %vm1882, %v1879, %v1318
      %v1912 = vsel %vm1882, %v1881, %v1318
      %vm1913 = vcmask 162816
      %v1915 = vsel %vm1913, %v1884, %v1380
      %v1917 = vsel %vm1913, %v1885, %v1382
      %v1919 = vsel %vm1913, %v1887, %v1384
      %v1921 = vsel %vm1913, %v1888, %v1386
      %v1923 = vsel %vm1913, %v1890, %v1388
      %v1925 = vsel %vm1913, %v1891, %v1390
      %v1927 = vsel %vm1913, %v1893, %v1392
      %v1929 = vsel %vm1913, %v1894, %v1394
      %v1931 = vsel %vm1913, %v1896, %v1396
      %v1933 = vsel %vm1913, %v1897, %v1398
      %v1935 = vsel %vm1913, %v1899, %v1400
      %v1937 = vsel %vm1913, %v1900, %v1402
      %v1939 = vsel %vm1913, %v1902, %v1404
      %v1941 = vsel %vm1913, %v1903, %v1406
      %v1943 = vsel %vm1913, %v1905, %v1408
      %v1945 = vsel %vm1913, %v1906, %v1410
      %v1947 = vsel %vm1913, %v1908, %v1412
      %v1949 = vsel %vm1913, %v1909, %v1414
      %v1951 = vsel %vm1913, %v1911, %v1416
      %v1953 = vsel %vm1913, %v1912, %v1418
      %vm1954 = vcmask 195584
      %v1956 = vsel %vm1954, %v1915, %v1500
      %v1958 = vsel %vm1954, %v1917, %v1502
      %v1960 = vsel %vm1954, %v1919, %v1504
      %v1962 = vsel %vm1954, %v1921, %v1506
      %v1964 = vsel %vm1954, %v1923, %v1508
      %v1966 = vsel %vm1954, %v1925, %v1510
      %v1968 = vsel %vm1954, %v1927, %v1512
      %v1970 = vsel %vm1954, %v1929, %v1514
      %v1972 = vsel %vm1954, %v1931, %v1516
      %v1974 = vsel %vm1954, %v1933, %v1518
      %v1976 = vsel %vm1954, %v1935, %v1520
      %v1978 = vsel %vm1954, %v1937, %v1522
      %v1980 = vsel %vm1954, %v1939, %v1524
      %v1982 = vsel %vm1954, %v1941, %v1526
      %v1984 = vsel %vm1954, %v1943, %v1528
      %v1986 = vsel %vm1954, %v1945, %v1530
      %v1988 = vsel %vm1954, %v1947, %v1532
      %v1990 = vsel %vm1954, %v1949, %v1534
      %v1992 = vsel %vm1954, %v1951, %v1536
      %v1994 = vsel %vm1954, %v1953, %v1538
      %vm1995 = vcmask 228352
      %v1997 = vsel %vm1995, %v1956, %v1630
      %v1998 = vsel %vm1995, %v1958, %v1630
      %v2000 = vsel %vm1995, %v1960, %v1632
      %v2001 = vsel %vm1995, %v1962, %v1632
      %v2003 = vsel %vm1995, %v1964, %v1634
      %v2004 = vsel %vm1995, %v1966, %v1634
      %v2006 = vsel %vm1995, %v1968, %v1636
      %v2007 = vsel %vm1995, %v1970, %v1636
      %v2009 = vsel %vm1995, %v1972, %v1638
      %v2010 = vsel %vm1995, %v1974, %v1638
      %v2012 = vsel %vm1995, %v1976, %v1640
      %v2013 = vsel %vm1995, %v1978, %v1640
      %v2015 = vsel %vm1995, %v1980, %v1642
      %v2016 = vsel %vm1995, %v1982, %v1642
      %v2018 = vsel %vm1995, %v1984, %v1644
      %v2019 = vsel %vm1995, %v1986, %v1644
      %v2021 = vsel %vm1995, %v1988, %v1646
      %v2022 = vsel %vm1995, %v1990, %v1646
      %v2024 = vsel %vm1995, %v1992, %v1648
      %v2025 = vsel %vm1995, %v1994, %v1648
      %vm2026 = vcmask 261120
      %v2028 = vsel %vm2026, %v1997, %v1710
      %v2030 = vsel %vm2026, %v1998, %v1712
      %v2032 = vsel %vm2026, %v2000, %v1714
      %v2034 = vsel %vm2026, %v2001, %v1716
      %v2036 = vsel %vm2026, %v2003, %v1718
      %v2038 = vsel %vm2026, %v2004, %v1720
      %v2040 = vsel %vm2026, %v2006, %v1722
      %v2042 = vsel %vm2026, %v2007, %v1724
      %v2044 = vsel %vm2026, %v2009, %v1726
      %v2046 = vsel %vm2026, %v2010, %v1728
      %v2048 = vsel %vm2026, %v2012, %v1730
      %v2050 = vsel %vm2026, %v2013, %v1732
      %v2052 = vsel %vm2026, %v2015, %v1734
      %v2054 = vsel %vm2026, %v2016, %v1736
      %v2056 = vsel %vm2026, %v2018, %v1738
      %v2058 = vsel %vm2026, %v2019, %v1740
      %v2060 = vsel %vm2026, %v2021, %v1742
      %v2062 = vsel %vm2026, %v2022, %v1744
      %v2064 = vsel %vm2026, %v2024, %v1746
      %v2066 = vsel %vm2026, %v2025, %v1748
      %vm2067 = vsmask.f32 4352
      %v2068 = vshrl.u32 %v2028, 16
      %v2070 = vrot.slane %v2068, 3
      %v2071 = vshll.u32 %v2028, 16
      %v2073 = vrot.slane %v2071, 4
      %v2074 = vor.u32 %v2070, %v2073
      %v2075 = vshrl.u32 %v2030, 16
      %v2077 = vrot.slane %v2075, 3
      %v2078 = vshll.u32 %v2030, 16
      %v2080 = vrot.slane %v2078, 4
      %v2081 = vor.u32 %v2077, %v2080
      %v2082 = vsel %vm2067, %v2074, %v2081
      %v2083 = vshrl.u32 %v2032, 16
      %v2085 = vrot.slane %v2083, 3
      %v2086 = vshll.u32 %v2032, 16
      %v2088 = vrot.slane %v2086, 4
      %v2089 = vor.u32 %v2085, %v2088
      %v2090 = vshrl.u32 %v2034, 16
      %v2092 = vrot.slane %v2090, 3
      %v2093 = vshll.u32 %v2034, 16
      %v2095 = vrot.slane %v2093, 4
      %v2096 = vor.u32 %v2092, %v2095
      %v2097 = vsel %vm2067, %v2089, %v2096
      %v2098 = vshrl.u32 %v2036, 16
      %v2100 = vrot.slane %v2098, 3
      %v2101 = vshll.u32 %v2036, 16
      %v2103 = vrot.slane %v2101, 4
      %v2104 = vor.u32 %v2100, %v2103
      %v2105 = vshrl.u32 %v2038, 16
      %v2107 = vrot.slane %v2105, 3
      %v2108 = vshll.u32 %v2038, 16
      %v2110 = vrot.slane %v2108, 4
      %v2111 = vor.u32 %v2107, %v2110
      %v2112 = vsel %vm2067, %v2104, %v2111
      %v2113 = vshrl.u32 %v2040, 16
      %v2115 = vrot.slane %v2113, 3
      %v2116 = vshll.u32 %v2040, 16
      %v2118 = vrot.slane %v2116, 4
      %v2119 = vor.u32 %v2115, %v2118
      %v2120 = vshrl.u32 %v2042, 16
      %v2122 = vrot.slane %v2120, 3
      %v2123 = vshll.u32 %v2042, 16
      %v2125 = vrot.slane %v2123, 4
      %v2126 = vor.u32 %v2122, %v2125
      %v2127 = vsel %vm2067, %v2119, %v2126
      %v2128 = vshrl.u32 %v2044, 16
      %v2130 = vrot.slane %v2128, 3
      %v2131 = vshll.u32 %v2044, 16
      %v2133 = vrot.slane %v2131, 4
      %v2134 = vor.u32 %v2130, %v2133
      %v2135 = vshrl.u32 %v2046, 16
      %v2137 = vrot.slane %v2135, 3
      %v2138 = vshll.u32 %v2046, 16
      %v2140 = vrot.slane %v2138, 4
      %v2141 = vor.u32 %v2137, %v2140
      %v2142 = vsel %vm2067, %v2134, %v2141
      %v2143 = vshrl.u32 %v2048, 16
      %v2145 = vrot.slane %v2143, 3
      %v2146 = vshll.u32 %v2048, 16
      %v2148 = vrot.slane %v2146, 4
      %v2149 = vor.u32 %v2145, %v2148
      %v2150 = vshrl.u32 %v2050, 16
      %v2152 = vrot.slane %v2150, 3
      %v2153 = vshll.u32 %v2050, 16
      %v2155 = vrot.slane %v2153, 4
      %v2156 = vor.u32 %v2152, %v2155
      %v2157 = vsel %vm2067, %v2149, %v2156
      %v2158 = vshrl.u32 %v2052, 16
      %v2160 = vrot.slane %v2158, 3
      %v2161 = vshll.u32 %v2052, 16
      %v2163 = vrot.slane %v2161, 4
      %v2164 = vor.u32 %v2160, %v2163
      %v2165 = vshrl.u32 %v2054, 16
      %v2167 = vrot.slane %v2165, 3
      %v2168 = vshll.u32 %v2054, 16
      %v2170 = vrot.slane %v2168, 4
      %v2171 = vor.u32 %v2167, %v2170
      %v2172 = vsel %vm2067, %v2164, %v2171
      %v2173 = vshrl.u32 %v2056, 16
      %v2175 = vrot.slane %v2173, 3
      %v2176 = vshll.u32 %v2056, 16
      %v2178 = vrot.slane %v2176, 4
      %v2179 = vor.u32 %v2175, %v2178
      %v2180 = vshrl.u32 %v2058, 16
      %v2182 = vrot.slane %v2180, 3
      %v2183 = vshll.u32 %v2058, 16
      %v2185 = vrot.slane %v2183, 4
      %v2186 = vor.u32 %v2182, %v2185
      %v2187 = vsel %vm2067, %v2179, %v2186
      %v2188 = vshrl.u32 %v2060, 16
      %v2190 = vrot.slane %v2188, 3
      %v2191 = vshll.u32 %v2060, 16
      %v2193 = vrot.slane %v2191, 4
      %v2194 = vor.u32 %v2190, %v2193
      %v2195 = vshrl.u32 %v2062, 16
      %v2197 = vrot.slane %v2195, 3
      %v2198 = vshll.u32 %v2062, 16
      %v2200 = vrot.slane %v2198, 4
      %v2201 = vor.u32 %v2197, %v2200
      %v2202 = vsel %vm2067, %v2194, %v2201
      %v2203 = vshrl.u32 %v2064, 16
      %v2205 = vrot.slane %v2203, 3
      %v2206 = vshll.u32 %v2064, 16
      %v2208 = vrot.slane %v2206, 4
      %v2209 = vor.u32 %v2205, %v2208
      %v2210 = vshrl.u32 %v2066, 16
      %v2212 = vrot.slane %v2210, 3
      %v2213 = vshll.u32 %v2066, 16
      %v2215 = vrot.slane %v2213, 4
      %v2216 = vor.u32 %v2212, %v2215
      %v2217 = vsel %vm2067, %v2209, %v2216
      %v2218 = vld [vmem:[%s3] sm:$0xf]
      %v2219 = vld [vmem:[%s3 + $0x4] sm:$0xf]
      %v2220 = vld [vmem:[%s3 + $0x8] sm:$0xf]
      %v2221 = vld [vmem:[%s3 + $0xc] sm:$0xf]
      %v2222 = vld [vmem:[%s3 + $0x10] sm:$0x3]
      %v2223 = vld [vmem:[%s4] sm:$0x1]
      %v2225 = vlaneseq
      %v2226 = vshrl.u32 %v2225, 7
      %v2227 = vsub.s32 0, %v2226
      %v2228 = vrot.slane %v2223, %v2227
      %v2235 = vunpack.c.l.b16 %v2218
      %v2236 = vunpack.c.l.b16 %v2219
      %v2237 = vunpack.c.l.b16 %v2220
      %v2238 = vunpack.c.l.b16 %v2221
      %v2239 = vunpack.c.l.b16 %v2222
      %v2240 = vpack.c.b16 %v2236, %v2235
      %v2241 = vpack.c.b16 %v2238, %v2237
      %v2242 = vpack.c.b16 %v2239, %v2239
      %vm2245 = vcmask 293888
      %v2247 = vsel %vm2245, %v2082, 0
      %v2250 = vsel %vm2245, %v2097, 0
      %v2253 = vsel %vm2245, %v2112, 0
      %v2256 = vsel %vm2245, %v2127, 0
      %v2259 = vsel %vm2245, %v2142, 0
      %v2262 = vsel %vm2245, %v2157, 0
      %v2265 = vsel %vm2245, %v2172, 0
      %v2268 = vsel %vm2245, %v2187, 0
      %v2271 = vsel %vm2245, %v2202, 0
      %v2274 = vsel %vm2245, %v2217, 0
      %vm2276 = vcmask 1041408
      %v2278 = vsel %vm2276, %v2242, 0
      %2280 = vmatprep.subr.bf16.mxu0 0
      %2281 = vmatpush1.bf16.msra.mxu0 %v2240
      %2282 = vmatprep.subr.bf16.mxu0 0
      %2283 = vmatpush1.bf16.msra.mxu0 %v2241
      %2284 = vmatprep.subr.bf16.mxu0 0
      %2285 = vmatpush1.bf16.msra.mxu0 %v2278
      %2286 = vmatprep.subr.bf16.mxu0 0
      %2287 = vmatpush1.bf16.msra.mxu0 0
      %2288 = vmatprep.subr.bf16.mxu0 0
      %2289 = vmatpush1.bf16.msra.mxu0 0
      %2290 = vmatprep.subr.bf16.mxu0 0
      %2291 = vmatpush1.bf16.msra.mxu0 0
      %2292 = vmatprep.subr.bf16.mxu0 0
      %2293 = vmatpush1.bf16.msra.mxu0 0
      %2294 = vmatprep.subr.bf16.mxu0 0
      %2295 = vmatpush1.bf16.msra.mxu0 0
      %2296 = vmatprep.subr.bf16.mxu0 0
      %2297 = vmatpush1.bf16.msra.mxu0 0
      %2298 = vmatprep.subr.bf16.mxu0 0
      %2299 = vmatpush1.bf16.msra.mxu0 0
      %2300 = vmatprep.subr.bf16.mxu0 0
      %2301 = vmatpush1.bf16.msra.mxu0 0
      %2302 = vmatprep.subr.bf16.mxu0 0
      %2303 = vmatpush1.bf16.msra.mxu0 0
      %2304 = vmatprep.subr.bf16.mxu0 0
      %2305 = vmatpush1.bf16.msra.mxu0 0
      %2306 = vmatprep.subr.bf16.mxu0 0
      %2307 = vmatpush1.bf16.msra.mxu0 0
      %2308 = vmatprep.subr.bf16.mxu0 0
      %2309 = vmatpush1.bf16.msra.mxu0 0
      %2310 = vmatprep.subr.bf16.mxu0 0
      %2311 = vmatpush1.bf16.msra.mxu0 0
      %2312 = vmatprep.mubr.bf16.mxu0 0
      %2313 = vmatmul.mubr.bf16.gmra.mrb[0].mxu0 %v2247
      %v2314 = vpop.f32.mrb[0].mxu0
      %v2315 = vadd.f32 %v2228, %v2314
      %v2316 = vpop.f32.mrb[0].mxu0
      %v2317 = vpop.f32.mrb[0].mxu0
      %v2318 = vadd.f32 %v2228, %v2317
      %v2319 = vpop.f32.mrb[0].mxu0
      %2320 = vmatprep.mubr.bf16.mxu0 0
      %2321 = vmatmul.mubr.bf16.gmra.mrb[0].mxu0 %v2250
      %v2322 = vpop.f32.mrb[0].mxu0
      %v2323 = vadd.f32 %v2228, %v2322
      %v2324 = vpop.f32.mrb[0].mxu0
      %v2325 = vpop.f32.mrb[0].mxu0
      %v2326 = vadd.f32 %v2228, %v2325
      %v2327 = vpop.f32.mrb[0].mxu0
      %2328 = vmatprep.mubr.bf16.mxu0 0
      %2329 = vmatmul.mubr.bf16.gmra.mrb[0].mxu0 %v2253
      %v2330 = vpop.f32.mrb[0].mxu0
      %v2331 = vadd.f32 %v2228, %v2330
      %v2332 = vpop.f32.mrb[0].mxu0
      %v2333 = vpop.f32.mrb[0].mxu0
      %v2334 = vadd.f32 %v2228, %v2333
      %v2335 = vpop.f32.mrb[0].mxu0
      %2336 = vmatprep.mubr.bf16.mxu0 0
      %2337 = vmatmul.mubr.bf16.gmra.mrb[0].mxu0 %v2256
      %v2338 = vpop.f32.mrb[0].mxu0
      %v2339 = vadd.f32 %v2228, %v2338
      %v2340 = vpop.f32.mrb[0].mxu0
      %v2341 = vpop.f32.mrb[0].mxu0
      %v2342 = vadd.f32 %v2228, %v2341
      %v2343 = vpop.f32.mrb[0].mxu0
      %2344 = vmatprep.mubr.bf16.mxu0 0
      %2345 = vmatmul.mubr.bf16.gmra.mrb[0].mxu0 %v2259
      %v2346 = vpop.f32.mrb[0].mxu0
      %v2347 = vadd.f32 %v2228, %v2346
      %v2348 = vpop.f32.mrb[0].mxu0
      %v2349 = vpop.f32.mrb[0].mxu0
      %v2350 = vadd.f32 %v2228, %v2349
      %v2351 = vpop.f32.mrb[0].mxu0
      %2352 = vmatprep.mubr.bf16.mxu0 0
      %2353 = vmatmul.mubr.bf16.gmra.mrb[0].mxu0 %v2262
      %v2354 = vpop.f32.mrb[0].mxu0
      %v2355 = vadd.f32 %v2228, %v2354
      %v2356 = vpop.f32.mrb[0].mxu0
      %v2357 = vpop.f32.mrb[0].mxu0
      %v2358 = vadd.f32 %v2228, %v2357
      %v2359 = vpop.f32.mrb[0].mxu0
      %2360 = vmatprep.mubr.bf16.mxu0 0
      %2361 = vmatmul.mubr.bf16.gmra.mrb[0].mxu0 %v2265
      %v2362 = vpop.f32.mrb[0].mxu0
      %v2363 = vadd.f32 %v2228, %v2362
      %v2364 = vpop.f32.mrb[0].mxu0
      %v2365 = vpop.f32.mrb[0].mxu0
      %v2366 = vadd.f32 %v2228, %v2365
      %v2367 = vpop.f32.mrb[0].mxu0
      %2368 = vmatprep.mubr.bf16.mxu0 0
      %2369 = vmatmul.mubr.bf16.gmra.mrb[0].mxu0 %v2268
      %v2370 = vpop.f32.mrb[0].mxu0
      %v2371 = vadd.f32 %v2228, %v2370
      %v2372 = vpop.f32.mrb[0].mxu0
      %v2373 = vpop.f32.mrb[0].mxu0
      %v2374 = vadd.f32 %v2228, %v2373
      %v2375 = vpop.f32.mrb[0].mxu0
      %2376 = vmatprep.mubr.bf16.mxu0 0
      %2377 = vmatmul.mubr.bf16.gmra.mrb[0].mxu0 %v2271
      %v2378 = vpop.f32.mrb[0].mxu0
      %v2379 = vadd.f32 %v2228, %v2378
      %v2380 = vpop.f32.mrb[0].mxu0
      %v2381 = vpop.f32.mrb[0].mxu0
      %v2382 = vadd.f32 %v2228, %v2381
      %v2383 = vpop.f32.mrb[0].mxu0
      %2384 = vmatprep.mubr.bf16.mxu0 0
      %2385 = vmatmul.mubr.bf16.gmra.mrb[0].mxu0 %v2274
      %v2386 = vpop.f32.mrb[0].mxu0
      %v2387 = vadd.f32 %v2228, %v2386
      %v2388 = vpop.f32.mrb[0].mxu0
      %v2389 = vpop.f32.mrb[0].mxu0
      %v2390 = vadd.f32 %v2228, %v2389
      %v2391 = vpop.f32.mrb[0].mxu0
      %2392 = vdwg.mxu0
      %v2393 = vmax.f32 %v2315, 0.0
      %v2394 = vmax.f32 %v2318, 0.0
      %v2395 = vmax.f32 %v2323, 0.0
      %v2396 = vmax.f32 %v2326, 0.0
      %v2397 = vmax.f32 %v2331, 0.0
      %v2398 = vmax.f32 %v2334, 0.0
      %v2399 = vmax.f32 %v2339, 0.0
      %v2400 = vmax.f32 %v2342, 0.0
      %v2401 = vmax.f32 %v2347, 0.0
      %v2402 = vmax.f32 %v2350, 0.0
      %v2403 = vmax.f32 %v2355, 0.0
      %v2404 = vmax.f32 %v2358, 0.0
      %v2405 = vmax.f32 %v2363, 0.0
      %v2406 = vmax.f32 %v2366, 0.0
      %v2407 = vmax.f32 %v2371, 0.0
      %v2408 = vmax.f32 %v2374, 0.0
      %v2409 = vmax.f32 %v2379, 0.0
      %v2410 = vmax.f32 %v2382, 0.0
      %v2411 = vmax.f32 %v2387, 0.0
      %v2412 = vmax.f32 %v2390, 0.0
      %v2413 = vpack.c.bf16 %v2394, %v2393
      %v2414 = vpack.c.bf16 %v2396, %v2395
      %v2415 = vpack.c.bf16 %v2398, %v2397
      %v2416 = vpack.c.bf16 %v2400, %v2399
      %v2417 = vpack.c.bf16 %v2402, %v2401
      %v2418 = vpack.c.bf16 %v2404, %v2403
      %v2419 = vpack.c.bf16 %v2406, %v2405
      %v2420 = vpack.c.bf16 %v2408, %v2407
      %v2421 = vpack.c.bf16 %v2410, %v2409
      %v2422 = vpack.c.bf16 %v2412, %v2411
      %v2433 = vunpack.c.l.b16 %v2413
      %v2434 = vunpack.c.h.b16 %v2413
      %v2435 = vunpack.c.l.b16 %v2414
      %v2436 = vunpack.c.h.b16 %v2414
      %v2437 = vunpack.c.l.b16 %v2415
      %v2438 = vunpack.c.h.b16 %v2415
      %v2439 = vunpack.c.l.b16 %v2416
      %v2440 = vunpack.c.h.b16 %v2416
      %v2441 = vunpack.c.l.b16 %v2417
      %v2442 = vunpack.c.h.b16 %v2417
      %v2443 = vunpack.c.l.b16 %v2418
      %v2444 = vunpack.c.h.b16 %v2418
      %v2445 = vunpack.c.l.b16 %v2419
      %v2446 = vunpack.c.h.b16 %v2419
      %v2447 = vunpack.c.l.b16 %v2420
      %v2448 = vunpack.c.h.b16 %v2420
      %v2449 = vunpack.c.l.b16 %v2421
      %v2450 = vunpack.c.h.b16 %v2421
      %v2451 = vunpack.c.l.b16 %v2422
      %v2452 = vunpack.c.h.b16 %v2422
      %v2453 = vpack.c.b16 %v2433, %v2433
      %v2454 = vpack.c.b16 %v2434, %v2434
      %v2455 = vpack.c.b16 %v2435, %v2435
      %v2456 = vpack.c.b16 %v2436, %v2436
      %v2457 = vpack.c.b16 %v2437, %v2437
      %v2458 = vpack.c.b16 %v2438, %v2438
      %v2459 = vpack.c.b16 %v2439, %v2439
      %v2460 = vpack.c.b16 %v2440, %v2440
      %v2461 = vpack.c.b16 %v2441, %v2441
      %v2462 = vpack.c.b16 %v2442, %v2442
      %v2463 = vpack.c.b16 %v2443, %v2443
      %v2464 = vpack.c.b16 %v2444, %v2444
      %v2465 = vpack.c.b16 %v2445, %v2445
      %v2466 = vpack.c.b16 %v2446, %v2446
      %v2467 = vpack.c.b16 %v2447, %v2447
      %v2468 = vpack.c.b16 %v2448, %v2448
      %v2469 = vpack.c.b16 %v2449, %v2449
      %v2470 = vpack.c.b16 %v2450, %v2450
      %v2471 = vpack.c.b16 %v2451, %v2451
      %v2472 = vpack.c.b16 %v2452, %v2452
      %2493 = vst.msk [vmem:[#allocation3 + $0x8] sm:$0xf] %vm550, %v2453
      %2494 = vst.msk [vmem:[#allocation3 + $0xc] sm:$0xf] %vm550, %v2454
      %2495 = vst.msk [vmem:[#allocation3 + $0x1c] sm:$0xf] %vm550, %v2455
      %2496 = vst.msk [vmem:[#allocation3 + $0x20] sm:$0xf] %vm550, %v2456
      %2497 = vst.msk [vmem:[#allocation3 + $0x30] sm:$0xf] %vm550, %v2457
      %2498 = vst.msk [vmem:[#allocation3 + $0x34] sm:$0xf] %vm550, %v2458
      %2499 = vst.msk [vmem:[#allocation3 + $0x44] sm:$0xf] %vm550, %v2459
      %2500 = vst.msk [vmem:[#allocation3 + $0x48] sm:$0xf] %vm550, %v2460
      %2501 = vst.msk [vmem:[#allocation3 + $0x58] sm:$0xf] %vm550, %v2461
      %2502 = vst.msk [vmem:[#allocation3 + $0x5c] sm:$0xf] %vm550, %v2462
      %2503 = vst.msk [vmem:[#allocation3 + $0x6c] sm:$0xf] %vm550, %v2463
      %2504 = vst.msk [vmem:[#allocation3 + $0x70] sm:$0xf] %vm550, %v2464
      %2505 = vst.msk [vmem:[#allocation3 + $0x80] sm:$0xf] %vm550, %v2465
      %2506 = vst.msk [vmem:[#allocation3 + $0x84] sm:$0xf] %vm550, %v2466
      %2507 = vst.msk [vmem:[#allocation3 + $0x94] sm:$0xf] %vm550, %v2467
      %2508 = vst.msk [vmem:[#allocation3 + $0x98] sm:$0xf] %vm550, %v2468
      %2509 = vst.msk [vmem:[#allocation3 + $0xa8] sm:$0xf] %vm550, %v2469
      %2510 = vst.msk [vmem:[#allocation3 + $0xac] sm:$0xf] %vm550, %v2470
      %2511 = vst.msk [vmem:[#allocation3 + $0xbc] sm:$0xf] %vm550, %v2471
      %2512 = vst.msk [vmem:[#allocation3 + $0xc0] sm:$0xf] %vm550, %v2472
      %p2513 = scmp.eq.s32.totalorder %s23, 0
      // Predicated region
      $region49: #{tpu_custom_call.1} parent=47 // pred_check
        %p2514 = pneg %p2513
      $region50: #{tpu_custom_call.1} parent=47 // pred_check_branch
        %2516 = sbr.rel (%p2514) target = $region52
      $region51: #{tpu_custom_call.1} parent=47 // pred_region
        %2517 = vst.msk [vmem:[#allocation3 + $0x8] sm:$0xf] %vm550, 0
        %2518 = vst.msk [vmem:[#allocation3 + $0xc] sm:$0xf] %vm550, 0
      $region52: #{tpu_custom_call.1} parent=47 // pred_fallthru
        _
      %p2519 = scmp.eq.s32.totalorder %s23, 1
      // Predicated region
      $region53: #{tpu_custom_call.1} parent=47 // pred_check
        %p2520 = pneg %p2519
      $region54: #{tpu_custom_call.1} parent=47 // pred_check_branch
        %2522 = sbr.rel (%p2520) target = $region56
      $region55: #{tpu_custom_call.1} parent=47 // pred_region
        %s2523 = scalar_lea.vmem [#allocation3], 180
        %2524 = vst.msk [vmem:[%s2523 + $0x8] sm:$0xf] %vm550, 0
        %2525 = vst.msk [vmem:[%s2523 + $0xc] sm:$0xf] %vm550, 0
      $region56: #{tpu_custom_call.1} parent=47 // pred_fallthru
        _
      %v2526 = vld [vmem:[#allocation3 + $0x4] sm:$0x8]
      %v2527 = vld [vmem:[#allocation3 + $0x8] sm:$0xf]
      %v2528 = vld [vmem:[#allocation3 + $0xc] sm:$0xf]
      %v2529 = vld [vmem:[#allocation3 + $0x18] sm:$0x8]
      %v2530 = vld [vmem:[#allocation3 + $0x1c] sm:$0xf]
      %v2531 = vld [vmem:[#allocation3 + $0x20] sm:$0xf]
      %v2532 = vld [vmem:[#allocation3 + $0x2c] sm:$0x8]
      %v2533 = vld [vmem:[#allocation3 + $0x30] sm:$0xf]
      %v2534 = vld [vmem:[#allocation3 + $0x34] sm:$0xf]
      %v2535 = vld [vmem:[#allocation3 + $0x40] sm:$0x8]
      %v2536 = vld [vmem:[#allocation3 + $0x44] sm:$0xf]
      %v2537 = vld [vmem:[#allocation3 + $0x48] sm:$0xf]
      %v2538 = vld [vmem:[#allocation3 + $0x54] sm:$0x8]
      %v2539 = vld [vmem:[#allocation3 + $0x58] sm:$0xf]
      %v2540 = vld [vmem:[#allocation3 + $0x5c] sm:$0xf]
      %v2541 = vld [vmem:[#allocation3 + $0x68] sm:$0x8]
      %v2542 = vld [vmem:[#allocation3 + $0x6c] sm:$0xf]
      %v2543 = vld [vmem:[#allocation3 + $0x70] sm:$0xf]
      %v2544 = vld [vmem:[#allocation3 + $0x7c] sm:$0x8]
      %v2545 = vld [vmem:[#allocation3 + $0x80] sm:$0xf]
      %v2546 = vld [vmem:[#allocation3 + $0x84] sm:$0xf]
      %v2547 = vld [vmem:[#allocation3 + $0x90] sm:$0x8]
      %v2548 = vld [vmem:[#allocation3 + $0x94] sm:$0xf]
      %v2549 = vld [vmem:[#allocation3 + $0x98] sm:$0xf]
      %v2550 = vld [vmem:[#allocation3 + $0x10] sm:$0x1]
      %v2551 = vld [vmem:[#allocation3 + $0x24] sm:$0x1]
      %v2552 = vld [vmem:[#allocation3 + $0x38] sm:$0x1]
      %v2553 = vld [vmem:[#allocation3 + $0x4c] sm:$0x1]
      %v2554 = vld [vmem:[#allocation3 + $0x60] sm:$0x1]
      %v2555 = vld [vmem:[#allocation3 + $0x74] sm:$0x1]
      %v2556 = vld [vmem:[#allocation3 + $0x88] sm:$0x1]
      %v2557 = vld [vmem:[#allocation3 + $0x9c] sm:$0x1]
      %s2558 = scalar_lea.vmem [#allocation3], 20
      %v2559 = vld [vmem:[%s2558 + $0x4] sm:$0x8]
      %v2560 = vld [vmem:[%s2558 + $0x8] sm:$0xf]
      %v2561 = vld [vmem:[%s2558 + $0xc] sm:$0xf]
      %v2562 = vld [vmem:[%s2558 + $0x18] sm:$0x8]
      %v2563 = vld [vmem:[%s2558 + $0x1c] sm:$0xf]
      %v2564 = vld [vmem:[%s2558 + $0x20] sm:$0xf]
      %v2565 = vld [vmem:[%s2558 + $0x2c] sm:$0x8]
      %v2566 = vld [vmem:[%s2558 + $0x30] sm:$0xf]
      %v2567 = vld [vmem:[%s2558 + $0x34] sm:$0xf]
      %v2568 = vld [vmem:[%s2558 + $0x40] sm:$0x8]
      %v2569 = vld [vmem:[%s2558 + $0x44] sm:$0xf]
      %v2570 = vld [vmem:[%s2558 + $0x48] sm:$0xf]
      %v2571 = vld [vmem:[%s2558 + $0x54] sm:$0x8]
      %v2572 = vld [vmem:[%s2558 + $0x58] sm:$0xf]
      %v2573 = vld [vmem:[%s2558 + $0x5c] sm:$0xf]
      %v2574 = vld [vmem:[%s2558 + $0x68] sm:$0x8]
      %v2575 = vld [vmem:[%s2558 + $0x6c] sm:$0xf]
      %v2576 = vld [vmem:[%s2558 + $0x70] sm:$0xf]
      %v2577 = vld [vmem:[%s2558 + $0x7c] sm:$0x8]
      %v2578 = vld [vmem:[%s2558 + $0x80] sm:$0xf]
      %v2579 = vld [vmem:[%s2558 + $0x84] sm:$0xf]
      %v2580 = vld [vmem:[%s2558 + $0x90] sm:$0x8]
      %v2581 = vld [vmem:[%s2558 + $0x94] sm:$0xf]
      %v2582 = vld [vmem:[%s2558 + $0x98] sm:$0xf]
      %v2583 = vld [vmem:[%s2558 + $0x10] sm:$0x1]
      %v2584 = vld [vmem:[%s2558 + $0x24] sm:$0x1]
      %v2585 = vld [vmem:[%s2558 + $0x38] sm:$0x1]
      %v2586 = vld [vmem:[%s2558 + $0x4c] sm:$0x1]
      %v2587 = vld [vmem:[%s2558 + $0x60] sm:$0x1]
      %v2588 = vld [vmem:[%s2558 + $0x74] sm:$0x1]
      %v2589 = vld [vmem:[%s2558 + $0x88] sm:$0x1]
      %v2590 = vld [vmem:[%s2558 + $0x9c] sm:$0x1]
      %s2591 = scalar_lea.vmem [#allocation3], 40
      %v2592 = vld [vmem:[%s2591 + $0x4] sm:$0x8]
      %v2593 = vld [vmem:[%s2591 + $0x8] sm:$0xf]
      %v2594 = vld [vmem:[%s2591 + $0xc] sm:$0xf]
      %v2595 = vld [vmem:[%s2591 + $0x18] sm:$0x8]
      %v2596 = vld [vmem:[%s2591 + $0x1c] sm:$0xf]
      %v2597 = vld [vmem:[%s2591 + $0x20] sm:$0xf]
      %v2598 = vld [vmem:[%s2591 + $0x2c] sm:$0x8]
      %v2599 = vld [vmem:[%s2591 + $0x30] sm:$0xf]
      %v2600 = vld [vmem:[%s2591 + $0x34] sm:$0xf]
      %v2601 = vld [vmem:[%s2591 + $0x40] sm:$0x8]
      %v2602 = vld [vmem:[%s2591 + $0x44] sm:$0xf]
      %v2603 = vld [vmem:[%s2591 + $0x48] sm:$0xf]
      %v2604 = vld [vmem:[%s2591 + $0x54] sm:$0x8]
      %v2605 = vld [vmem:[%s2591 + $0x58] sm:$0xf]
      %v2606 = vld [vmem:[%s2591 + $0x5c] sm:$0xf]
      %v2607 = vld [vmem:[%s2591 + $0x68] sm:$0x8]
      %v2608 = vld [vmem:[%s2591 + $0x6c] sm:$0xf]
      %v2609 = vld [vmem:[%s2591 + $0x70] sm:$0xf]
      %v2610 = vld [vmem:[%s2591 + $0x7c] sm:$0x8]
      %v2611 = vld [vmem:[%s2591 + $0x80] sm:$0xf]
      %v2612 = vld [vmem:[%s2591 + $0x84] sm:$0xf]
      %v2613 = vld [vmem:[%s2591 + $0x90] sm:$0x8]
      %v2614 = vld [vmem:[%s2591 + $0x94] sm:$0xf]
      %v2615 = vld [vmem:[%s2591 + $0x98] sm:$0xf]
      %v2616 = vld [vmem:[%s2591 + $0x10] sm:$0x1]
      %v2617 = vld [vmem:[%s2591 + $0x24] sm:$0x1]
      %v2618 = vld [vmem:[%s2591 + $0x38] sm:$0x1]
      %v2619 = vld [vmem:[%s2591 + $0x4c] sm:$0x1]
      %v2620 = vld [vmem:[%s2591 + $0x60] sm:$0x1]
      %v2621 = vld [vmem:[%s2591 + $0x74] sm:$0x1]
      %v2622 = vld [vmem:[%s2591 + $0x88] sm:$0x1]
      %v2623 = vld [vmem:[%s2591 + $0x9c] sm:$0x1]
      %v2648 = vunpack.c.l.b16 %v2526
      %v2649 = vunpack.c.l.b16 %v2527
      %v2650 = vunpack.c.l.b16 %v2528
      %v2651 = vunpack.c.l.b16 %v2529
      %v2652 = vunpack.c.l.b16 %v2530
      %v2653 = vunpack.c.l.b16 %v2531
      %v2654 = vunpack.c.l.b16 %v2532
      %v2655 = vunpack.c.l.b16 %v2533
      %v2656 = vunpack.c.l.b16 %v2534
      %v2657 = vunpack.c.l.b16 %v2535
      %v2658 = vunpack.c.l.b16 %v2536
      %v2659 = vunpack.c.l.b16 %v2537
      %v2660 = vunpack.c.l.b16 %v2538
      %v2661 = vunpack.c.l.b16 %v2539
      %v2662 = vunpack.c.l.b16 %v2540
      %v2663 = vunpack.c.l.b16 %v2541
      %v2664 = vunpack.c.l.b16 %v2542
      %v2665 = vunpack.c.l.b16 %v2543
      %v2666 = vunpack.c.l.b16 %v2544
      %v2667 = vunpack.c.l.b16 %v2545
      %v2668 = vunpack.c.l.b16 %v2546
      %v2669 = vunpack.c.l.b16 %v2547
      %v2670 = vunpack.c.l.b16 %v2548
      %v2671 = vunpack.c.l.b16 %v2549
      %v2672 = vpack.c.b16 %v2649, %v2648
      %v2673 = vpack.c.b16 %v2650, %v2650
      %v2674 = vpack.c.b16 %v2652, %v2651
      %v2675 = vpack.c.b16 %v2653, %v2653
      %v2676 = vpack.c.b16 %v2655, %v2654
      %v2677 = vpack.c.b16 %v2656, %v2656
      %v2678 = vpack.c.b16 %v2658, %v2657
      %v2679 = vpack.c.b16 %v2659, %v2659
      %v2680 = vpack.c.b16 %v2661, %v2660
      %v2681 = vpack.c.b16 %v2662, %v2662
      %v2682 = vpack.c.b16 %v2664, %v2663
      %v2683 = vpack.c.b16 %v2665, %v2665
      %v2684 = vpack.c.b16 %v2667, %v2666
      %v2685 = vpack.c.b16 %v2668, %v2668
      %v2686 = vpack.c.b16 %v2670, %v2669
      %v2687 = vpack.c.b16 %v2671, %v2671
      %v2688 = vpack.c.b16 %v2650, %v2649
      %v2689 = vpack.c.b16 %v2653, %v2652
      %v2690 = vpack.c.b16 %v2656, %v2655
      %v2691 = vpack.c.b16 %v2659, %v2658
      %v2692 = vpack.c.b16 %v2662, %v2661
      %v2693 = vpack.c.b16 %v2665, %v2664
      %v2694 = vpack.c.b16 %v2668, %v2667
      %v2695 = vpack.c.b16 %v2671, %v2670
      %v2697 = vshrl.u32 %v2688, 16
      %v2699 = vrot.slane %v2697, 4
      %v2700 = vshll.u32 %v2688, 16
      %v2702 = vrot.slane %v2700, 5
      %v2703 = vor.u32 %v2699, %v2702
      %v2705 = vshrl.u32 %v2689, 16
      %v2707 = vrot.slane %v2705, 4
      %v2708 = vshll.u32 %v2689, 16
      %v2710 = vrot.slane %v2708, 5
      %v2711 = vor.u32 %v2707, %v2710
      %v2713 = vshrl.u32 %v2690, 16
      %v2715 = vrot.slane %v2713, 4
      %v2716 = vshll.u32 %v2690, 16
      %v2718 = vrot.slane %v2716, 5
      %v2719 = vor.u32 %v2715, %v2718
      %v2721 = vshrl.u32 %v2691, 16
      %v2723 = vrot.slane %v2721, 4
      %v2724 = vshll.u32 %v2691, 16
      %v2726 = vrot.slane %v2724, 5
      %v2727 = vor.u32 %v2723, %v2726
      %v2729 = vshrl.u32 %v2692, 16
      %v2731 = vrot.slane %v2729, 4
      %v2732 = vshll.u32 %v2692, 16
      %v2734 = vrot.slane %v2732, 5
      %v2735 = vor.u32 %v2731, %v2734
      %v2737 = vshrl.u32 %v2693, 16
      %v2739 = vrot.slane %v2737, 4
      %v2740 = vshll.u32 %v2693, 16
      %v2742 = vrot.slane %v2740, 5
      %v2743 = vor.u32 %v2739, %v2742
      %v2745 = vshrl.u32 %v2694, 16
      %v2747 = vrot.slane %v2745, 4
      %v2748 = vshll.u32 %v2694, 16
      %v2750 = vrot.slane %v2748, 5
      %v2751 = vor.u32 %v2747, %v2750
      %v2753 = vshrl.u32 %v2695, 16
      %v2755 = vrot.slane %v2753, 4
      %v2756 = vshll.u32 %v2695, 16
      %v2758 = vrot.slane %v2756, 5
      %v2759 = vor.u32 %v2755, %v2758
      %2760 = vrot.lane.b32.xlu0 %v2703, 4
      %v2761 = vpop.permute.xlu0 %2760
      %2762 = vrot.lane.b32.xlu0 %v2711, 4
      %v2763 = vpop.permute.xlu0 %2762
      %2764 = vrot.lane.b32.xlu0 %v2719, 4
      %v2765 = vpop.permute.xlu0 %2764
      %2766 = vrot.lane.b32.xlu0 %v2727, 4
      %v2767 = vpop.permute.xlu0 %2766
      %2768 = vrot.lane.b32.xlu0 %v2735, 4
      %v2769 = vpop.permute.xlu0 %2768
      %2770 = vrot.lane.b32.xlu0 %v2743, 4
      %v2771 = vpop.permute.xlu0 %2770
      %2772 = vrot.lane.b32.xlu0 %v2751, 4
      %v2773 = vpop.permute.xlu0 %2772
      %2774 = vrot.lane.b32.xlu0 %v2759, 4
      %v2775 = vpop.permute.xlu0 %2774
      %v2784 = vunpack.c.l.b16 %v2550
      %v2785 = vunpack.c.l.b16 %v2551
      %v2786 = vunpack.c.l.b16 %v2552
      %v2787 = vunpack.c.l.b16 %v2553
      %v2788 = vunpack.c.l.b16 %v2554
      %v2789 = vunpack.c.l.b16 %v2555
      %v2790 = vunpack.c.l.b16 %v2556
      %v2791 = vunpack.c.l.b16 %v2557
      %v2792 = vpack.c.b16 %v2784, %v2784
      %v2793 = vpack.c.b16 %v2785, %v2785
      %v2794 = vpack.c.b16 %v2786, %v2786
      %v2795 = vpack.c.b16 %v2787, %v2787
      %v2796 = vpack.c.b16 %v2788, %v2788
      %v2797 = vpack.c.b16 %v2789, %v2789
      %v2798 = vpack.c.b16 %v2790, %v2790
      %v2799 = vpack.c.b16 %v2791, %v2791
      %v2800 = vrot.slane %v2688, 5
      %v2801 = vrot.slane %v2792, 5
      %v2802 = vsel %vm1018, %v2800, %v2801
      %v2803 = vrot.slane %v2689, 5
      %v2804 = vrot.slane %v2793, 5
      %v2805 = vsel %vm1018, %v2803, %v2804
      %v2806 = vrot.slane %v2690, 5
      %v2807 = vrot.slane %v2794, 5
      %v2808 = vsel %vm1018, %v2806, %v2807
      %v2809 = vrot.slane %v2691, 5
      %v2810 = vrot.slane %v2795, 5
      %v2811 = vsel %vm1018, %v2809, %v2810
      %v2812 = vrot.slane %v2692, 5
      %v2813 = vrot.slane %v2796, 5
      %v2814 = vsel %vm1018, %v2812, %v2813
      %v2815 = vrot.slane %v2693, 5
      %v2816 = vrot.slane %v2797, 5
      %v2817 = vsel %vm1018, %v2815, %v2816
      %v2818 = vrot.slane %v2694, 5
      %v2819 = vrot.slane %v2798, 5
      %v2820 = vsel %vm1018, %v2818, %v2819
      %v2821 = vrot.slane %v2695, 5
      %v2822 = vrot.slane %v2799, 5
      %v2823 = vsel %vm1018, %v2821, %v2822
      %2824 = vrot.lane.b32.xlu0 %v2800, 8
      %v2825 = vpop.permute.xlu0 %2824
      %2826 = vrot.lane.b32.xlu0 %v2802, 8
      %v2827 = vpop.permute.xlu0 %2826
      %2828 = vrot.lane.b32.xlu0 %v2803, 8
      %v2829 = vpop.permute.xlu0 %2828
      %2830 = vrot.lane.b32.xlu0 %v2805, 8
      %v2831 = vpop.permute.xlu0 %2830
      %2832 = vrot.lane.b32.xlu0 %v2806, 8
      %v2833 = vpop.permute.xlu0 %2832
      %2834 = vrot.lane.b32.xlu0 %v2808, 8
      %v2835 = vpop.permute.xlu0 %2834
      %2836 = vrot.lane.b32.xlu0 %v2809, 8
      %v2837 = vpop.permute.xlu0 %2836
      %2838 = vrot.lane.b32.xlu0 %v2811, 8
      %v2839 = vpop.permute.xlu0 %2838
      %2840 = vrot.lane.b32.xlu0 %v2812, 8
      %v2841 = vpop.permute.xlu0 %2840
      %2842 = vrot.lane.b32.xlu0 %v2814, 8
      %v2843 = vpop.permute.xlu0 %2842
      %2844 = vrot.lane.b32.xlu0 %v2815, 8
      %v2845 = vpop.permute.xlu0 %2844
      %2846 = vrot.lane.b32.xlu0 %v2817, 8
      %v2847 = vpop.permute.xlu0 %2846
      %2848 = vrot.lane.b32.xlu0 %v2818, 8
      %v2849 = vpop.permute.xlu0 %2848
      %2850 = vrot.lane.b32.xlu0 %v2820, 8
      %v2851 = vpop.permute.xlu0 %2850
      %2852 = vrot.lane.b32.xlu0 %v2821, 8
      %v2853 = vpop.permute.xlu0 %2852
      %2854 = vrot.lane.b32.xlu0 %v2823, 8
      %v2855 = vpop.permute.xlu0 %2854
      %v2880 = vunpack.c.l.b16 %v2559
      %v2881 = vunpack.c.l.b16 %v2560
      %v2882 = vunpack.c.l.b16 %v2561
      %v2883 = vunpack.c.l.b16 %v2562
      %v2884 = vunpack.c.l.b16 %v2563
      %v2885 = vunpack.c.l.b16 %v2564
      %v2886 = vunpack.c.l.b16 %v2565
      %v2887 = vunpack.c.l.b16 %v2566
      %v2888 = vunpack.c.l.b16 %v2567
      %v2889 = vunpack.c.l.b16 %v2568
      %v2890 = vunpack.c.l.b16 %v2569
      %v2891 = vunpack.c.l.b16 %v2570
      %v2892 = vunpack.c.l.b16 %v2571
      %v2893 = vunpack.c.l.b16 %v2572
      %v2894 = vunpack.c.l.b16 %v2573
      %v2895 = vunpack.c.l.b16 %v2574
      %v2896 = vunpack.c.l.b16 %v2575
      %v2897 = vunpack.c.l.b16 %v2576
      %v2898 = vunpack.c.l.b16 %v2577
      %v2899 = vunpack.c.l.b16 %v2578
      %v2900 = vunpack.c.l.b16 %v2579
      %v2901 = vunpack.c.l.b16 %v2580
      %v2902 = vunpack.c.l.b16 %v2581
      %v2903 = vunpack.c.l.b16 %v2582
      %v2904 = vpack.c.b16 %v2881, %v2880
      %v2905 = vpack.c.b16 %v2882, %v2882
      %v2906 = vpack.c.b16 %v2884, %v2883
      %v2907 = vpack.c.b16 %v2885, %v2885
      %v2908 = vpack.c.b16 %v2887, %v2886
      %v2909 = vpack.c.b16 %v2888, %v2888
      %v2910 = vpack.c.b16 %v2890, %v2889
      %v2911 = vpack.c.b16 %v2891, %v2891
      %v2912 = vpack.c.b16 %v2893, %v2892
      %v2913 = vpack.c.b16 %v2894, %v2894
      %v2914 = vpack.c.b16 %v2896, %v2895
      %v2915 = vpack.c.b16 %v2897, %v2897
      %v2916 = vpack.c.b16 %v2899, %v2898
      %v2917 = vpack.c.b16 %v2900, %v2900
      %v2918 = vpack.c.b16 %v2902, %v2901
      %v2919 = vpack.c.b16 %v2903, %v2903
      %2920 = vrot.lane.b32.xlu0 %v2904, 12
      %v2921 = vpop.permute.xlu0 %2920
      %2922 = vrot.lane.b32.xlu0 %v2905, 12
      %v2923 = vpop.permute.xlu0 %2922
      %2924 = vrot.lane.b32.xlu0 %v2906, 12
      %v2925 = vpop.permute.xlu0 %2924
      %2926 = vrot.lane.b32.xlu0 %v2907, 12
      %v2927 = vpop.permute.xlu0 %2926
      %2928 = vrot.lane.b32.xlu0 %v2908, 12
      %v2929 = vpop.permute.xlu0 %2928
      %2930 = vrot.lane.b32.xlu0 %v2909, 12
      %v2931 = vpop.permute.xlu0 %2930
      %2932 = vrot.lane.b32.xlu0 %v2910, 12
      %v2933 = vpop.permute.xlu0 %2932
      %2934 = vrot.lane.b32.xlu0 %v2911, 12
      %v2935 = vpop.permute.xlu0 %2934
      %2936 = vrot.lane.b32.xlu0 %v2912, 12
      %v2937 = vpop.permute.xlu0 %2936
      %2938 = vrot.lane.b32.xlu0 %v2913, 12
      %v2939 = vpop.permute.xlu0 %2938
      %2940 = vrot.lane.b32.xlu0 %v2914, 12
      %v2941 = vpop.permute.xlu0 %2940
      %2942 = vrot.lane.b32.xlu0 %v2915, 12
      %v2943 = vpop.permute.xlu0 %2942
      %2944 = vrot.lane.b32.xlu0 %v2916, 12
      %v2945 = vpop.permute.xlu0 %2944
      %2946 = vrot.lane.b32.xlu0 %v2917, 12
      %v2947 = vpop.permute.xlu0 %2946
      %2948 = vrot.lane.b32.xlu0 %v2918, 12
      %v2949 = vpop.permute.xlu0 %2948
      %2950 = vrot.lane.b32.xlu0 %v2919, 12
      %v2951 = vpop.permute.xlu0 %2950
      %v2952 = vpack.c.b16 %v2882, %v2881
      %v2953 = vpack.c.b16 %v2885, %v2884
      %v2954 = vpack.c.b16 %v2888, %v2887
      %v2955 = vpack.c.b16 %v2891, %v2890
      %v2956 = vpack.c.b16 %v2894, %v2893
      %v2957 = vpack.c.b16 %v2897, %v2896
      %v2958 = vpack.c.b16 %v2900, %v2899
      %v2959 = vpack.c.b16 %v2903, %v2902
      %v2961 = vshrl.u32 %v2952, 16
      %v2963 = vrot.slane %v2961, 4
      %v2964 = vshll.u32 %v2952, 16
      %v2966 = vrot.slane %v2964, 5
      %v2967 = vor.u32 %v2963, %v2966
      %v2969 = vshrl.u32 %v2953, 16
      %v2971 = vrot.slane %v2969, 4
      %v2972 = vshll.u32 %v2953, 16
      %v2974 = vrot.slane %v2972, 5
      %v2975 = vor.u32 %v2971, %v2974
      %v2977 = vshrl.u32 %v2954, 16
      %v2979 = vrot.slane %v2977, 4
      %v2980 = vshll.u32 %v2954, 16
      %v2982 = vrot.slane %v2980, 5
      %v2983 = vor.u32 %v2979, %v2982
      %v2985 = vshrl.u32 %v2955, 16
      %v2987 = vrot.slane %v2985, 4
      %v2988 = vshll.u32 %v2955, 16
      %v2990 = vrot.slane %v2988, 5
      %v2991 = vor.u32 %v2987, %v2990
      %v2993 = vshrl.u32 %v2956, 16
      %v2995 = vrot.slane %v2993, 4
      %v2996 = vshll.u32 %v2956, 16
      %v2998 = vrot.slane %v2996, 5
      %v2999 = vor.u32 %v2995, %v2998
      %v3001 = vshrl.u32 %v2957, 16
      %v3003 = vrot.slane %v3001, 4
      %v3004 = vshll.u32 %v2957, 16
      %v3006 = vrot.slane %v3004, 5
      %v3007 = vor.u32 %v3003, %v3006
      %v3009 = vshrl.u32 %v2958, 16
      %v3011 = vrot.slane %v3009, 4
      %v3012 = vshll.u32 %v2958, 16
      %v3014 = vrot.slane %v3012, 5
      %v3015 = vor.u32 %v3011, %v3014
      %v3017 = vshrl.u32 %v2959, 16
      %v3019 = vrot.slane %v3017, 4
      %v3020 = vshll.u32 %v2959, 16
      %v3022 = vrot.slane %v3020, 5
      %v3023 = vor.u32 %v3019, %v3022
      %3024 = vrot.lane.b32.xlu0 %v2967, 16
      %v3025 = vpop.permute.xlu0 %3024
      %3026 = vrot.lane.b32.xlu0 %v2975, 16
      %v3027 = vpop.permute.xlu0 %3026
      %3028 = vrot.lane.b32.xlu0 %v2983, 16
      %v3029 = vpop.permute.xlu0 %3028
      %3030 = vrot.lane.b32.xlu0 %v2991, 16
      %v3031 = vpop.permute.xlu0 %3030
      %3032 = vrot.lane.b32.xlu0 %v2999, 16
      %v3033 = vpop.permute.xlu0 %3032
      %3034 = vrot.lane.b32.xlu0 %v3007, 16
      %v3035 = vpop.permute.xlu0 %3034
      %3036 = vrot.lane.b32.xlu0 %v3015, 16
      %v3037 = vpop.permute.xlu0 %3036
      %3038 = vrot.lane.b32.xlu0 %v3023, 16
      %v3039 = vpop.permute.xlu0 %3038
      %v3048 = vunpack.c.l.b16 %v2583
      %v3049 = vunpack.c.l.b16 %v2584
      %v3050 = vunpack.c.l.b16 %v2585
      %v3051 = vunpack.c.l.b16 %v2586
      %v3052 = vunpack.c.l.b16 %v2587
      %v3053 = vunpack.c.l.b16 %v2588
      %v3054 = vunpack.c.l.b16 %v2589
      %v3055 = vunpack.c.l.b16 %v2590
      %v3056 = vpack.c.b16 %v3048, %v3048
      %v3057 = vpack.c.b16 %v3049, %v3049
      %v3058 = vpack.c.b16 %v3050, %v3050
      %v3059 = vpack.c.b16 %v3051, %v3051
      %v3060 = vpack.c.b16 %v3052, %v3052
      %v3061 = vpack.c.b16 %v3053, %v3053
      %v3062 = vpack.c.b16 %v3054, %v3054
      %v3063 = vpack.c.b16 %v3055, %v3055
      %v3064 = vrot.slane %v2952, 5
      %v3065 = vrot.slane %v3056, 5
      %v3066 = vsel %vm1018, %v3064, %v3065
      %v3067 = vrot.slane %v2953, 5
      %v3068 = vrot.slane %v3057, 5
      %v3069 = vsel %vm1018, %v3067, %v3068
      %v3070 = vrot.slane %v2954, 5
      %v3071 = vrot.slane %v3058, 5
      %v3072 = vsel %vm1018, %v3070, %v3071
      %v3073 = vrot.slane %v2955, 5
      %v3074 = vrot.slane %v3059, 5
      %v3075 = vsel %vm1018, %v3073, %v3074
      %v3076 = vrot.slane %v2956, 5
      %v3077 = vrot.slane %v3060, 5
      %v3078 = vsel %vm1018, %v3076, %v3077
      %v3079 = vrot.slane %v2957, 5
      %v3080 = vrot.slane %v3061, 5
      %v3081 = vsel %vm1018, %v3079, %v3080
      %v3082 = vrot.slane %v2958, 5
      %v3083 = vrot.slane %v3062, 5
      %v3084 = vsel %vm1018, %v3082, %v3083
      %v3085 = vrot.slane %v2959, 5
      %v3086 = vrot.slane %v3063, 5
      %v3087 = vsel %vm1018, %v3085, %v3086
      %3088 = vrot.lane.b32.xlu0 %v3064, 20
      %v3089 = vpop.permute.xlu0 %3088
      %3090 = vrot.lane.b32.xlu0 %v3066, 20
      %v3091 = vpop.permute.xlu0 %3090
      %3092 = vrot.lane.b32.xlu0 %v3067, 20
      %v3093 = vpop.permute.xlu0 %3092
      %3094 = vrot.lane.b32.xlu0 %v3069, 20
      %v3095 = vpop.permute.xlu0 %3094
      %3096 = vrot.lane.b32.xlu0 %v3070, 20
      %v3097 = vpop.permute.xlu0 %3096
      %3098 = vrot.lane.b32.xlu0 %v3072, 20
      %v3099 = vpop.permute.xlu0 %3098
      %3100 = vrot.lane.b32.xlu0 %v3073, 20
      %v3101 = vpop.permute.xlu0 %3100
      %3102 = vrot.lane.b32.xlu0 %v3075, 20
      %v3103 = vpop.permute.xlu0 %3102
      %3104 = vrot.lane.b32.xlu0 %v3076, 20
      %v3105 = vpop.permute.xlu0 %3104
      %3106 = vrot.lane.b32.xlu0 %v3078, 20
      %v3107 = vpop.permute.xlu0 %3106
      %3108 = vrot.lane.b32.xlu0 %v3079, 20
      %v3109 = vpop.permute.xlu0 %3108
      %3110 = vrot.lane.b32.xlu0 %v3081, 20
      %v3111 = vpop.permute.xlu0 %3110
      %3112 = vrot.lane.b32.xlu0 %v3082, 20
      %v3113 = vpop.permute.xlu0 %3112
      %3114 = vrot.lane.b32.xlu0 %v3084, 20
      %v3115 = vpop.permute.xlu0 %3114
      %3116 = vrot.lane.b32.xlu0 %v3085, 20
      %v3117 = vpop.permute.xlu0 %3116
      %3118 = vrot.lane.b32.xlu0 %v3087, 20
      %v3119 = vpop.permute.xlu0 %3118
      %v3144 = vunpack.c.l.b16 %v2592
      %v3145 = vunpack.c.l.b16 %v2593
      %v3146 = vunpack.c.l.b16 %v2594
      %v3147 = vunpack.c.l.b16 %v2595
      %v3148 = vunpack.c.l.b16 %v2596
      %v3149 = vunpack.c.l.b16 %v2597
      %v3150 = vunpack.c.l.b16 %v2598
      %v3151 = vunpack.c.l.b16 %v2599
      %v3152 = vunpack.c.l.b16 %v2600
      %v3153 = vunpack.c.l.b16 %v2601
      %v3154 = vunpack.c.l.b16 %v2602
      %v3155 = vunpack.c.l.b16 %v2603
      %v3156 = vunpack.c.l.b16 %v2604
      %v3157 = vunpack.c.l.b16 %v2605
      %v3158 = vunpack.c.l.b16 %v2606
      %v3159 = vunpack.c.l.b16 %v2607
      %v3160 = vunpack.c.l.b16 %v2608
      %v3161 = vunpack.c.l.b16 %v2609
      %v3162 = vunpack.c.l.b16 %v2610
      %v3163 = vunpack.c.l.b16 %v2611
      %v3164 = vunpack.c.l.b16 %v2612
      %v3165 = vunpack.c.l.b16 %v2613
      %v3166 = vunpack.c.l.b16 %v2614
      %v3167 = vunpack.c.l.b16 %v2615
      %v3168 = vpack.c.b16 %v3145, %v3144
      %v3169 = vpack.c.b16 %v3146, %v3146
      %v3170 = vpack.c.b16 %v3148, %v3147
      %v3171 = vpack.c.b16 %v3149, %v3149
      %v3172 = vpack.c.b16 %v3151, %v3150
      %v3173 = vpack.c.b16 %v3152, %v3152
      %v3174 = vpack.c.b16 %v3154, %v3153
      %v3175 = vpack.c.b16 %v3155, %v3155
      %v3176 = vpack.c.b16 %v3157, %v3156
      %v3177 = vpack.c.b16 %v3158, %v3158
      %v3178 = vpack.c.b16 %v3160, %v3159
      %v3179 = vpack.c.b16 %v3161, %v3161
      %v3180 = vpack.c.b16 %v3163, %v3162
      %v3181 = vpack.c.b16 %v3164, %v3164
      %v3182 = vpack.c.b16 %v3166, %v3165
      %v3183 = vpack.c.b16 %v3167, %v3167
      %3184 = vrot.lane.b32.xlu0 %v3168, 24
      %v3185 = vpop.permute.xlu0 %3184
      %3186 = vrot.lane.b32.xlu0 %v3169, 24
      %v3187 = vpop.permute.xlu0 %3186
      %3188 = vrot.lane.b32.xlu0 %v3170, 24
      %v3189 = vpop.permute.xlu0 %3188
      %3190 = vrot.lane.b32.xlu0 %v3171, 24
      %v3191 = vpop.permute.xlu0 %3190
      %3192 = vrot.lane.b32.xlu0 %v3172, 24
      %v3193 = vpop.permute.xlu0 %3192
      %3194 = vrot.lane.b32.xlu0 %v3173, 24
      %v3195 = vpop.permute.xlu0 %3194
      %3196 = vrot.lane.b32.xlu0 %v3174, 24
      %v3197 = vpop.permute.xlu0 %3196
      %3198 = vrot.lane.b32.xlu0 %v3175, 24
      %v3199 = vpop.permute.xlu0 %3198
      %3200 = vrot.lane.b32.xlu0 %v3176, 24
      %v3201 = vpop.permute.xlu0 %3200
      %3202 = vrot.lane.b32.xlu0 %v3177, 24
      %v3203 = vpop.permute.xlu0 %3202
      %3204 = vrot.lane.b32.xlu0 %v3178, 24
      %v3205 = vpop.permute.xlu0 %3204
      %3206 = vrot.lane.b32.xlu0 %v3179, 24
      %v3207 = vpop.permute.xlu0 %3206
      %3208 = vrot.lane.b32.xlu0 %v3180, 24
      %v3209 = vpop.permute.xlu0 %3208
      %3210 = vrot.lane.b32.xlu0 %v3181, 24
      %v3211 = vpop.permute.xlu0 %3210
      %3212 = vrot.lane.b32.xlu0 %v3182, 24
      %v3213 = vpop.permute.xlu0 %3212
      %3214 = vrot.lane.b32.xlu0 %v3183, 24
      %v3215 = vpop.permute.xlu0 %3214
      %v3216 = vpack.c.b16 %v3146, %v3145
      %v3217 = vpack.c.b16 %v3149, %v3148
      %v3218 = vpack.c.b16 %v3152, %v3151
      %v3219 = vpack.c.b16 %v3155, %v3154
      %v3220 = vpack.c.b16 %v3158, %v3157
      %v3221 = vpack.c.b16 %v3161, %v3160
      %v3222 = vpack.c.b16 %v3164, %v3163
      %v3223 = vpack.c.b16 %v3167, %v3166
      %v3225 = vshrl.u32 %v3216, 16
      %v3227 = vrot.slane %v3225, 4
      %v3228 = vshll.u32 %v3216, 16
      %v3230 = vrot.slane %v3228, 5
      %v3231 = vor.u32 %v3227, %v3230
      %v3233 = vshrl.u32 %v3217, 16
      %v3235 = vrot.slane %v3233, 4
      %v3236 = vshll.u32 %v3217, 16
      %v3238 = vrot.slane %v3236, 5
      %v3239 = vor.u32 %v3235, %v3238
      %v3241 = vshrl.u32 %v3218, 16
      %v3243 = vrot.slane %v3241, 4
      %v3244 = vshll.u32 %v3218, 16
      %v3246 = vrot.slane %v3244, 5
      %v3247 = vor.u32 %v3243, %v3246
      %v3249 = vshrl.u32 %v3219, 16
      %v3251 = vrot.slane %v3249, 4
      %v3252 = vshll.u32 %v3219, 16
      %v3254 = vrot.slane %v3252, 5
      %v3255 = vor.u32 %v3251, %v3254
      %v3257 = vshrl.u32 %v3220, 16
      %v3259 = vrot.slane %v3257, 4
      %v3260 = vshll.u32 %v3220, 16
      %v3262 = vrot.slane %v3260, 5
      %v3263 = vor.u32 %v3259, %v3262
      %v3265 = vshrl.u32 %v3221, 16
      %v3267 = vrot.slane %v3265, 4
      %v3268 = vshll.u32 %v3221, 16
      %v3270 = vrot.slane %v3268, 5
      %v3271 = vor.u32 %v3267, %v3270
      %v3273 = vshrl.u32 %v3222, 16
      %v3275 = vrot.slane %v3273, 4
      %v3276 = vshll.u32 %v3222, 16
      %v3278 = vrot.slane %v3276, 5
      %v3279 = vor.u32 %v3275, %v3278
      %v3281 = vshrl.u32 %v3223, 16
      %v3283 = vrot.slane %v3281, 4
      %v3284 = vshll.u32 %v3223, 16
      %v3286 = vrot.slane %v3284, 5
      %v3287 = vor.u32 %v3283, %v3286
      %3288 = vrot.lane.b32.xlu0 %v3231, 28
      %v3289 = vpop.permute.xlu0 %3288
      %3290 = vrot.lane.b32.xlu0 %v3239, 28
      %v3291 = vpop.permute.xlu0 %3290
      %3292 = vrot.lane.b32.xlu0 %v3247, 28
      %v3293 = vpop.permute.xlu0 %3292
      %3294 = vrot.lane.b32.xlu0 %v3255, 28
      %v3295 = vpop.permute.xlu0 %3294
      %3296 = vrot.lane.b32.xlu0 %v3263, 28
      %v3297 = vpop.permute.xlu0 %3296
      %3298 = vrot.lane.b32.xlu0 %v3271, 28
      %v3299 = vpop.permute.xlu0 %3298
      %3300 = vrot.lane.b32.xlu0 %v3279, 28
      %v3301 = vpop.permute.xlu0 %3300
      %3302 = vrot.lane.b32.xlu0 %v3287, 28
      %v3303 = vpop.permute.xlu0 %3302
      %v3312 = vunpack.c.l.b16 %v2616
      %v3313 = vunpack.c.l.b16 %v2617
      %v3314 = vunpack.c.l.b16 %v2618
      %v3315 = vunpack.c.l.b16 %v2619
      %v3316 = vunpack.c.l.b16 %v2620
      %v3317 = vunpack.c.l.b16 %v2621
      %v3318 = vunpack.c.l.b16 %v2622
      %v3319 = vunpack.c.l.b16 %v2623
      %v3320 = vpack.c.b16 %v3312, %v3312
      %v3321 = vpack.c.b16 %v3313, %v3313
      %v3322 = vpack.c.b16 %v3314, %v3314
      %v3323 = vpack.c.b16 %v3315, %v3315
      %v3324 = vpack.c.b16 %v3316, %v3316
      %v3325 = vpack.c.b16 %v3317, %v3317
      %v3326 = vpack.c.b16 %v3318, %v3318
      %v3327 = vpack.c.b16 %v3319, %v3319
      %v3328 = vrot.slane %v3216, 5
      %v3329 = vrot.slane %v3320, 5
      %v3330 = vsel %vm1018, %v3328, %v3329
      %v3331 = vrot.slane %v3217, 5
      %v3332 = vrot.slane %v3321, 5
      %v3333 = vsel %vm1018, %v3331, %v3332
      %v3334 = vrot.slane %v3218, 5
      %v3335 = vrot.slane %v3322, 5
      %v3336 = vsel %vm1018, %v3334, %v3335
      %v3337 = vrot.slane %v3219, 5
      %v3338 = vrot.slane %v3323, 5
      %v3339 = vsel %vm1018, %v3337, %v3338
      %v3340 = vrot.slane %v3220, 5
      %v3341 = vrot.slane %v3324, 5
      %v3342 = vsel %vm1018, %v3340, %v3341
      %v3343 = vrot.slane %v3221, 5
      %v3344 = vrot.slane %v3325, 5
      %v3345 = vsel %vm1018, %v3343, %v3344
      %v3346 = vrot.slane %v3222, 5
      %v3347 = vrot.slane %v3326, 5
      %v3348 = vsel %vm1018, %v3346, %v3347
      %v3349 = vrot.slane %v3223, 5
      %v3350 = vrot.slane %v3327, 5
      %v3351 = vsel %vm1018, %v3349, %v3350
      %3352 = vrot.lane.b32.xlu0 %v3328, 32
      %v3353 = vpop.permute.xlu0 %3352
      %3354 = vrot.lane.b32.xlu0 %v3330, 32
      %v3355 = vpop.permute.xlu0 %3354
      %3356 = vrot.lane.b32.xlu0 %v3331, 32
      %v3357 = vpop.permute.xlu0 %3356
      %3358 = vrot.lane.b32.xlu0 %v3333, 32
      %v3359 = vpop.permute.xlu0 %3358
      %3360 = vrot.lane.b32.xlu0 %v3334, 32
      %v3361 = vpop.permute.xlu0 %3360
      %3362 = vrot.lane.b32.xlu0 %v3336, 32
      %v3363 = vpop.permute.xlu0 %3362
      %3364 = vrot.lane.b32.xlu0 %v3337, 32
      %v3365 = vpop.permute.xlu0 %3364
      %3366 = vrot.lane.b32.xlu0 %v3339, 32
      %v3367 = vpop.permute.xlu0 %3366
      %3368 = vrot.lane.b32.xlu0 %v3340, 32
      %v3369 = vpop.permute.xlu0 %3368
      %3370 = vrot.lane.b32.xlu0 %v3342, 32
      %v3371 = vpop.permute.xlu0 %3370
      %3372 = vrot.lane.b32.xlu0 %v3343, 32
      %v3373 = vpop.permute.xlu0 %3372
      %3374 = vrot.lane.b32.xlu0 %v3345, 32
      %v3375 = vpop.permute.xlu0 %3374
      %3376 = vrot.lane.b32.xlu0 %v3346, 32
      %v3377 = vpop.permute.xlu0 %3376
      %3378 = vrot.lane.b32.xlu0 %v3348, 32
      %v3379 = vpop.permute.xlu0 %3378
      %3380 = vrot.lane.b32.xlu0 %v3349, 32
      %v3381 = vpop.permute.xlu0 %3380
      %3382 = vrot.lane.b32.xlu0 %v3351, 32
      %v3383 = vpop.permute.xlu0 %3382
      %v3386 = vsel %vm1749, %v2672, %v2761
      %v3388 = vsel %vm1749, %v2673, %v2761
      %v3391 = vsel %vm1749, %v2674, %v2763
      %v3393 = vsel %vm1749, %v2675, %v2763
      %v3396 = vsel %vm1749, %v2676, %v2765
      %v3398 = vsel %vm1749, %v2677, %v2765
      %v3401 = vsel %vm1749, %v2678, %v2767
      %v3403 = vsel %vm1749, %v2679, %v2767
      %v3406 = vsel %vm1749, %v2680, %v2769
      %v3408 = vsel %vm1749, %v2681, %v2769
      %v3411 = vsel %vm1749, %v2682, %v2771
      %v3413 = vsel %vm1749, %v2683, %v2771
      %v3416 = vsel %vm1749, %v2684, %v2773
      %v3418 = vsel %vm1749, %v2685, %v2773
      %v3421 = vsel %vm1749, %v2686, %v2775
      %v3423 = vsel %vm1749, %v2687, %v2775
      %v3425 = vsel %vm1800, %v3386, %v2825
      %v3427 = vsel %vm1800, %v3388, %v2827
      %v3429 = vsel %vm1800, %v3391, %v2829
      %v3431 = vsel %vm1800, %v3393, %v2831
      %v3433 = vsel %vm1800, %v3396, %v2833
      %v3435 = vsel %vm1800, %v3398, %v2835
      %v3437 = vsel %vm1800, %v3401, %v2837
      %v3439 = vsel %vm1800, %v3403, %v2839
      %v3441 = vsel %vm1800, %v3406, %v2841
      %v3443 = vsel %vm1800, %v3408, %v2843
      %v3445 = vsel %vm1800, %v3411, %v2845
      %v3447 = vsel %vm1800, %v3413, %v2847
      %v3449 = vsel %vm1800, %v3416, %v2849
      %v3451 = vsel %vm1800, %v3418, %v2851
      %v3453 = vsel %vm1800, %v3421, %v2853
      %v3455 = vsel %vm1800, %v3423, %v2855
      %v3457 = vsel %vm1841, %v3425, %v2921
      %v3459 = vsel %vm1841, %v3427, %v2923
      %v3461 = vsel %vm1841, %v3429, %v2925
      %v3463 = vsel %vm1841, %v3431, %v2927
      %v3465 = vsel %vm1841, %v3433, %v2929
      %v3467 = vsel %vm1841, %v3435, %v2931
      %v3469 = vsel %vm1841, %v3437, %v2933
      %v3471 = vsel %vm1841, %v3439, %v2935
      %v3473 = vsel %vm1841, %v3441, %v2937
      %v3475 = vsel %vm1841, %v3443, %v2939
      %v3477 = vsel %vm1841, %v3445, %v2941
      %v3479 = vsel %vm1841, %v3447, %v2943
      %v3481 = vsel %vm1841, %v3449, %v2945
      %v3483 = vsel %vm1841, %v3451, %v2947
      %v3485 = vsel %vm1841, %v3453, %v2949
      %v3487 = vsel %vm1841, %v3455, %v2951
      %v3489 = vsel %vm1882, %v3457, %v3025
      %v3490 = vsel %vm1882, %v3459, %v3025
      %v3492 = vsel %vm1882, %v3461, %v3027
      %v3493 = vsel %vm1882, %v3463, %v3027
      %v3495 = vsel %vm1882, %v3465, %v3029
      %v3496 = vsel %vm1882, %v3467, %v3029
      %v3498 = vsel %vm1882, %v3469, %v3031
      %v3499 = vsel %vm1882, %v3471, %v3031
      %v3501 = vsel %vm1882, %v3473, %v3033
      %v3502 = vsel %vm1882, %v3475, %v3033
      %v3504 = vsel %vm1882, %v3477, %v3035
      %v3505 = vsel %vm1882, %v3479, %v3035
      %v3507 = vsel %vm1882, %v3481, %v3037
      %v3508 = vsel %vm1882, %v3483, %v3037
      %v3510 = vsel %vm1882, %v3485, %v3039
      %v3511 = vsel %vm1882, %v3487, %v3039
      %v3513 = vsel %vm1913, %v3489, %v3089
      %v3515 = vsel %vm1913, %v3490, %v3091
      %v3517 = vsel %vm1913, %v3492, %v3093
      %v3519 = vsel %vm1913, %v3493, %v3095
      %v3521 = vsel %vm1913, %v3495, %v3097
      %v3523 = vsel %vm1913, %v3496, %v3099
      %v3525 = vsel %vm1913, %v3498, %v3101
      %v3527 = vsel %vm1913, %v3499, %v3103
      %v3529 = vsel %vm1913, %v3501, %v3105
      %v3531 = vsel %vm1913, %v3502, %v3107
      %v3533 = vsel %vm1913, %v3504, %v3109
      %v3535 = vsel %vm1913, %v3505, %v3111
      %v3537 = vsel %vm1913, %v3507, %v3113
      %v3539 = vsel %vm1913, %v3508, %v3115
      %v3541 = vsel %vm1913, %v3510, %v3117
      %v3543 = vsel %vm1913, %v3511, %v3119
      %v3545 = vsel %vm1954, %v3513, %v3185
      %v3547 = vsel %vm1954, %v3515, %v3187
      %v3549 = vsel %vm1954, %v3517, %v3189
      %v3551 = vsel %vm1954, %v3519, %v3191
      %v3553 = vsel %vm1954, %v3521, %v3193
      %v3555 = vsel %vm1954, %v3523, %v3195
      %v3557 = vsel %vm1954, %v3525, %v3197
      %v3559 = vsel %vm1954, %v3527, %v3199
      %v3561 = vsel %vm1954, %v3529, %v3201
      %v3563 = vsel %vm1954, %v3531, %v3203
      %v3565 = vsel %vm1954, %v3533, %v3205
      %v3567 = vsel %vm1954, %v3535, %v3207
      %v3569 = vsel %vm1954, %v3537, %v3209
      %v3571 = vsel %vm1954, %v3539, %v3211
      %v3573 = vsel %vm1954, %v3541, %v3213
      %v3575 = vsel %vm1954, %v3543, %v3215
      %v3577 = vsel %vm1995, %v3545, %v3289
      %v3578 = vsel %vm1995, %v3547, %v3289
      %v3580 = vsel %vm1995, %v3549, %v3291
      %v3581 = vsel %vm1995, %v3551, %v3291
      %v3583 = vsel %vm1995, %v3553, %v3293
      %v3584 = vsel %vm1995, %v3555, %v3293
      %v3586 = vsel %vm1995, %v3557, %v3295
      %v3587 = vsel %vm1995, %v3559, %v3295
      %v3589 = vsel %vm1995, %v3561, %v3297
      %v3590 = vsel %vm1995, %v3563, %v3297
      %v3592 = vsel %vm1995, %v3565, %v3299
      %v3593 = vsel %vm1995, %v3567, %v3299
      %v3595 = vsel %vm1995, %v3569, %v3301
      %v3596 = vsel %vm1995, %v3571, %v3301
      %v3598 = vsel %vm1995, %v3573, %v3303
      %v3599 = vsel %vm1995, %v3575, %v3303
      %v3601 = vsel %vm2026, %v3577, %v3353
      %v3603 = vsel %vm2026, %v3578, %v3355
      %v3605 = vsel %vm2026, %v3580, %v3357
      %v3607 = vsel %vm2026, %v3581, %v3359
      %v3609 = vsel %vm2026, %v3583, %v3361
      %v3611 = vsel %vm2026, %v3584, %v3363
      %v3613 = vsel %vm2026, %v3586, %v3365
      %v3615 = vsel %vm2026, %v3587, %v3367
      %v3617 = vsel %vm2026, %v3589, %v3369
      %v3619 = vsel %vm2026, %v3590, %v3371
      %v3621 = vsel %vm2026, %v3592, %v3373
      %v3623 = vsel %vm2026, %v3593, %v3375
      %v3625 = vsel %vm2026, %v3595, %v3377
      %v3627 = vsel %vm2026, %v3596, %v3379
      %v3629 = vsel %vm2026, %v3598, %v3381
      %v3631 = vsel %vm2026, %v3599, %v3383
      %v3632 = vshrl.u32 %v3601, 16
      %v3634 = vrot.slane %v3632, 3
      %v3635 = vshll.u32 %v3601, 16
      %v3637 = vrot.slane %v3635, 4
      %v3638 = vor.u32 %v3634, %v3637
      %v3639 = vshrl.u32 %v3603, 16
      %v3641 = vrot.slane %v3639, 3
      %v3642 = vshll.u32 %v3603, 16
      %v3644 = vrot.slane %v3642, 4
      %v3645 = vor.u32 %v3641, %v3644
      %v3646 = vsel %vm2067, %v3638, %v3645
      %v3647 = vshrl.u32 %v3605, 16
      %v3649 = vrot.slane %v3647, 3
      %v3650 = vshll.u32 %v3605, 16
      %v3652 = vrot.slane %v3650, 4
      %v3653 = vor.u32 %v3649, %v3652
      %v3654 = vshrl.u32 %v3607, 16
      %v3656 = vrot.slane %v3654, 3
      %v3657 = vshll.u32 %v3607, 16
      %v3659 = vrot.slane %v3657, 4
      %v3660 = vor.u32 %v3656, %v3659
      %v3661 = vsel %vm2067, %v3653, %v3660
      %v3662 = vshrl.u32 %v3609, 16
      %v3664 = vrot.slane %v3662, 3
      %v3665 = vshll.u32 %v3609, 16
      %v3667 = vrot.slane %v3665, 4
      %v3668 = vor.u32 %v3664, %v3667
      %v3669 = vshrl.u32 %v3611, 16
      %v3671 = vrot.slane %v3669, 3
      %v3672 = vshll.u32 %v3611, 16
      %v3674 = vrot.slane %v3672, 4
      %v3675 = vor.u32 %v3671, %v3674
      %v3676 = vsel %vm2067, %v3668, %v3675
      %v3677 = vshrl.u32 %v3613, 16
      %v3679 = vrot.slane %v3677, 3
      %v3680 = vshll.u32 %v3613, 16
      %v3682 = vrot.slane %v3680, 4
      %v3683 = vor.u32 %v3679, %v3682
      %v3684 = vshrl.u32 %v3615, 16
      %v3686 = vrot.slane %v3684, 3
      %v3687 = vshll.u32 %v3615, 16
      %v3689 = vrot.slane %v3687, 4
      %v3690 = vor.u32 %v3686, %v3689
      %v3691 = vsel %vm2067, %v3683, %v3690
      %v3692 = vshrl.u32 %v3617, 16
      %v3694 = vrot.slane %v3692, 3
      %v3695 = vshll.u32 %v3617, 16
      %v3697 = vrot.slane %v3695, 4
      %v3698 = vor.u32 %v3694, %v3697
      %v3699 = vshrl.u32 %v3619, 16
      %v3701 = vrot.slane %v3699, 3
      %v3702 = vshll.u32 %v3619, 16
      %v3704 = vrot.slane %v3702, 4
      %v3705 = vor.u32 %v3701, %v3704
      %v3706 = vsel %vm2067, %v3698, %v3705
      %v3707 = vshrl.u32 %v3621, 16
      %v3709 = vrot.slane %v3707, 3
      %v3710 = vshll.u32 %v3621, 16
      %v3712 = vrot.slane %v3710, 4
      %v3713 = vor.u32 %v3709, %v3712
      %v3714 = vshrl.u32 %v3623, 16
      %v3716 = vrot.slane %v3714, 3
      %v3717 = vshll.u32 %v3623, 16
      %v3719 = vrot.slane %v3717, 4
      %v3720 = vor.u32 %v3716, %v3719
      %v3721 = vsel %vm2067, %v3713, %v3720
      %v3722 = vshrl.u32 %v3625, 16
      %v3724 = vrot.slane %v3722, 3
      %v3725 = vshll.u32 %v3625, 16
      %v3727 = vrot.slane %v3725, 4
      %v3728 = vor.u32 %v3724, %v3727
      %v3729 = vshrl.u32 %v3627, 16
      %v3731 = vrot.slane %v3729, 3
      %v3732 = vshll.u32 %v3627, 16
      %v3734 = vrot.slane %v3732, 4
      %v3735 = vor.u32 %v3731, %v3734
      %v3736 = vsel %vm2067, %v3728, %v3735
      %v3737 = vshrl.u32 %v3629, 16
      %v3739 = vrot.slane %v3737, 3
      %v3740 = vshll.u32 %v3629, 16
      %v3742 = vrot.slane %v3740, 4
      %v3743 = vor.u32 %v3739, %v3742
      %v3744 = vshrl.u32 %v3631, 16
      %v3746 = vrot.slane %v3744, 3
      %v3747 = vshll.u32 %v3631, 16
      %v3749 = vrot.slane %v3747, 4
      %v3750 = vor.u32 %v3746, %v3749
      %v3751 = vsel %vm2067, %v3743, %v3750
      %v3752 = vld [vmem:[%s5] sm:$0xf]
      %v3753 = vld [vmem:[%s5 + $0x4] sm:$0xf]
      %v3754 = vld [vmem:[%s5 + $0x8] sm:$0xf]
      %v3755 = vld [vmem:[%s5 + $0xc] sm:$0xf]
      %v3756 = vld [vmem:[%s5 + $0x10] sm:$0x3]
      %v3757 = vld [vmem:[%s6] sm:$0x1]
      %v3759 = vlaneseq
      %v3760 = vshrl.u32 %v3759, 7
      %v3761 = vsub.s32 0, %v3760
      %v3762 = vrot.slane %v3757, %v3761
      %v3769 = vunpack.c.l.b16 %v3752
      %v3770 = vunpack.c.l.b16 %v3753
      %v3771 = vunpack.c.l.b16 %v3754
      %v3772 = vunpack.c.l.b16 %v3755
      %v3773 = vunpack.c.l.b16 %v3756
      %v3774 = vpack.c.b16 %v3770, %v3769
      %v3775 = vpack.c.b16 %v3772, %v3771
      %v3776 = vpack.c.b16 %v3773, %v3773
      %v3780 = vsel %vm2245, %v3646, 0
      %v3783 = vsel %vm2245, %v3661, 0
      %v3786 = vsel %vm2245, %v3676, 0
      %v3789 = vsel %vm2245, %v3691, 0
      %v3792 = vsel %vm2245, %v3706, 0
      %v3795 = vsel %vm2245, %v3721, 0
      %v3798 = vsel %vm2245, %v3736, 0
      %v3801 = vsel %vm2245, %v3751, 0
      %v3804 = vsel %vm2276, %v3776, 0
      %3806 = vmatprep.subr.bf16.mxu0 0
      %3807 = vmatpush1.bf16.msra.mxu0 %v3774
      %3808 = vmatprep.subr.bf16.mxu0 0
      %3809 = vmatpush1.bf16.msra.mxu0 %v3775
      %3810 = vmatprep.subr.bf16.mxu0 0
      %3811 = vmatpush1.bf16.msra.mxu0 %v3804
      %3812 = vmatprep.subr.bf16.mxu0 0
      %3813 = vmatpush1.bf16.msra.mxu0 0
      %3814 = vmatprep.subr.bf16.mxu0 0
      %3815 = vmatpush1.bf16.msra.mxu0 0
      %3816 = vmatprep.subr.bf16.mxu0 0
      %3817 = vmatpush1.bf16.msra.mxu0 0
      %3818 = vmatprep.subr.bf16.mxu0 0
      %3819 = vmatpush1.bf16.msra.mxu0 0
      %3820 = vmatprep.subr.bf16.mxu0 0
      %3821 = vmatpush1.bf16.msra.mxu0 0
      %3822 = vmatprep.subr.bf16.mxu0 0
      %3823 = vmatpush1.bf16.msra.mxu0 0
      %3824 = vmatprep.subr.bf16.mxu0 0
      %3825 = vmatpush1.bf16.msra.mxu0 0
      %3826 = vmatprep.subr.bf16.mxu0 0
      %3827 = vmatpush1.bf16.msra.mxu0 0
      %3828 = vmatprep.subr.bf16.mxu0 0
      %3829 = vmatpush1.bf16.msra.mxu0 0
      %3830 = vmatprep.subr.bf16.mxu0 0
      %3831 = vmatpush1.bf16.msra.mxu0 0
      %3832 = vmatprep.subr.bf16.mxu0 0
      %3833 = vmatpush1.bf16.msra.mxu0 0
      %3834 = vmatprep.subr.bf16.mxu0 0
      %3835 = vmatpush1.bf16.msra.mxu0 0
      %3836 = vmatprep.subr.bf16.mxu0 0
      %3837 = vmatpush1.bf16.msra.mxu0 0
      %3838 = vmatprep.mubr.bf16.mxu0 0
      %3839 = vmatmul.mubr.bf16.gmra.mrb[0].mxu0 %v3780
      %v3840 = vpop.f32.mrb[0].mxu0
      %v3841 = vadd.f32 %v3762, %v3840
      %v3842 = vpop.f32.mrb[0].mxu0
      %v3843 = vpop.f32.mrb[0].mxu0
      %v3844 = vadd.f32 %v3762, %v3843
      %v3845 = vpop.f32.mrb[0].mxu0
      %3846 = vmatprep.mubr.bf16.mxu0 0
      %3847 = vmatmul.mubr.bf16.gmra.mrb[0].mxu0 %v3783
      %v3848 = vpop.f32.mrb[0].mxu0
      %v3849 = vadd.f32 %v3762, %v3848
      %v3850 = vpop.f32.mrb[0].mxu0
      %v3851 = vpop.f32.mrb[0].mxu0
      %v3852 = vadd.f32 %v3762, %v3851
      %v3853 = vpop.f32.mrb[0].mxu0
      %3854 = vmatprep.mubr.bf16.mxu0 0
      %3855 = vmatmul.mubr.bf16.gmra.mrb[0].mxu0 %v3786
      %v3856 = vpop.f32.mrb[0].mxu0
      %v3857 = vadd.f32 %v3762, %v3856
      %v3858 = vpop.f32.mrb[0].mxu0
      %v3859 = vpop.f32.mrb[0].mxu0
      %v3860 = vadd.f32 %v3762, %v3859
      %v3861 = vpop.f32.mrb[0].mxu0
      %3862 = vmatprep.mubr.bf16.mxu0 0
      %3863 = vmatmul.mubr.bf16.gmra.mrb[0].mxu0 %v3789
      %v3864 = vpop.f32.mrb[0].mxu0
      %v3865 = vadd.f32 %v3762, %v3864
      %v3866 = vpop.f32.mrb[0].mxu0
      %v3867 = vpop.f32.mrb[0].mxu0
      %v3868 = vadd.f32 %v3762, %v3867
      %v3869 = vpop.f32.mrb[0].mxu0
      %3870 = vmatprep.mubr.bf16.mxu0 0
      %3871 = vmatmul.mubr.bf16.gmra.mrb[0].mxu0 %v3792
      %v3872 = vpop.f32.mrb[0].mxu0
      %v3873 = vadd.f32 %v3762, %v3872
      %v3874 = vpop.f32.mrb[0].mxu0
      %v3875 = vpop.f32.mrb[0].mxu0
      %v3876 = vadd.f32 %v3762, %v3875
      %v3877 = vpop.f32.mrb[0].mxu0
      %3878 = vmatprep.mubr.bf16.mxu0 0
      %3879 = vmatmul.mubr.bf16.gmra.mrb[0].mxu0 %v3795
      %v3880 = vpop.f32.mrb[0].mxu0
      %v3881 = vadd.f32 %v3762, %v3880
      %v3882 = vpop.f32.mrb[0].mxu0
      %v3883 = vpop.f32.mrb[0].mxu0
      %v3884 = vadd.f32 %v3762, %v3883
      %v3885 = vpop.f32.mrb[0].mxu0
      %3886 = vmatprep.mubr.bf16.mxu0 0
      %3887 = vmatmul.mubr.bf16.gmra.mrb[0].mxu0 %v3798
      %v3888 = vpop.f32.mrb[0].mxu0
      %v3889 = vadd.f32 %v3762, %v3888
      %v3890 = vpop.f32.mrb[0].mxu0
      %v3891 = vpop.f32.mrb[0].mxu0
      %v3892 = vadd.f32 %v3762, %v3891
      %v3893 = vpop.f32.mrb[0].mxu0
      %3894 = vmatprep.mubr.bf16.mxu0 0
      %3895 = vmatmul.mubr.bf16.gmra.mrb[0].mxu0 %v3801
      %v3896 = vpop.f32.mrb[0].mxu0
      %v3897 = vadd.f32 %v3762, %v3896
      %v3898 = vpop.f32.mrb[0].mxu0
      %v3899 = vpop.f32.mrb[0].mxu0
      %v3900 = vadd.f32 %v3762, %v3899
      %v3901 = vpop.f32.mrb[0].mxu0
      %3902 = vdwg.mxu0
      %v3903 = vmul.f32 %v3841, 0.5
      %v3904 = vmul.f32 %v3844, 0.5
      %v3905 = vmul.f32 %v3849, 0.5
      %v3906 = vmul.f32 %v3852, 0.5
      %v3907 = vmul.f32 %v3857, 0.5
      %v3908 = vmul.f32 %v3860, 0.5
      %v3909 = vmul.f32 %v3865, 0.5
      %v3910 = vmul.f32 %v3868, 0.5
      %v3911 = vmul.f32 %v3873, 0.5
      %v3912 = vmul.f32 %v3876, 0.5
      %v3913 = vmul.f32 %v3881, 0.5
      %v3914 = vmul.f32 %v3884, 0.5
      %v3915 = vmul.f32 %v3889, 0.5
      %v3916 = vmul.f32 %v3892, 0.5
      %v3917 = vmul.f32 %v3897, 0.5
      %v3918 = vmul.f32 %v3900, 0.5
      %v3919 = vld [vmem:[%s360] sm:$0xff]
      %v3920 = vld [vmem:[%s360 + $0x8] sm:$0xff]
      %v3921 = vld [vmem:[%s360 + $0x10] sm:$0xff]
      %v3922 = vld [vmem:[%s360 + $0x18] sm:$0xff]
      %v3923 = vld [vmem:[%s360 + $0x20] sm:$0xff]
      %v3924 = vld [vmem:[%s360 + $0x28] sm:$0xff]
      %v3925 = vld [vmem:[%s360 + $0x30] sm:$0xff]
      %v3926 = vld [vmem:[%s360 + $0x38] sm:$0xff]
      %v3927 = vld [vmem:[%s360 + $0x40] sm:$0xff]
      %v3928 = vld [vmem:[%s360 + $0x48] sm:$0xff]
      %v3929 = vld [vmem:[%s360 + $0x50] sm:$0xff]
      %v3930 = vld [vmem:[%s360 + $0x58] sm:$0xff]
      %v3931 = vld [vmem:[%s360 + $0x60] sm:$0xff]
      %v3932 = vld [vmem:[%s360 + $0x68] sm:$0xff]
      %v3933 = vld [vmem:[%s360 + $0x70] sm:$0xff]
      %v3934 = vld [vmem:[%s360 + $0x78] sm:$0xff]
      %v3935 = vadd.f32 %v3903, %v3919
      %v3936 = vadd.f32 %v3904, %v3920
      %v3937 = vadd.f32 %v3905, %v3921
      %v3938 = vadd.f32 %v3906, %v3922
      %v3939 = vadd.f32 %v3907, %v3923
      %v3940 = vadd.f32 %v3908, %v3924
      %v3941 = vadd.f32 %v3909, %v3925
      %v3942 = vadd.f32 %v3910, %v3926
      %v3943 = vadd.f32 %v3911, %v3927
      %v3944 = vadd.f32 %v3912, %v3928
      %v3945 = vadd.f32 %v3913, %v3929
      %v3946 = vadd.f32 %v3914, %v3930
      %v3947 = vadd.f32 %v3915, %v3931
      %v3948 = vadd.f32 %v3916, %v3932
      %v3949 = vadd.f32 %v3917, %v3933
      %v3950 = vadd.f32 %v3918, %v3934
      %3951 = vst.msk [vmem:[%s389] sm:$0xff] %vm1749, %v3935
      %3952 = vst.msk [vmem:[%s389 + $0x8] sm:$0xff] %vm1749, %v3936
      %3953 = vst.msk [vmem:[%s389 + $0x10] sm:$0xff] %vm1749, %v3937
      %3954 = vst.msk [vmem:[%s389 + $0x18] sm:$0xff] %vm1749, %v3938
      %3955 = vst.msk [vmem:[%s389 + $0x20] sm:$0xff] %vm1749, %v3939
      %3956 = vst.msk [vmem:[%s389 + $0x28] sm:$0xff] %vm1749, %v3940
      %3957 = vst.msk [vmem:[%s389 + $0x30] sm:$0xff] %vm1749, %v3941
      %3958 = vst.msk [vmem:[%s389 + $0x38] sm:$0xff] %vm1749, %v3942
      %3959 = vst.msk [vmem:[%s389 + $0x40] sm:$0xff] %vm1749, %v3943
      %3960 = vst.msk [vmem:[%s389 + $0x48] sm:$0xff] %vm1749, %v3944
      %3961 = vst.msk [vmem:[%s389 + $0x50] sm:$0xff] %vm1749, %v3945
      %3962 = vst.msk [vmem:[%s389 + $0x58] sm:$0xff] %vm1749, %v3946
      %3963 = vst.msk [vmem:[%s389 + $0x60] sm:$0xff] %vm1749, %v3947
      %3964 = vst.msk [vmem:[%s389 + $0x68] sm:$0xff] %vm1749, %v3948
      %3965 = vst.msk [vmem:[%s389 + $0x70] sm:$0xff] %vm1749, %v3949
      %3966 = vst.msk [vmem:[%s389 + $0x78] sm:$0xff] %vm1749, %v3950
      %s3967 = smul.u32 8, %s23
      %p3968 = scmp.lt.s32.totalorder %s22, 1
      %s3969 = scalar_select %p3968, %s22, 1
      %p3970 = scmp.lt.s32.totalorder %s3967, 15
      %s3971 = scalar_select %p3970, %s3967, 15
      %s3972 = smul.addr %s3971, 2
      %s3973 = smul.addr %s3969, 32
      %s3974 = sadd.s32 %s3972, %s3973
      %s3975 = smul.addr %s3974, 8
      %s3976 = scalar_lea.vmem %s7, %s3975
      // Predicated region
      $region57: #{tpu_custom_call.1} parent=47 // pred_check
        %p3977 = pneg %p222
      $region58: #{tpu_custom_call.1} parent=47 // pred_check_branch
        %3979 = sbr.rel (%p3977) target = $region60
      $region59: #{tpu_custom_call.1} parent=47 // pred_region
        %s3980 = smul.u32 8, %s23
      $region60: #{tpu_custom_call.1} parent=47 // pred_fallthru
        _
    $region48: #{tpu_custom_call.1} parent=5 // pred_fallthru
      _
    %p3981 = scmp.le.s32.totalorder 2, %s13
    // Predicated region
    $region61: #{tpu_custom_call.1} parent=5 // pred_check
      %p3982 = pneg %p3981
    $region62: #{tpu_custom_call.1} parent=5 // pred_check_branch
      %3984 = sbr.rel (%p3982) target = $region64
    $region63: #{tpu_custom_call.1} parent=5 // pred_region
      %s3985 = ssub.s32 %s13, 2
      // Predicated region
      $region65: #{tpu_custom_call.1} parent=63 // pred_check
        %p3986 = pneg %p228
      $region66: #{tpu_custom_call.1} parent=63 // pred_check_branch
        %3988 = sbr.rel (%p3986) target = $region68
      $region67: #{tpu_custom_call.1} parent=63 // pred_region
        %s3989 = smul.u32 8, %s25
        %p3990 = scmp.lt.s32.totalorder %s24, 1
        %s3991 = scalar_select %p3990, %s24, 1
        %p3992 = scmp.lt.s32.totalorder %s3989, 15
        %s3993 = scalar_select %p3992, %s3989, 15
        %s3994 = smul.addr %s3993, 2
        %s3995 = smul.addr %s3991, 32
        %s3996 = sadd.s32 %s3994, %s3995
        %s3997 = smul.addr %s3996, 8
        %s3998 = scalar_lea.vmem %s7, %s3997
      $region68: #{tpu_custom_call.1} parent=63 // pred_fallthru
        _
    $region64: #{tpu_custom_call.1} parent=5 // pred_fallthru
      _
  $region6: #{tpu_custom_call.1} parent=0 // loop_footer
    %s17 = sadd.s32 1, %s13
  $region7: #{tpu_custom_call.1} parent=0 // loop_footer_branch
    %12 = sbr.rel target = $region3
  $region8: #{tpu_custom_call.1} parent=0 // loop_exit
    _

</llo_original>
